<compile_context>
chip_gen: v7x
topology: tpu7x:2x2x1
jax: 0.10.0
libtpu: 0.0.40
codegen_flags: <defaults>
</compile_context>

<pallas_src>
import functools

import jax
import jax.numpy as jnp
from jax import lax
from jax.experimental import pallas as pl
from jax.experimental.pallas import tpu as pltpu

EPS = 1e-5   # nn.BatchNorm2d default eps
OFF = 8      # sublane-aligned column offset of the padded interior in every scratch


# ----------------------------------------------------------------------------- helpers
def _zero_halo(ref, *, pad, H, W):
    """Zero only the halo strips of a padded scratch.

    The interior lives at ref[pad:pad+H, OFF:OFF+W, :].  The conv taps read rows
    [0, H+2*pad) and columns [OFF-pad, OFF+W+pad); everything else is never touched,
    so only those strips need to be zero.
    """
    Wsc = ref.shape[1]
    C = ref.shape[2]
    z_row = jnp.zeros((pad, Wsc, C), jnp.float32)
    ref[0:pad, :, :] = z_row                                   # top halo rows
    ref[pad + H:pad + H + pad, :, :] = z_row                   # bottom halo rows
    z_col = jnp.zeros((H, pad, C), jnp.float32)
    ref[pad:pad + H, OFF - pad:OFF, :] = z_col                 # left halo columns
    ref[pad:pad + H, OFF + W:OFF + W + pad, :] = z_col         # right halo columns


def _conv_relu(xp_ref, w_ref, shift_ref, *, KH, KW, dil, pad, H, W):
    """Dilated conv (stride 1) from a pre-padded VMEM scratch ref, + shift + ReLU.

    xp_ref:    (H + 2*pad, OFF + W + 8, Cin) scratch; interior at [pad:pad+H, OFF:OFF+W)
    w_ref:     (KH*KW*Cin, Cout)  -- BN scale already folded into the weights
    shift_ref: (1, 1, Cout)       -- folded conv-bias + BN shift (and pool scale for 1x1s)
    returns    (H, W, Cout) float32 value
    """
    taps = [xp_ref[kh * dil:kh * dil + H,
                   OFF - pad + kw * dil:OFF - pad + kw * dil + W, :]
            for kh in range(KH) for kw in range(KW)]
    patches = jnp.concatenate(taps, axis=-1)                  # (H, W, KH*KW*Cin)
    z = lax.dot_general(patches, w_ref[...], (((2,), (0,)), ((), ())),
                        preferred_element_type=jnp.float32)   # single K=KH*KW*Cin matmul
    return jnp.maximum(z + shift_ref[...], 0.0)


# ----------------------------------------------------------------------------- kernel
def _enc_block_kernel(x_ref, w1_ref, w2_ref, w3_ref, w4_ref, w5_ref,
                      t1_ref, t2_ref, t3_ref, t4_ref, t5_ref,
                      o_ref, xp_sc, o1p_sc, o2p_sc, th_sc, *, H, W, C):
    """Fused EncBlock forward for one batch element (all intermediates VMEM-resident)."""
    Ho, Wo = H // 2, W // 2
    C2 = 2 * C
    x = x_ref[0]                                              # (H, W, C)

    # ---- conv1: 3x3, dil 1, pad 1 ----
    _zero_halo(xp_sc, pad=1, H=H, W=W)
    xp_sc[1:H + 1, OFF:OFF + W, :] = x                        # sublane-aligned interior
    o1 = _conv_relu(xp_sc, w1_ref, t1_ref, KH=3, KW=3, dil=1, pad=1, H=H, W=W)

    # ---- conv2: 3x3, dil 2, pad 2 ----
    _zero_halo(o1p_sc, pad=2, H=H, W=W)
    o1p_sc[2:H + 2, OFF:OFF + W, :] = o1
    o2 = _conv_relu(o1p_sc, w2_ref, t2_ref, KH=3, KW=3, dil=2, pad=2, H=H, W=W)

    # ---- conv3: 2x2, dil 2, pad 1 ----
    _zero_halo(o2p_sc, pad=1, H=H, W=W)
    o2p_sc[1:H + 1, OFF:OFF + W, :] = o2
    o3 = _conv_relu(o2p_sc, w3_ref, t3_ref, KH=2, KW=2, dil=2, pad=1, H=H, W=W)

    # ---- head: conv4(cat(o1,o2,o3)) + conv5(x), both 1x1 conv+BN+ReLU, then add ----
    # The 0.25 average-pool scale is already folded into w4/t4 and w5/t5 on the host.
    dn = (((2,), (0,)), ((), ()))
    cat = jnp.concatenate([o1, o2, o3], axis=-1)              # (H, W, 3C), VMEM value only
    a4 = jnp.maximum(
        lax.dot_general(cat, w4_ref[...], dn, preferred_element_type=jnp.float32)
        + t4_ref[...], 0.0)
    a5 = jnp.maximum(
        lax.dot_general(x, w5_ref[...], dn, preferred_element_type=jnp.float32)
        + t5_ref[...], 0.0)
    s = a4 + a5                                               # (H, W, 2C), 0.25-scaled

    # ---- 2x2 average pool, stride 2 (scale pre-folded => just adds) ----
    # H pairs: leading-dim regroup (layout no-op) + add; W pairs: strided sublane reads.
    sr = s.reshape(Ho, 2, W, C2)
    th_sc[...] = sr[:, 0, :, :] + sr[:, 1, :, :]              # (Ho, W, 2C)
    pooled = th_sc[:, pl.ds(0, Wo, 2), :] + th_sc[:, pl.ds(1, Wo, 2), :]
    o_ref[0] = pooled.astype(o_ref.dtype)


# ---------------------------------------------------------------------------- wrapper
def enc_block_fused(x, w1, w2, w3, w4, w5, t1, t2, t3, t4, t5):
    """x: (B,H,W,C) NHWC. Weights are pre-folded 2D matrices, shifts are per-channel."""
    B, H, W, C = x.shape
    C2 = 2 * C
    assert H % 2 == 0 and W % 2 == 0, "AvgPool2d(2,2) requires even spatial dims"
    Ho, Wo = H // 2, W // 2
    Wsc = OFF + W + 8                                         # aligned interior + right room
    kernel = functools.partial(_enc_block_kernel, H=H, W=W, C=C)
    return pl.pallas_call(
        kernel,
        out_shape=jax.ShapeDtypeStruct((B, Ho, Wo, C2), jnp.float32),
        grid=(B,),
        in_specs=[
            pl.BlockSpec((1, H, W, C), lambda b: (b, 0, 0, 0)),
            pl.BlockSpec(w1.shape, lambda b: (0, 0)),
            pl.BlockSpec(w2.shape, lambda b: (0, 0)),
            pl.BlockSpec(w3.shape, lambda b: (0, 0)),
            pl.BlockSpec(w4.shape, lambda b: (0, 0)),
            pl.BlockSpec(w5.shape, lambda b: (0, 0)),
            pl.BlockSpec((1, 1, C), lambda b: (0, 0, 0)),
            pl.BlockSpec((1, 1, C), lambda b: (0, 0, 0)),
            pl.BlockSpec((1, 1, C), lambda b: (0, 0, 0)),
            pl.BlockSpec((1, 1, C2), lambda b: (0, 0, 0)),
            pl.BlockSpec((1, 1, C2), lambda b: (0, 0, 0)),
        ],
        out_specs=pl.BlockSpec((1, Ho, Wo, C2), lambda b: (b, 0, 0, 0)),
        scratch_shapes=[
            pltpu.VMEM((H + 2, Wsc, C), jnp.float32),   # padded x   (conv1, pad 1)
            pltpu.VMEM((H + 4, Wsc, C), jnp.float32),   # padded o1  (conv2, pad 2)
            pltpu.VMEM((H + 2, Wsc, C), jnp.float32),   # padded o2  (conv3, pad 1)
            pltpu.VMEM((Ho, W, C2), jnp.float32),       # H-pooled sum, staged for W pooling
        ],
        compiler_params=pltpu.CompilerParams(dimension_semantics=("parallel",)),
    )(x, w1, w2, w3, w4, w5,
      t1.reshape(1, 1, C), t2.reshape(1, 1, C), t3.reshape(1, 1, C),
      t4.reshape(1, 1, C2), t5.reshape(1, 1, C2))


# -------------------------------------------------------------------- params & forward
def init_params(key, C):
    """Deterministic synthetic parameters mirroring EncBlock.__init__ shapes (HWIO)."""
    C2 = 2 * C

    def block(k, KH, KW, Cin, Cout):
        ks = jax.random.split(k, 6)
        return dict(
            w=0.1 * jax.random.normal(ks[0], (KH, KW, Cin, Cout), jnp.float32),
            b=0.1 * jax.random.normal(ks[1], (Cout,), jnp.float32),
            gamma=1.0 + 0.1 * jax.random.normal(ks[2], (Cout,), jnp.float32),
            beta=0.1 * jax.random.normal(ks[3], (Cout,), jnp.float32),
            mean=0.1 * jax.random.normal(ks[4], (Cout,), jnp.float32),
            var=1.0 + 0.5 * jax.random.uniform(ks[5], (Cout,), jnp.float32),
        )

    k1, k2, k3, k4, k5 = jax.random.split(key, 5)
    return dict(
        conv1=block(k1, 3, 3, C, C),       # 3x3, dil 1, pad 1
        conv2=block(k2, 3, 3, C, C),       # 3x3, dil 2, pad 2
        conv3=block(k3, 2, 2, C, C),       # 2x2, dil 2, pad 1
        conv4=block(k4, 1, 1, 3 * C, C2),  # 1x1
        conv5=block(k5, 1, 1, C, C2),      # 1x1
    )


def fold_bn_into_weights(p, extra_scale=1.0):
    """Fold eval-mode BN scale (and an optional positive extra scale, e.g. the 0.25 pool
    factor) into the conv weights; return ((KH*KW*Cin, Cout), per-channel shift)."""
    scale = p['gamma'] / jnp.sqrt(p['var'] + EPS)                   # (Cout,)
    shift = ((p['b'] - p['mean']) * scale + p['beta']) * extra_scale
    KH, KW, Cin, Cout = p['w'].shape
    w2d = (p['w'] * (scale * extra_scale)).reshape(KH * KW * Cin, Cout)  # rows (kh, kw, ci)
    return w2d, shift


@jax.jit
def enc_block(x_nchw, params):
    """Pallas implementation of EncBlock.forward. Input/output are NCHW like PyTorch."""
    x = jnp.transpose(x_nchw, (0, 2, 3, 1))                 # -> NHWC
    w1, t1 = fold_bn_into_weights(params['conv1'])
    w2, t2 = fold_bn_into_weights(params['conv2'])
    w3, t3 = fold_bn_into_weights(params['conv3'])
    # 2x2 avg-pool scale folded here (ReLU(0.25*z) == 0.25*ReLU(z), exact in fp32).
    w4, t4 = fold_bn_into_weights(params['conv4'], extra_scale=0.25)
    w5, t5 = fold_bn_into_weights(params['conv5'], extra_scale=0.25)
    out = enc_block_fused(x, w1, w2, w3, w4, w5, t1, t2, t3, t4, t5)
    return jnp.transpose(out, (0, 3, 1, 2))                 # -> NCHW


# ------------------------------------------------------------------- pure-JAX reference
def _ref_basic_block(x, p, dil, pad):
    y = lax.conv_general_dilated(x, p['w'], (1, 1), [(pad, pad), (pad, pad)],
                                 rhs_dilation=(dil, dil),
                                 dimension_numbers=('NHWC', 'HWIO', 'NHWC'))
    y = y + p['b']
    y = (y - p['mean']) / jnp.sqrt(p['var'] + EPS) * p['gamma'] + p['beta']
    return jnp.maximum(y, 0.0)


@jax.jit
def ref_enc_block(x_nchw, params):
    x = jnp.transpose(x_nchw, (0, 2, 3, 1))
    o1 = _ref_basic_block(x, params['conv1'], 1, 1)
    o2 = _ref_basic_block(o1, params['conv2'], 2, 2)
    o3 = _ref_basic_block(o2, params['conv3'], 2, 1)
    cat = jnp.concatenate([o1, o2, o3], axis=-1)
    o4 = _ref_basic_block(cat, params['conv4'], 1, 0)
    o5 = _ref_basic_block(x, params['conv5'], 1, 0)
    s = o4 + o5
    B, H, W, C = s.shape
    pooled = s.reshape(B, H // 2, 2, W // 2, 2, C).mean(axis=(2, 4))
    return jnp.transpose(pooled, (0, 3, 1, 2))


# -------------------------------------------------------------------------------- main
if __name__ == "__main__":
    key = jax.random.PRNGKey(0)
    kx, kp = jax.random.split(key)

    B, C, H, W = 2, 4, 16, 16
    x = jax.random.normal(kx, (B, C, H, W), jnp.float32)    # NCHW, like PyTorch
    params = init_params(kp, C)

    out = jax.block_until_ready(enc_block(x, params))
    ref = jax.block_until_ready(ref_enc_block(x, params))

    assert out.shape == (B, 2 * C, H // 2, W // 2), out.shape
    if not jnp.allclose(out, ref, atol=2e-4, rtol=2e-4):
        raise AssertionError(f"mismatch vs reference, max abs diff = "
                             f"{float(jnp.max(jnp.abs(out - ref)))}")
    print("KERNEL_OK")
</pallas_src>

<mosaic_0001>
module attributes {stable_mosaic.version = 11 : i64} {
  func.func @_enc_block_kernel(%arg0: i32, %arg1: memref<1x16x16x4xf32, #tpu.memory_space<vmem>>, %arg2: memref<36x4xf32, #tpu.memory_space<vmem>>, %arg3: memref<36x4xf32, #tpu.memory_space<vmem>>, %arg4: memref<16x4xf32, #tpu.memory_space<vmem>>, %arg5: memref<12x8xf32, #tpu.memory_space<vmem>>, %arg6: memref<4x8xf32, #tpu.memory_space<vmem>>, %arg7: memref<1x1x4xf32, #tpu.memory_space<vmem>>, %arg8: memref<1x1x4xf32, #tpu.memory_space<vmem>>, %arg9: memref<1x1x4xf32, #tpu.memory_space<vmem>>, %arg10: memref<1x1x8xf32, #tpu.memory_space<vmem>>, %arg11: memref<1x1x8xf32, #tpu.memory_space<vmem>>, %arg12: memref<1x8x8x8xf32, #tpu.memory_space<vmem>>, %arg13: memref<18x32x4xf32, #tpu.memory_space<vmem>>, %arg14: memref<20x32x4xf32, #tpu.memory_space<vmem>>, %arg15: memref<18x32x4xf32, #tpu.memory_space<vmem>>, %arg16: memref<8x16x8xf32, #tpu.memory_space<vmem>>) attributes {dimension_semantics = [#tpu.dimension_semantics<parallel>], iteration_bounds = array<i64: 2>, scalar_prefetch = 0 : i64, scratch_operands = 4 : i64, tpu.core_type = #tpu.core_type<tc>, window_params = [{transform_indices = @transform_0, window_bounds = array<i64: 1, 16, 16, 4>}, {pipeline_mode = #tpu.pipeline_mode<synchronous>, transform_indices = @transform_1, window_bounds = array<i64: 36, 4>}, {pipeline_mode = #tpu.pipeline_mode<synchronous>, transform_indices = @transform_2, window_bounds = array<i64: 36, 4>}, {pipeline_mode = #tpu.pipeline_mode<synchronous>, transform_indices = @transform_3, window_bounds = array<i64: 16, 4>}, {pipeline_mode = #tpu.pipeline_mode<synchronous>, transform_indices = @transform_4, window_bounds = array<i64: 12, 8>}, {pipeline_mode = #tpu.pipeline_mode<synchronous>, transform_indices = @transform_5, window_bounds = array<i64: 4, 8>}, {pipeline_mode = #tpu.pipeline_mode<synchronous>, transform_indices = @transform_6, window_bounds = array<i64: 1, 1, 4>}, {pipeline_mode = #tpu.pipeline_mode<synchronous>, transform_indices = @transform_7, window_bounds = array<i64: 1, 1, 4>}, {pipeline_mode = #tpu.pipeline_mode<synchronous>, transform_indices = @transform_8, window_bounds = array<i64: 1, 1, 4>}, {pipeline_mode = #tpu.pipeline_mode<synchronous>, transform_indices = @transform_9, window_bounds = array<i64: 1, 1, 8>}, {pipeline_mode = #tpu.pipeline_mode<synchronous>, transform_indices = @transform_10, window_bounds = array<i64: 1, 1, 8>}, {transform_indices = @transform_11, window_bounds = array<i64: 1, 8, 8, 8>}]} {
    %c0 = arith.constant 0 : index
    %c0_0 = arith.constant 0 : index
    %c0_1 = arith.constant 0 : index
    %c0_2 = arith.constant 0 : index
    %0 = vector.load %arg1[%c0, %c0_0, %c0_1, %c0_2] : memref<1x16x16x4xf32, #tpu.memory_space<vmem>>, vector<1x16x16x4xf32>
    %1 = vector.shape_cast %0 : vector<1x16x16x4xf32> to vector<16x16x4xf32>
    %cst = arith.constant 0.000000e+00 : f32
    %2 = vector.broadcast %cst : f32 to vector<1x32x4xf32>
    %c0_3 = arith.constant 0 : index
    %c0_4 = arith.constant 0 : index
    %c0_5 = arith.constant 0 : index
    %3 = vector.load %arg13[%c0_3, %c0_4, %c0_5] : memref<18x32x4xf32, #tpu.memory_space<vmem>>, vector<1x32x4xf32>
    tpu.vector_store %arg13[%c0_3, %c0_4, %c0_5], %2 {strides = array<i32>} : memref<18x32x4xf32, #tpu.memory_space<vmem>>, vector<1x32x4xf32>,
    %c17 = arith.constant 17 : index
    %c0_6 = arith.constant 0 : index
    %c0_7 = arith.constant 0 : index
    %4 = vector.load %arg13[%c17, %c0_6, %c0_7] : memref<18x32x4xf32, #tpu.memory_space<vmem>>, vector<1x32x4xf32>
    tpu.vector_store %arg13[%c17, %c0_6, %c0_7], %2 {strides = array<i32>} : memref<18x32x4xf32, #tpu.memory_space<vmem>>, vector<1x32x4xf32>,
    %cst_8 = arith.constant 0.000000e+00 : f32
    %5 = vector.broadcast %cst_8 : f32 to vector<16x1x4xf32>
    %c1 = arith.constant 1 : index
    %c7 = arith.constant 7 : index
    %c0_9 = arith.constant 0 : index
    %6 = vector.load %arg13[%c1, %c7, %c0_9] : memref<18x32x4xf32, #tpu.memory_space<vmem>>, vector<16x1x4xf32>
    tpu.vector_store %arg13[%c1, %c7, %c0_9], %5 {strides = array<i32>} : memref<18x32x4xf32, #tpu.memory_space<vmem>>, vector<16x1x4xf32>,
    %c1_10 = arith.constant 1 : index
    %c24 = arith.constant 24 : index
    %c0_11 = arith.constant 0 : index
    %7 = vector.load %arg13[%c1_10, %c24, %c0_11] : memref<18x32x4xf32, #tpu.memory_space<vmem>>, vector<16x1x4xf32>
    tpu.vector_store %arg13[%c1_10, %c24, %c0_11], %5 {strides = array<i32>} : memref<18x32x4xf32, #tpu.memory_space<vmem>>, vector<16x1x4xf32>,
    %c1_12 = arith.constant 1 : index
    %c8 = arith.constant 8 : index
    %c0_13 = arith.constant 0 : index
    %8 = vector.load %arg13[%c1_12, %c8, %c0_13] : memref<18x32x4xf32, #tpu.memory_space<vmem>>, vector<16x16x4xf32>
    tpu.vector_store %arg13[%c1_12, %c8, %c0_13], %1 {strides = array<i32>} : memref<18x32x4xf32, #tpu.memory_space<vmem>>, vector<16x16x4xf32>,
    %c0_14 = arith.constant 0 : index
    %c7_15 = arith.constant 7 : index
    %c0_16 = arith.constant 0 : index
    %9 = vector.load %arg13[%c0_14, %c7_15, %c0_16] : memref<18x32x4xf32, #tpu.memory_space<vmem>>, vector<16x16x4xf32>
    %c0_17 = arith.constant 0 : index
    %c8_18 = arith.constant 8 : index
    %c0_19 = arith.constant 0 : index
    %10 = vector.load %arg13[%c0_17, %c8_18, %c0_19] : memref<18x32x4xf32, #tpu.memory_space<vmem>>, vector<16x16x4xf32>
    %c0_20 = arith.constant 0 : index
    %c9 = arith.constant 9 : index
    %c0_21 = arith.constant 0 : index
    %11 = vector.load %arg13[%c0_20, %c9, %c0_21] : memref<18x32x4xf32, #tpu.memory_space<vmem>>, vector<16x16x4xf32>
    %c1_22 = arith.constant 1 : index
    %c7_23 = arith.constant 7 : index
    %c0_24 = arith.constant 0 : index
    %12 = vector.load %arg13[%c1_22, %c7_23, %c0_24] : memref<18x32x4xf32, #tpu.memory_space<vmem>>, vector<16x16x4xf32>
    %c1_25 = arith.constant 1 : index
    %c8_26 = arith.constant 8 : index
    %c0_27 = arith.constant 0 : index
    %13 = vector.load %arg13[%c1_25, %c8_26, %c0_27] : memref<18x32x4xf32, #tpu.memory_space<vmem>>, vector<16x16x4xf32>
    %c1_28 = arith.constant 1 : index
    %c9_29 = arith.constant 9 : index
    %c0_30 = arith.constant 0 : index
    %14 = vector.load %arg13[%c1_28, %c9_29, %c0_30] : memref<18x32x4xf32, #tpu.memory_space<vmem>>, vector<16x16x4xf32>
    %c2 = arith.constant 2 : index
    %c7_31 = arith.constant 7 : index
    %c0_32 = arith.constant 0 : index
    %15 = vector.load %arg13[%c2, %c7_31, %c0_32] : memref<18x32x4xf32, #tpu.memory_space<vmem>>, vector<16x16x4xf32>
    %c2_33 = arith.constant 2 : index
    %c8_34 = arith.constant 8 : index
    %c0_35 = arith.constant 0 : index
    %16 = vector.load %arg13[%c2_33, %c8_34, %c0_35] : memref<18x32x4xf32, #tpu.memory_space<vmem>>, vector<16x16x4xf32>
    %c2_36 = arith.constant 2 : index
    %c9_37 = arith.constant 9 : index
    %c0_38 = arith.constant 0 : index
    %17 = vector.load %arg13[%c2_36, %c9_37, %c0_38] : memref<18x32x4xf32, #tpu.memory_space<vmem>>, vector<16x16x4xf32>
    %18 = tpu.concatenate %9, %10, %11, %12, %13, %14, %15, %16, %17 in 2 : vector<16x16x4xf32>, vector<16x16x4xf32>, vector<16x16x4xf32>, vector<16x16x4xf32>, vector<16x16x4xf32>, vector<16x16x4xf32>, vector<16x16x4xf32>, vector<16x16x4xf32>, vector<16x16x4xf32> -> vector<16x16x36xf32>
    %c0_39 = arith.constant 0 : index
    %c0_40 = arith.constant 0 : index
    %19 = vector.load %arg2[%c0_39, %c0_40] : memref<36x4xf32, #tpu.memory_space<vmem>>, vector<36x4xf32>
    %cst_41 = arith.constant dense<0.000000e+00> : vector<16x16x4xf32>
    %20 = tpu.matmul %18, %19, %cst_41 {dimension_numbers = #tpu.dot_dimension_numbers<[2], [0], [0, 1], [1], [0, 0, 0, 1, 1, 1], [], []>} : vector<16x16x36xf32>, vector<36x4xf32>, vector<16x16x4xf32> -> vector<16x16x4xf32>
    %c0_42 = arith.constant 0 : index
    %c0_43 = arith.constant 0 : index
    %c0_44 = arith.constant 0 : index
    %21 = vector.load %arg7[%c0_42, %c0_43, %c0_44] : memref<1x1x4xf32, #tpu.memory_space<vmem>>, vector<1x1x4xf32>
    %22 = vector.broadcast %21 : vector<1x1x4xf32> to vector<16x16x4xf32>
    %23 = arith.addf %20, %22 : vector<16x16x4xf32>
    %cst_45 = arith.constant 0.000000e+00 : f32
    %24 = vector.broadcast %cst_45 : f32 to vector<16x16x4xf32>
    %25 = arith.maximumf %23, %24 : vector<16x16x4xf32>
    %cst_46 = arith.constant 0.000000e+00 : f32
    %26 = vector.broadcast %cst_46 : f32 to vector<2x32x4xf32>
    %c0_47 = arith.constant 0 : index
    %c0_48 = arith.constant 0 : index
    %c0_49 = arith.constant 0 : index
    %27 = vector.load %arg14[%c0_47, %c0_48, %c0_49] : memref<20x32x4xf32, #tpu.memory_space<vmem>>, vector<2x32x4xf32>
    tpu.vector_store %arg14[%c0_47, %c0_48, %c0_49], %26 {strides = array<i32>} : memref<20x32x4xf32, #tpu.memory_space<vmem>>, vector<2x32x4xf32>,
    %c18 = arith.constant 18 : index
    %c0_50 = arith.constant 0 : index
    %c0_51 = arith.constant 0 : index
    %28 = vector.load %arg14[%c18, %c0_50, %c0_51] : memref<20x32x4xf32, #tpu.memory_space<vmem>>, vector<2x32x4xf32>
    tpu.vector_store %arg14[%c18, %c0_50, %c0_51], %26 {strides = array<i32>} : memref<20x32x4xf32, #tpu.memory_space<vmem>>, vector<2x32x4xf32>,
    %cst_52 = arith.constant 0.000000e+00 : f32
    %29 = vector.broadcast %cst_52 : f32 to vector<16x2x4xf32>
    %c2_53 = arith.constant 2 : index
    %c6 = arith.constant 6 : index
    %c0_54 = arith.constant 0 : index
    %30 = vector.load %arg14[%c2_53, %c6, %c0_54] : memref<20x32x4xf32, #tpu.memory_space<vmem>>, vector<16x2x4xf32>
    tpu.vector_store %arg14[%c2_53, %c6, %c0_54], %29 {strides = array<i32>} : memref<20x32x4xf32, #tpu.memory_space<vmem>>, vector<16x2x4xf32>,
    %c2_55 = arith.constant 2 : index
    %c24_56 = arith.constant 24 : index
    %c0_57 = arith.constant 0 : index
    %31 = vector.load %arg14[%c2_55, %c24_56, %c0_57] : memref<20x32x4xf32, #tpu.memory_space<vmem>>, vector<16x2x4xf32>
    tpu.vector_store %arg14[%c2_55, %c24_56, %c0_57], %29 {strides = array<i32>} : memref<20x32x4xf32, #tpu.memory_space<vmem>>, vector<16x2x4xf32>,
    %c2_58 = arith.constant 2 : index
    %c8_59 = arith.constant 8 : index
    %c0_60 = arith.constant 0 : index
    %32 = vector.load %arg14[%c2_58, %c8_59, %c0_60] : memref<20x32x4xf32, #tpu.memory_space<vmem>>, vector<16x16x4xf32>
    tpu.vector_store %arg14[%c2_58, %c8_59, %c0_60], %25 {strides = array<i32>} : memref<20x32x4xf32, #tpu.memory_space<vmem>>, vector<16x16x4xf32>,
    %c0_61 = arith.constant 0 : index
    %c6_62 = arith.constant 6 : index
    %c0_63 = arith.constant 0 : index
    %33 = vector.load %arg14[%c0_61, %c6_62, %c0_63] : memref<20x32x4xf32, #tpu.memory_space<vmem>>, vector<16x16x4xf32>
    %c0_64 = arith.constant 0 : index
    %c8_65 = arith.constant 8 : index
    %c0_66 = arith.constant 0 : index
    %34 = vector.load %arg14[%c0_64, %c8_65, %c0_66] : memref<20x32x4xf32, #tpu.memory_space<vmem>>, vector<16x16x4xf32>
    %c0_67 = arith.constant 0 : index
    %c10 = arith.constant 10 : index
    %c0_68 = arith.constant 0 : index
    %35 = vector.load %arg14[%c0_67, %c10, %c0_68] : memref<20x32x4xf32, #tpu.memory_space<vmem>>, vector<16x16x4xf32>
    %c2_69 = arith.constant 2 : index
    %c6_70 = arith.constant 6 : index
    %c0_71 = arith.constant 0 : index
    %36 = vector.load %arg14[%c2_69, %c6_70, %c0_71] : memref<20x32x4xf32, #tpu.memory_space<vmem>>, vector<16x16x4xf32>
    %c2_72 = arith.constant 2 : index
    %c8_73 = arith.constant 8 : index
    %c0_74 = arith.constant 0 : index
    %37 = vector.load %arg14[%c2_72, %c8_73, %c0_74] : memref<20x32x4xf32, #tpu.memory_space<vmem>>, vector<16x16x4xf32>
    %c2_75 = arith.constant 2 : index
    %c10_76 = arith.constant 10 : index
    %c0_77 = arith.constant 0 : index
    %38 = vector.load %arg14[%c2_75, %c10_76, %c0_77] : memref<20x32x4xf32, #tpu.memory_space<vmem>>, vector<16x16x4xf32>
    %c4 = arith.constant 4 : index
    %c6_78 = arith.constant 6 : index
    %c0_79 = arith.constant 0 : index
    %39 = vector.load %arg14[%c4, %c6_78, %c0_79] : memref<20x32x4xf32, #tpu.memory_space<vmem>>, vector<16x16x4xf32>
    %c4_80 = arith.constant 4 : index
    %c8_81 = arith.constant 8 : index
    %c0_82 = arith.constant 0 : index
    %40 = vector.load %arg14[%c4_80, %c8_81, %c0_82] : memref<20x32x4xf32, #tpu.memory_space<vmem>>, vector<16x16x4xf32>
    %c4_83 = arith.constant 4 : index
    %c10_84 = arith.constant 10 : index
    %c0_85 = arith.constant 0 : index
    %41 = vector.load %arg14[%c4_83, %c10_84, %c0_85] : memref<20x32x4xf32, #tpu.memory_space<vmem>>, vector<16x16x4xf32>
    %42 = tpu.concatenate %33, %34, %35, %36, %37, %38, %39, %40, %41 in 2 : vector<16x16x4xf32>, vector<16x16x4xf32>, vector<16x16x4xf32>, vector<16x16x4xf32>, vector<16x16x4xf32>, vector<16x16x4xf32>, vector<16x16x4xf32>, vector<16x16x4xf32>, vector<16x16x4xf32> -> vector<16x16x36xf32>
    %c0_86 = arith.constant 0 : index
    %c0_87 = arith.constant 0 : index
    %43 = vector.load %arg3[%c0_86, %c0_87] : memref<36x4xf32, #tpu.memory_space<vmem>>, vector<36x4xf32>
    %cst_88 = arith.constant dense<0.000000e+00> : vector<16x16x4xf32>
    %44 = tpu.matmul %42, %43, %cst_88 {dimension_numbers = #tpu.dot_dimension_numbers<[2], [0], [0, 1], [1], [0, 0, 0, 1, 1, 1], [], []>} : vector<16x16x36xf32>, vector<36x4xf32>, vector<16x16x4xf32> -> vector<16x16x4xf32>
    %c0_89 = arith.constant 0 : index
    %c0_90 = arith.constant 0 : index
    %c0_91 = arith.constant 0 : index
    %45 = vector.load %arg8[%c0_89, %c0_90, %c0_91] : memref<1x1x4xf32, #tpu.memory_space<vmem>>, vector<1x1x4xf32>
    %46 = vector.broadcast %45 : vector<1x1x4xf32> to vector<16x16x4xf32>
    %47 = arith.addf %44, %46 : vector<16x16x4xf32>
    %cst_92 = arith.constant 0.000000e+00 : f32
    %48 = vector.broadcast %cst_92 : f32 to vector<16x16x4xf32>
    %49 = arith.maximumf %47, %48 : vector<16x16x4xf32>
    %cst_93 = arith.constant 0.000000e+00 : f32
    %50 = vector.broadcast %cst_93 : f32 to vector<1x32x4xf32>
    %c0_94 = arith.constant 0 : index
    %c0_95 = arith.constant 0 : index
    %c0_96 = arith.constant 0 : index
    %51 = vector.load %arg15[%c0_94, %c0_95, %c0_96] : memref<18x32x4xf32, #tpu.memory_space<vmem>>, vector<1x32x4xf32>
    tpu.vector_store %arg15[%c0_94, %c0_95, %c0_96], %50 {strides = array<i32>} : memref<18x32x4xf32, #tpu.memory_space<vmem>>, vector<1x32x4xf32>,
    %c17_97 = arith.constant 17 : index
    %c0_98 = arith.constant 0 : index
    %c0_99 = arith.constant 0 : index
    %52 = vector.load %arg15[%c17_97, %c0_98, %c0_99] : memref<18x32x4xf32, #tpu.memory_space<vmem>>, vector<1x32x4xf32>
    tpu.vector_store %arg15[%c17_97, %c0_98, %c0_99], %50 {strides = array<i32>} : memref<18x32x4xf32, #tpu.memory_space<vmem>>, vector<1x32x4xf32>,
    %cst_100 = arith.constant 0.000000e+00 : f32
    %53 = vector.broadcast %cst_100 : f32 to vector<16x1x4xf32>
    %c1_101 = arith.constant 1 : index
    %c7_102 = arith.constant 7 : index
    %c0_103 = arith.constant 0 : index
    %54 = vector.load %arg15[%c1_101, %c7_102, %c0_103] : memref<18x32x4xf32, #tpu.memory_space<vmem>>, vector<16x1x4xf32>
    tpu.vector_store %arg15[%c1_101, %c7_102, %c0_103], %53 {strides = array<i32>} : memref<18x32x4xf32, #tpu.memory_space<vmem>>, vector<16x1x4xf32>,
    %c1_104 = arith.constant 1 : index
    %c24_105 = arith.constant 24 : index
    %c0_106 = arith.constant 0 : index
    %55 = vector.load %arg15[%c1_104, %c24_105, %c0_106] : memref<18x32x4xf32, #tpu.memory_space<vmem>>, vector<16x1x4xf32>
    tpu.vector_store %arg15[%c1_104, %c24_105, %c0_106], %53 {strides = array<i32>} : memref<18x32x4xf32, #tpu.memory_space<vmem>>, vector<16x1x4xf32>,
    %c1_107 = arith.constant 1 : index
    %c8_108 = arith.constant 8 : index
    %c0_109 = arith.constant 0 : index
    %56 = vector.load %arg15[%c1_107, %c8_108, %c0_109] : memref<18x32x4xf32, #tpu.memory_space<vmem>>, vector<16x16x4xf32>
    tpu.vector_store %arg15[%c1_107, %c8_108, %c0_109], %49 {strides = array<i32>} : memref<18x32x4xf32, #tpu.memory_space<vmem>>, vector<16x16x4xf32>,
    %c0_110 = arith.constant 0 : index
    %c7_111 = arith.constant 7 : index
    %c0_112 = arith.constant 0 : index
    %57 = vector.load %arg15[%c0_110, %c7_111, %c0_112] : memref<18x32x4xf32, #tpu.memory_space<vmem>>, vector<16x16x4xf32>
    %c0_113 = arith.constant 0 : index
    %c9_114 = arith.constant 9 : index
    %c0_115 = arith.constant 0 : index
    %58 = vector.load %arg15[%c0_113, %c9_114, %c0_115] : memref<18x32x4xf32, #tpu.memory_space<vmem>>, vector<16x16x4xf32>
    %c2_116 = arith.constant 2 : index
    %c7_117 = arith.constant 7 : index
    %c0_118 = arith.constant 0 : index
    %59 = vector.load %arg15[%c2_116, %c7_117, %c0_118] : memref<18x32x4xf32, #tpu.memory_space<vmem>>, vector<16x16x4xf32>
    %c2_119 = arith.constant 2 : index
    %c9_120 = arith.constant 9 : index
    %c0_121 = arith.constant 0 : index
    %60 = vector.load %arg15[%c2_119, %c9_120, %c0_121] : memref<18x32x4xf32, #tpu.memory_space<vmem>>, vector<16x16x4xf32>
    %61 = tpu.concatenate %57, %58, %59, %60 in 2 : vector<16x16x4xf32>, vector<16x16x4xf32>, vector<16x16x4xf32>, vector<16x16x4xf32> -> vector<16x16x16xf32>
    %c0_122 = arith.constant 0 : index
    %c0_123 = arith.constant 0 : index
    %62 = vector.load %arg4[%c0_122, %c0_123] : memref<16x4xf32, #tpu.memory_space<vmem>>, vector<16x4xf32>
    %cst_124 = arith.constant dense<0.000000e+00> : vector<16x16x4xf32>
    %63 = tpu.matmul %61, %62, %cst_124 {dimension_numbers = #tpu.dot_dimension_numbers<[2], [0], [0, 1], [1], [0, 0, 0, 1, 1, 1], [], []>} : vector<16x16x16xf32>, vector<16x4xf32>, vector<16x16x4xf32> -> vector<16x16x4xf32>
    %c0_125 = arith.constant 0 : index
    %c0_126 = arith.constant 0 : index
    %c0_127 = arith.constant 0 : index
    %64 = vector.load %arg9[%c0_125, %c0_126, %c0_127] : memref<1x1x4xf32, #tpu.memory_space<vmem>>, vector<1x1x4xf32>
    %65 = vector.broadcast %64 : vector<1x1x4xf32> to vector<16x16x4xf32>
    %66 = arith.addf %63, %65 : vector<16x16x4xf32>
    %cst_128 = arith.constant 0.000000e+00 : f32
    %67 = vector.broadcast %cst_128 : f32 to vector<16x16x4xf32>
    %68 = arith.maximumf %66, %67 : vector<16x16x4xf32>
    %69 = tpu.concatenate %25, %49, %68 in 2 : vector<16x16x4xf32>, vector<16x16x4xf32>, vector<16x16x4xf32> -> vector<16x16x12xf32>
    %c0_129 = arith.constant 0 : index
    %c0_130 = arith.constant 0 : index
    %70 = vector.load %arg5[%c0_129, %c0_130] : memref<12x8xf32, #tpu.memory_space<vmem>>, vector<12x8xf32>
    %cst_131 = arith.constant dense<0.000000e+00> : vector<16x16x8xf32>
    %71 = tpu.matmul %69, %70, %cst_131 {dimension_numbers = #tpu.dot_dimension_numbers<[2], [0], [0, 1], [1], [0, 0, 0, 1, 1, 1], [], []>} : vector<16x16x12xf32>, vector<12x8xf32>, vector<16x16x8xf32> -> vector<16x16x8xf32>
    %c0_132 = arith.constant 0 : index
    %c0_133 = arith.constant 0 : index
    %c0_134 = arith.constant 0 : index
    %72 = vector.load %arg10[%c0_132, %c0_133, %c0_134] : memref<1x1x8xf32, #tpu.memory_space<vmem>>, vector<1x1x8xf32>
    %73 = vector.broadcast %72 : vector<1x1x8xf32> to vector<16x16x8xf32>
    %74 = arith.addf %71, %73 : vector<16x16x8xf32>
    %cst_135 = arith.constant 0.000000e+00 : f32
    %75 = vector.broadcast %cst_135 : f32 to vector<16x16x8xf32>
    %76 = arith.maximumf %74, %75 : vector<16x16x8xf32>
    %c0_136 = arith.constant 0 : index
    %c0_137 = arith.constant 0 : index
    %77 = vector.load %arg6[%c0_136, %c0_137] : memref<4x8xf32, #tpu.memory_space<vmem>>, vector<4x8xf32>
    %cst_138 = arith.constant dense<0.000000e+00> : vector<16x16x8xf32>
    %78 = tpu.matmul %1, %77, %cst_138 {dimension_numbers = #tpu.dot_dimension_numbers<[2], [0], [0, 1], [1], [0, 0, 0, 1, 1, 1], [], []>} : vector<16x16x4xf32>, vector<4x8xf32>, vector<16x16x8xf32> -> vector<16x16x8xf32>
    %c0_139 = arith.constant 0 : index
    %c0_140 = arith.constant 0 : index
    %c0_141 = arith.constant 0 : index
    %79 = vector.load %arg11[%c0_139, %c0_140, %c0_141] : memref<1x1x8xf32, #tpu.memory_space<vmem>>, vector<1x1x8xf32>
    %80 = vector.broadcast %79 : vector<1x1x8xf32> to vector<16x16x8xf32>
    %81 = arith.addf %78, %80 : vector<16x16x8xf32>
    %cst_142 = arith.constant 0.000000e+00 : f32
    %82 = vector.broadcast %cst_142 : f32 to vector<16x16x8xf32>
    %83 = arith.maximumf %81, %82 : vector<16x16x8xf32>
    %84 = arith.addf %76, %83 : vector<16x16x8xf32>
    %85 = vector.shape_cast %84 : vector<16x16x8xf32> to vector<8x2x16x8xf32>
    %86 = vector.extract_strided_slice %85 {offsets = [0, 0, 0, 0], sizes = [8, 1, 16, 8], strides = [1, 1, 1, 1]} : vector<8x2x16x8xf32> to vector<8x1x16x8xf32>
    %87 = vector.shape_cast %86 : vector<8x1x16x8xf32> to vector<8x16x8xf32>
    %88 = vector.extract_strided_slice %85 {offsets = [0, 1, 0, 0], sizes = [8, 1, 16, 8], strides = [1, 1, 1, 1]} : vector<8x2x16x8xf32> to vector<8x1x16x8xf32>
    %89 = vector.shape_cast %88 : vector<8x1x16x8xf32> to vector<8x16x8xf32>
    %90 = arith.addf %87, %89 : vector<8x16x8xf32>
    %c0_143 = arith.constant 0 : index
    %c0_144 = arith.constant 0 : index
    %c0_145 = arith.constant 0 : index
    %91 = vector.load %arg16[%c0_143, %c0_144, %c0_145] : memref<8x16x8xf32, #tpu.memory_space<vmem>>, vector<8x16x8xf32>
    tpu.vector_store %arg16[%c0_143, %c0_144, %c0_145], %90 {strides = array<i32>} : memref<8x16x8xf32, #tpu.memory_space<vmem>>, vector<8x16x8xf32>,
    %c0_146 = arith.constant 0 : index
    %c0_147 = arith.constant 0 : index
    %c0_148 = arith.constant 0 : index
    %92 = tpu.strided_load %arg16[%c0_146, %c0_147, %c0_148] {strides = array<i32: 1, 2, 1>} : memref<8x16x8xf32, #tpu.memory_space<vmem>>, vector<8x8x8xf32>
    %c0_149 = arith.constant 0 : index
    %c1_150 = arith.constant 1 : index
    %c0_151 = arith.constant 0 : index
    %93 = tpu.strided_load %arg16[%c0_149, %c1_150, %c0_151] {strides = array<i32: 1, 2, 1>} : memref<8x16x8xf32, #tpu.memory_space<vmem>>, vector<8x8x8xf32>
    %94 = arith.addf %92, %93 : vector<8x8x8xf32>
    %c0_152 = arith.constant 0 : index
    %c0_153 = arith.constant 0 : index
    %c0_154 = arith.constant 0 : index
    %c0_155 = arith.constant 0 : index
    %95 = vector.load %arg12[%c0_152, %c0_153, %c0_154, %c0_155] : memref<1x8x8x8xf32, #tpu.memory_space<vmem>>, vector<1x8x8x8xf32>
    %96 = vector.shape_cast %95 : vector<1x8x8x8xf32> to vector<8x8x8xf32>
    %97 = vector.shape_cast %94 : vector<8x8x8xf32> to vector<1x8x8x8xf32>
    tpu.vector_store %arg12[%c0_152, %c0_153, %c0_154, %c0_155], %97 {strides = array<i32>} : memref<1x8x8x8xf32, #tpu.memory_space<vmem>>, vector<1x8x8x8xf32>,
    return
  }
  func.func @transform_0(%arg0: i32) -> (i32, i32, i32, i32) {
    %c0_i32 = arith.constant 0 : i32
    %c0_i32_0 = arith.constant 0 : i32
    %c0_i32_1 = arith.constant 0 : i32
    %c0_i32_2 = arith.constant 0 : i32
    return %arg0, %c0_i32, %c0_i32_0, %c0_i32_1 : i32, i32, i32, i32
  }
  func.func @transform_1(%arg0: i32) -> (i32, i32) {
    %c0_i32 = arith.constant 0 : i32
    %c0_i32_0 = arith.constant 0 : i32
    %c0_i32_1 = arith.constant 0 : i32
    return %c0_i32, %c0_i32_0 : i32, i32
  }
  func.func @transform_2(%arg0: i32) -> (i32, i32) {
    %c0_i32 = arith.constant 0 : i32
    %c0_i32_0 = arith.constant 0 : i32
    %c0_i32_1 = arith.constant 0 : i32
    return %c0_i32, %c0_i32_0 : i32, i32
  }
  func.func @transform_3(%arg0: i32) -> (i32, i32) {
    %c0_i32 = arith.constant 0 : i32
    %c0_i32_0 = arith.constant 0 : i32
    %c0_i32_1 = arith.constant 0 : i32
    return %c0_i32, %c0_i32_0 : i32, i32
  }
  func.func @transform_4(%arg0: i32) -> (i32, i32) {
    %c0_i32 = arith.constant 0 : i32
    %c0_i32_0 = arith.constant 0 : i32
    %c0_i32_1 = arith.constant 0 : i32
    return %c0_i32, %c0_i32_0 : i32, i32
  }
  func.func @transform_5(%arg0: i32) -> (i32, i32) {
    %c0_i32 = arith.constant 0 : i32
    %c0_i32_0 = arith.constant 0 : i32
    %c0_i32_1 = arith.constant 0 : i32
    return %c0_i32, %c0_i32_0 : i32, i32
  }
  func.func @transform_6(%arg0: i32) -> (i32, i32, i32) {
    %c0_i32 = arith.constant 0 : i32
    %c0_i32_0 = arith.constant 0 : i32
    %c0_i32_1 = arith.constant 0 : i32
    %c0_i32_2 = arith.constant 0 : i32
    return %c0_i32, %c0_i32_0, %c0_i32_1 : i32, i32, i32
  }
  func.func @transform_7(%arg0: i32) -> (i32, i32, i32) {
    %c0_i32 = arith.constant 0 : i32
    %c0_i32_0 = arith.constant 0 : i32
    %c0_i32_1 = arith.constant 0 : i32
    %c0_i32_2 = arith.constant 0 : i32
    return %c0_i32, %c0_i32_0, %c0_i32_1 : i32, i32, i32
  }
  func.func @transform_8(%arg0: i32) -> (i32, i32, i32) {
    %c0_i32 = arith.constant 0 : i32
    %c0_i32_0 = arith.constant 0 : i32
    %c0_i32_1 = arith.constant 0 : i32
    %c0_i32_2 = arith.constant 0 : i32
    return %c0_i32, %c0_i32_0, %c0_i32_1 : i32, i32, i32
  }
  func.func @transform_9(%arg0: i32) -> (i32, i32, i32) {
    %c0_i32 = arith.constant 0 : i32
    %c0_i32_0 = arith.constant 0 : i32
    %c0_i32_1 = arith.constant 0 : i32
    %c0_i32_2 = arith.constant 0 : i32
    return %c0_i32, %c0_i32_0, %c0_i32_1 : i32, i32, i32
  }
  func.func @transform_10(%arg0: i32) -> (i32, i32, i32) {
    %c0_i32 = arith.constant 0 : i32
    %c0_i32_0 = arith.constant 0 : i32
    %c0_i32_1 = arith.constant 0 : i32
    %c0_i32_2 = arith.constant 0 : i32
    return %c0_i32, %c0_i32_0, %c0_i32_1 : i32, i32, i32
  }
  func.func @transform_11(%arg0: i32) -> (i32, i32, i32, i32) {
    %c0_i32 = arith.constant 0 : i32
    %c0_i32_0 = arith.constant 0 : i32
    %c0_i32_1 = arith.constant 0 : i32
    %c0_i32_2 = arith.constant 0 : i32
    return %arg0, %c0_i32, %c0_i32_0, %c0_i32_1 : i32, i32, i32, i32
  }
}

</mosaic_0001>

<llo_original>
// kernel: enc_block.1
$region0: #{enc_block.1}
  #allocation0 [shape = 'u32[]', space=smem, size = 0x4, offset = 0x4, fixed_abs, tag = 'smem constant byte address 0x4 - core index']
  #allocation1 [shape = 'u32[144,128]{1,0:T(1,128)}', space=vmem, size = 0x12000, scoped, tag = 'internal scratch']
  #allocation2 [shape = 'f32[18,32,4]{2,1,0:T(8,128)}', space=vmem, size = 0x48000, scoped, tag = 'scratch operand']
  #allocation3 [shape = 'f32[20,32,4]{2,1,0:T(8,128)}', space=vmem, size = 0x50000, scoped, tag = 'scratch operand']
  #allocation4 [shape = 'f32[18,32,4]{2,1,0:T(8,128)}', space=vmem, size = 0x48000, scoped, tag = 'scratch operand']
  #allocation5 [shape = 'f32[8,16,8]{2,1,0:T(8,128)}', space=vmem, size = 0x10000, scoped, tag = 'scratch operand']
  %s0 = inlined_call_operand.vmem [shape: f32[2,16,16,4], index: 0, kind: input, shape index: {}]
  %s1 = inlined_call_operand.vmem [shape: f32[36,4], index: 1, kind: input, shape index: {}]
  %s2 = inlined_call_operand.vmem [shape: f32[36,4], index: 2, kind: input, shape index: {}]
  %s3 = inlined_call_operand.vmem [shape: f32[16,4], index: 3, kind: input, shape index: {}]
  %s4 = inlined_call_operand.vmem [shape: f32[12,8], index: 4, kind: input, shape index: {}]
  %s5 = inlined_call_operand.vmem [shape: f32[4,8], index: 5, kind: input, shape index: {}]
  %s6 = inlined_call_operand.vmem [shape: f32[1,1,4], index: 6, kind: input, shape index: {}]
  %s7 = inlined_call_operand.vmem [shape: f32[1,1,4], index: 7, kind: input, shape index: {}]
  %s8 = inlined_call_operand.vmem [shape: f32[1,1,4], index: 8, kind: input, shape index: {}]
  %s9 = inlined_call_operand.vmem [shape: f32[1,1,8], index: 9, kind: input, shape index: {}]
  %s10 = inlined_call_operand.vmem [shape: f32[1,1,8], index: 10, kind: input, shape index: {}]
  %s11 = inlined_call_operand.vmem [shape: f32[2,8,8,8], index: 11, kind: output, shape index: {}]
  %s12 = sld [smem:[#allocation0]]
  $region77: #{enc_block.1} parent=0
    _
  %s14 = ssub.s32 1, %s12
  %s15 = scalar_select 0, %s14, %s12
  loop: start=0, step=1, limit=4
  $region2: #{enc_block.1} parent=0 // loop_pre_header
    _
  $region3: #{enc_block.1} parent=0 // loop_header
    %s17 = sphi 0, %s21
    %p18 = scmp.ge.s32.totalorder %s17, 4
    %s27 = sphi 0, %s29
    %s30 = sphi 0, %s27
    %s31 = sphi 0, %s30
    %s47 = sphi 0, %s31
    %s51 = sphi 0, %s51
    %s53 = sphi 0, %s51
    %s54 = sphi 0, %s53
    %s68 = sphi 0, %s54
    %s72 = sphi 0, %s72
    %s74 = sphi 0, %s72
    %s75 = sphi 0, %s74
    %s89 = sphi 0, %s75
    %s93 = sphi 0, %s93
    %s95 = sphi 0, %s93
    %s96 = sphi 0, %s95
    %s110 = sphi 0, %s96
    %s114 = sphi 0, %s114
    %s116 = sphi 0, %s114
    %s117 = sphi 0, %s116
    %s131 = sphi 0, %s117
    %s135 = sphi 0, %s135
    %s137 = sphi 0, %s135
    %s138 = sphi 0, %s137
    %s152 = sphi 0, %s138
    %s156 = sphi 0, %s156
    %s158 = sphi 0, %s156
    %s159 = sphi 0, %s158
    %s173 = sphi 0, %s159
    %s177 = sphi 0, %s177
    %s179 = sphi 0, %s177
    %s180 = sphi 0, %s179
    %s194 = sphi 0, %s180
    %s198 = sphi 0, %s198
    %s200 = sphi 0, %s198
    %s201 = sphi 0, %s200
    %s215 = sphi 0, %s201
    %s219 = sphi 0, %s219
    %s221 = sphi 0, %s219
    %s222 = sphi 0, %s221
    %s236 = sphi 0, %s222
    %s240 = sphi 0, %s240
    %s242 = sphi 0, %s240
    %s243 = sphi 0, %s242
    %s257 = sphi 0, %s243
    %s263 = sphi 0, %s265
    %s266 = sphi 0, %s263
    %s267 = sphi 0, %s266
    %s283 = sphi 0, %s267
  $region4: #{enc_block.1} parent=0 // loop_header_branch
    %20 = sbr.rel (%p18) target = $region8
  $region5: #{enc_block.1} parent=0 // loop_body
    %s22 = ssub.s32 %s17, 1
    %s23 = ssub.s32 %s17, 2
    %s24 = sadd.s32 %s17, 1
    %s25 = ssub.s32 %s17, %s24
    %p26 = scmp.eq.s32.totalorder %s25, 0
    %s28 = sadd.s32 %s27, 1
    %s29 = scalar_select %p26, %s27, %s28
    %p32 = pneg %p26
    %p33 = scmp.eq.s32.totalorder %s17, 1
    %p34 = por %p32, %p33
    %p35 = scmp.ne.s32.totalorder %s27, %s30
    %p36 = scmp.eq.s32.totalorder %s17, 0
    %p37 = por %p35, %p36
    %p38 = scmp.ne.s32.totalorder %s27, %s30
    %p39 = scmp.eq.s32.totalorder %s22, 1
    %p40 = por %p38, %p39
    %p41 = scmp.ne.s32.totalorder %s30, %s31
    %p42 = scmp.eq.s32.totalorder %s22, 0
    %p43 = por %p41, %p42
    %p44 = scmp.ne.s32.totalorder %s30, %s31
    %p45 = scmp.eq.s32.totalorder %s23, 1
    %p46 = por %p44, %p45
    %p48 = scmp.ne.s32.totalorder %s31, %s47
    %p49 = scmp.eq.s32.totalorder %s23, 0
    %p50 = por %p48, %p49
    %s52 = sadd.s32 %s51, 1
    %p55 = scmp.eq.s32.totalorder %s17, 1
    %p56 = scmp.ne.s32.totalorder %s51, %s53
    %p57 = scmp.eq.s32.totalorder %s17, 0
    %p58 = por %p56, %p57
    %p59 = scmp.ne.s32.totalorder %s51, %s53
    %p60 = scmp.eq.s32.totalorder %s22, 1
    %p61 = por %p59, %p60
    %p62 = scmp.ne.s32.totalorder %s53, %s54
    %p63 = scmp.eq.s32.totalorder %s22, 0
    %p64 = por %p62, %p63
    %p65 = scmp.ne.s32.totalorder %s53, %s54
    %p66 = scmp.eq.s32.totalorder %s23, 1
    %p67 = por %p65, %p66
    %p69 = scmp.ne.s32.totalorder %s54, %s68
    %p70 = scmp.eq.s32.totalorder %s23, 0
    %p71 = por %p69, %p70
    %s73 = sadd.s32 %s72, 1
    %p76 = scmp.eq.s32.totalorder %s17, 1
    %p77 = scmp.ne.s32.totalorder %s72, %s74
    %p78 = scmp.eq.s32.totalorder %s17, 0
    %p79 = por %p77, %p78
    %p80 = scmp.ne.s32.totalorder %s72, %s74
    %p81 = scmp.eq.s32.totalorder %s22, 1
    %p82 = por %p80, %p81
    %p83 = scmp.ne.s32.totalorder %s74, %s75
    %p84 = scmp.eq.s32.totalorder %s22, 0
    %p85 = por %p83, %p84
    %p86 = scmp.ne.s32.totalorder %s74, %s75
    %p87 = scmp.eq.s32.totalorder %s23, 1
    %p88 = por %p86, %p87
    %p90 = scmp.ne.s32.totalorder %s75, %s89
    %p91 = scmp.eq.s32.totalorder %s23, 0
    %p92 = por %p90, %p91
    %s94 = sadd.s32 %s93, 1
    %p97 = scmp.eq.s32.totalorder %s17, 1
    %p98 = scmp.ne.s32.totalorder %s93, %s95
    %p99 = scmp.eq.s32.totalorder %s17, 0
    %p100 = por %p98, %p99
    %p101 = scmp.ne.s32.totalorder %s93, %s95
    %p102 = scmp.eq.s32.totalorder %s22, 1
    %p103 = por %p101, %p102
    %p104 = scmp.ne.s32.totalorder %s95, %s96
    %p105 = scmp.eq.s32.totalorder %s22, 0
    %p106 = por %p104, %p105
    %p107 = scmp.ne.s32.totalorder %s95, %s96
    %p108 = scmp.eq.s32.totalorder %s23, 1
    %p109 = por %p107, %p108
    %p111 = scmp.ne.s32.totalorder %s96, %s110
    %p112 = scmp.eq.s32.totalorder %s23, 0
    %p113 = por %p111, %p112
    %s115 = sadd.s32 %s114, 1
    %p118 = scmp.eq.s32.totalorder %s17, 1
    %p119 = scmp.ne.s32.totalorder %s114, %s116
    %p120 = scmp.eq.s32.totalorder %s17, 0
    %p121 = por %p119, %p120
    %p122 = scmp.ne.s32.totalorder %s114, %s116
    %p123 = scmp.eq.s32.totalorder %s22, 1
    %p124 = por %p122, %p123
    %p125 = scmp.ne.s32.totalorder %s116, %s117
    %p126 = scmp.eq.s32.totalorder %s22, 0
    %p127 = por %p125, %p126
    %p128 = scmp.ne.s32.totalorder %s116, %s117
    %p129 = scmp.eq.s32.totalorder %s23, 1
    %p130 = por %p128, %p129
    %p132 = scmp.ne.s32.totalorder %s117, %s131
    %p133 = scmp.eq.s32.totalorder %s23, 0
    %p134 = por %p132, %p133
    %s136 = sadd.s32 %s135, 1
    %p139 = scmp.eq.s32.totalorder %s17, 1
    %p140 = scmp.ne.s32.totalorder %s135, %s137
    %p141 = scmp.eq.s32.totalorder %s17, 0
    %p142 = por %p140, %p141
    %p143 = scmp.ne.s32.totalorder %s135, %s137
    %p144 = scmp.eq.s32.totalorder %s22, 1
    %p145 = por %p143, %p144
    %p146 = scmp.ne.s32.totalorder %s137, %s138
    %p147 = scmp.eq.s32.totalorder %s22, 0
    %p148 = por %p146, %p147
    %p149 = scmp.ne.s32.totalorder %s137, %s138
    %p150 = scmp.eq.s32.totalorder %s23, 1
    %p151 = por %p149, %p150
    %p153 = scmp.ne.s32.totalorder %s138, %s152
    %p154 = scmp.eq.s32.totalorder %s23, 0
    %p155 = por %p153, %p154
    %s157 = sadd.s32 %s156, 1
    %p160 = scmp.eq.s32.totalorder %s17, 1
    %p161 = scmp.ne.s32.totalorder %s156, %s158
    %p162 = scmp.eq.s32.totalorder %s17, 0
    %p163 = por %p161, %p162
    %p164 = scmp.ne.s32.totalorder %s156, %s158
    %p165 = scmp.eq.s32.totalorder %s22, 1
    %p166 = por %p164, %p165
    %p167 = scmp.ne.s32.totalorder %s158, %s159
    %p168 = scmp.eq.s32.totalorder %s22, 0
    %p169 = por %p167, %p168
    %p170 = scmp.ne.s32.totalorder %s158, %s159
    %p171 = scmp.eq.s32.totalorder %s23, 1
    %p172 = por %p170, %p171
    %p174 = scmp.ne.s32.totalorder %s159, %s173
    %p175 = scmp.eq.s32.totalorder %s23, 0
    %p176 = por %p174, %p175
    %s178 = sadd.s32 %s177, 1
    %p181 = scmp.eq.s32.totalorder %s17, 1
    %p182 = scmp.ne.s32.totalorder %s177, %s179
    %p183 = scmp.eq.s32.totalorder %s17, 0
    %p184 = por %p182, %p183
    %p185 = scmp.ne.s32.totalorder %s177, %s179
    %p186 = scmp.eq.s32.totalorder %s22, 1
    %p187 = por %p185, %p186
    %p188 = scmp.ne.s32.totalorder %s179, %s180
    %p189 = scmp.eq.s32.totalorder %s22, 0
    %p190 = por %p188, %p189
    %p191 = scmp.ne.s32.totalorder %s179, %s180
    %p192 = scmp.eq.s32.totalorder %s23, 1
    %p193 = por %p191, %p192
    %p195 = scmp.ne.s32.totalorder %s180, %s194
    %p196 = scmp.eq.s32.totalorder %s23, 0
    %p197 = por %p195, %p196
    %s199 = sadd.s32 %s198, 1
    %p202 = scmp.eq.s32.totalorder %s17, 1
    %p203 = scmp.ne.s32.totalorder %s198, %s200
    %p204 = scmp.eq.s32.totalorder %s17, 0
    %p205 = por %p203, %p204
    %p206 = scmp.ne.s32.totalorder %s198, %s200
    %p207 = scmp.eq.s32.totalorder %s22, 1
    %p208 = por %p206, %p207
    %p209 = scmp.ne.s32.totalorder %s200, %s201
    %p210 = scmp.eq.s32.totalorder %s22, 0
    %p211 = por %p209, %p210
    %p212 = scmp.ne.s32.totalorder %s200, %s201
    %p213 = scmp.eq.s32.totalorder %s23, 1
    %p214 = por %p212, %p213
    %p216 = scmp.ne.s32.totalorder %s201, %s215
    %p217 = scmp.eq.s32.totalorder %s23, 0
    %p218 = por %p216, %p217
    %s220 = sadd.s32 %s219, 1
    %p223 = scmp.eq.s32.totalorder %s17, 1
    %p224 = scmp.ne.s32.totalorder %s219, %s221
    %p225 = scmp.eq.s32.totalorder %s17, 0
    %p226 = por %p224, %p225
    %p227 = scmp.ne.s32.totalorder %s219, %s221
    %p228 = scmp.eq.s32.totalorder %s22, 1
    %p229 = por %p227, %p228
    %p230 = scmp.ne.s32.totalorder %s221, %s222
    %p231 = scmp.eq.s32.totalorder %s22, 0
    %p232 = por %p230, %p231
    %p233 = scmp.ne.s32.totalorder %s221, %s222
    %p234 = scmp.eq.s32.totalorder %s23, 1
    %p235 = por %p233, %p234
    %p237 = scmp.ne.s32.totalorder %s222, %s236
    %p238 = scmp.eq.s32.totalorder %s23, 0
    %p239 = por %p237, %p238
    %s241 = sadd.s32 %s240, 1
    %p244 = scmp.eq.s32.totalorder %s17, 1
    %p245 = scmp.ne.s32.totalorder %s240, %s242
    %p246 = scmp.eq.s32.totalorder %s17, 0
    %p247 = por %p245, %p246
    %p248 = scmp.ne.s32.totalorder %s240, %s242
    %p249 = scmp.eq.s32.totalorder %s22, 1
    %p250 = por %p248, %p249
    %p251 = scmp.ne.s32.totalorder %s242, %s243
    %p252 = scmp.eq.s32.totalorder %s22, 0
    %p253 = por %p251, %p252
    %p254 = scmp.ne.s32.totalorder %s242, %s243
    %p255 = scmp.eq.s32.totalorder %s23, 1
    %p256 = por %p254, %p255
    %p258 = scmp.ne.s32.totalorder %s243, %s257
    %p259 = scmp.eq.s32.totalorder %s23, 0
    %p260 = por %p258, %p259
    %s261 = ssub.s32 %s17, %s24
    %p262 = scmp.eq.s32.totalorder %s261, 0
    %s264 = sadd.s32 %s263, 1
    %s265 = scalar_select %p262, %s263, %s264
    %p268 = pneg %p262
    %p269 = scmp.eq.s32.totalorder %s17, 1
    %p270 = por %p268, %p269
    %p271 = scmp.ne.s32.totalorder %s263, %s266
    %p272 = scmp.eq.s32.totalorder %s17, 0
    %p273 = por %p271, %p272
    %p274 = scmp.ne.s32.totalorder %s263, %s266
    %p275 = scmp.eq.s32.totalorder %s22, 1
    %p276 = por %p274, %p275
    %p277 = scmp.ne.s32.totalorder %s266, %s267
    %p278 = scmp.eq.s32.totalorder %s22, 0
    %p279 = por %p277, %p278
    %p280 = scmp.ne.s32.totalorder %s266, %s267
    %p281 = scmp.eq.s32.totalorder %s23, 1
    %p282 = por %p280, %p281
    %p284 = scmp.ne.s32.totalorder %s267, %s283
    %p285 = scmp.eq.s32.totalorder %s23, 0
    %p286 = por %p284, %p285
    %p287 = scmp.le.s32.totalorder 1, %s17
    %p288 = scmp.lt.s32.totalorder %s17, 3
    %p289 = pnand %p287, %p288
    %p290 = pneg %p289
    // Predicated region
    $region9: #{enc_block.1} parent=5 // pred_check
      _
    $region10: #{enc_block.1} parent=5 // pred_check_branch
      %292 = sbr.rel (%p289) target = $region12
    $region11: #{enc_block.1} parent=5 // pred_region
      %s293 = ssub.s32 %s17, 1
      // Predicated region
      $region13: #{enc_block.1} parent=11 // pred_check
        %p294 = pneg %p64
      $region14: #{enc_block.1} parent=11 // pred_check_branch
        %296 = sbr.rel (%p294) target = $region16
      $region15: #{enc_block.1} parent=11 // pred_region
        _
      $region16: #{enc_block.1} parent=11 // pred_fallthru
        _
      // Predicated region
      $region17: #{enc_block.1} parent=11 // pred_check
        %p297 = pneg %p85
      $region18: #{enc_block.1} parent=11 // pred_check_branch
        %299 = sbr.rel (%p297) target = $region20
      $region19: #{enc_block.1} parent=11 // pred_region
        _
      $region20: #{enc_block.1} parent=11 // pred_fallthru
        _
      // Predicated region
      $region21: #{enc_block.1} parent=11 // pred_check
        %p300 = pneg %p106
      $region22: #{enc_block.1} parent=11 // pred_check_branch
        %302 = sbr.rel (%p300) target = $region24
      $region23: #{enc_block.1} parent=11 // pred_region
        _
      $region24: #{enc_block.1} parent=11 // pred_fallthru
        _
      // Predicated region
      $region25: #{enc_block.1} parent=11 // pred_check
        %p303 = pneg %p127
      $region26: #{enc_block.1} parent=11 // pred_check_branch
        %305 = sbr.rel (%p303) target = $region28
      $region27: #{enc_block.1} parent=11 // pred_region
        _
      $region28: #{enc_block.1} parent=11 // pred_fallthru
        _
      // Predicated region
      $region29: #{enc_block.1} parent=11 // pred_check
        %p306 = pneg %p148
      $region30: #{enc_block.1} parent=11 // pred_check_branch
        %308 = sbr.rel (%p306) target = $region32
      $region31: #{enc_block.1} parent=11 // pred_region
        _
      $region32: #{enc_block.1} parent=11 // pred_fallthru
        _
      // Predicated region
      $region33: #{enc_block.1} parent=11 // pred_check
        %p309 = pneg %p169
      $region34: #{enc_block.1} parent=11 // pred_check_branch
        %311 = sbr.rel (%p309) target = $region36
      $region35: #{enc_block.1} parent=11 // pred_region
        _
      $region36: #{enc_block.1} parent=11 // pred_fallthru
        _
      // Predicated region
      $region37: #{enc_block.1} parent=11 // pred_check
        %p312 = pneg %p190
      $region38: #{enc_block.1} parent=11 // pred_check_branch
        %314 = sbr.rel (%p312) target = $region40
      $region39: #{enc_block.1} parent=11 // pred_region
        _
      $region40: #{enc_block.1} parent=11 // pred_fallthru
        _
      // Predicated region
      $region41: #{enc_block.1} parent=11 // pred_check
        %p315 = pneg %p211
      $region42: #{enc_block.1} parent=11 // pred_check_branch
        %317 = sbr.rel (%p315) target = $region44
      $region43: #{enc_block.1} parent=11 // pred_region
        _
      $region44: #{enc_block.1} parent=11 // pred_fallthru
        _
      // Predicated region
      $region45: #{enc_block.1} parent=11 // pred_check
        %p318 = pneg %p232
      $region46: #{enc_block.1} parent=11 // pred_check_branch
        %320 = sbr.rel (%p318) target = $region48
      $region47: #{enc_block.1} parent=11 // pred_region
        _
      $region48: #{enc_block.1} parent=11 // pred_fallthru
        _
      // Predicated region
      $region49: #{enc_block.1} parent=11 // pred_check
        %p321 = pneg %p253
      $region50: #{enc_block.1} parent=11 // pred_check_branch
        %323 = sbr.rel (%p321) target = $region52
      $region51: #{enc_block.1} parent=11 // pred_region
        _
      $region52: #{enc_block.1} parent=11 // pred_fallthru
        _
    $region12: #{enc_block.1} parent=5 // pred_fallthru
      _
    %p324 = scmp.lt.s32.totalorder %s17, 2
    // Predicated region
    $region53: #{enc_block.1} parent=5 // pred_check
      %p325 = pneg %p324
    $region54: #{enc_block.1} parent=5 // pred_check_branch
      %327 = sbr.rel (%p325) target = $region56
    $region55: #{enc_block.1} parent=5 // pred_region
      // Predicated region
      $region57: #{enc_block.1} parent=55 // pred_check
        %p328 = pneg %p37
      $region58: #{enc_block.1} parent=55 // pred_check_branch
        %330 = sbr.rel (%p328) target = $region60
      $region59: #{enc_block.1} parent=55 // pred_region
        %p331 = scmp.lt.s32.totalorder %s17, 1
        %s332 = scalar_select %p331, %s17, 1
        %s333 = smul.addr %s332, 32
        %s334 = smul.addr %s333, 8
        %s335 = scalar_lea.vmem %s0, %s334
      $region60: #{enc_block.1} parent=55 // pred_fallthru
        _
    $region56: #{enc_block.1} parent=5 // pred_fallthru
      _
    %p336 = scmp.le.s32.totalorder 1, %s17
    %p337 = scmp.lt.s32.totalorder %s17, 3
    %p338 = pnand %p336, %p337
    %p339 = pneg %p338
    // Predicated region
    $region61: #{enc_block.1} parent=5 // pred_check
      _
    $region62: #{enc_block.1} parent=5 // pred_check_branch
      %341 = sbr.rel (%p338) target = $region64
    $region63: #{enc_block.1} parent=5 // pred_region
      %s342 = ssub.s32 %s17, 1
      %p343 = scmp.lt.s32.totalorder %s22, 1
      %s344 = scalar_select %p343, %s22, 1
      %s345 = smul.addr %s344, 32
      %s346 = smul.addr %s345, 8
      %s347 = scalar_lea.vmem %s0, %s346
      %p348 = pneg %p43
      %p349 = pneg %p40
      %p350 = pneg %p64
      %p351 = pneg %p61
      %p352 = pneg %p85
      %p353 = pneg %p82
      %p354 = pneg %p106
      %p355 = pneg %p103
      %p356 = pneg %p127
      %p357 = pneg %p124
      %p358 = pneg %p148
      %p359 = pneg %p145
      %p360 = pneg %p169
      %p361 = pneg %p166
      %p362 = pneg %p190
      %p363 = pneg %p187
      %p364 = pneg %p211
      %p365 = pneg %p208
      %p366 = pneg %p232
      %p367 = pneg %p229
      %p368 = pneg %p253
      %p369 = pneg %p250
      %p370 = pneg %p279
      %p371 = pneg %p276
      %p372 = scmp.lt.s32.totalorder %s22, 1
      %s373 = scalar_select %p372, %s22, 1
      %s374 = smul.addr %s373, 8
      %s375 = smul.addr %s374, 8
      %s376 = scalar_lea.vmem %s11, %s375
      %p377 = scmp.lt.s32.totalorder %s22, 1
      %s378 = scalar_select %p377, %s22, 1
      %s379 = smul.addr %s378, 32
      %s380 = smul.addr %s379, 8
      %s381 = scalar_lea.vmem %s0, %s380
      %p382 = scmp.lt.s32.totalorder %s22, 1
      %s383 = scalar_select %p382, %s22, 1
      %s384 = smul.addr %s383, 8
      %s385 = smul.addr %s384, 8
      %s386 = scalar_lea.vmem %s11, %s385
      %v387 = vld [vmem:[%s381] sm:$0xff]
      %v388 = vld [vmem:[%s381 + $0x8] sm:$0xff]
      %v389 = vld [vmem:[%s381 + $0x10] sm:$0xff]
      %v390 = vld [vmem:[%s381 + $0x18] sm:$0xff]
      %v391 = vld [vmem:[%s381 + $0x20] sm:$0xff]
      %v392 = vld [vmem:[%s381 + $0x28] sm:$0xff]
      %v393 = vld [vmem:[%s381 + $0x30] sm:$0xff]
      %v394 = vld [vmem:[%s381 + $0x38] sm:$0xff]
      %v395 = vld [vmem:[%s381 + $0x40] sm:$0xff]
      %v396 = vld [vmem:[%s381 + $0x48] sm:$0xff]
      %v397 = vld [vmem:[%s381 + $0x50] sm:$0xff]
      %v398 = vld [vmem:[%s381 + $0x58] sm:$0xff]
      %v399 = vld [vmem:[%s381 + $0x60] sm:$0xff]
      %v400 = vld [vmem:[%s381 + $0x68] sm:$0xff]
      %v401 = vld [vmem:[%s381 + $0x70] sm:$0xff]
      %v402 = vld [vmem:[%s381 + $0x78] sm:$0xff]
      %v403 = vld [vmem:[%s381 + $0x80] sm:$0xff]
      %v404 = vld [vmem:[%s381 + $0x88] sm:$0xff]
      %v405 = vld [vmem:[%s381 + $0x90] sm:$0xff]
      %v406 = vld [vmem:[%s381 + $0x98] sm:$0xff]
      %v407 = vld [vmem:[%s381 + $0xa0] sm:$0xff]
      %v408 = vld [vmem:[%s381 + $0xa8] sm:$0xff]
      %v409 = vld [vmem:[%s381 + $0xb0] sm:$0xff]
      %v410 = vld [vmem:[%s381 + $0xb8] sm:$0xff]
      %v411 = vld [vmem:[%s381 + $0xc0] sm:$0xff]
      %v412 = vld [vmem:[%s381 + $0xc8] sm:$0xff]
      %v413 = vld [vmem:[%s381 + $0xd0] sm:$0xff]
      %v414 = vld [vmem:[%s381 + $0xd8] sm:$0xff]
      %v415 = vld [vmem:[%s381 + $0xe0] sm:$0xff]
      %v416 = vld [vmem:[%s381 + $0xe8] sm:$0xff]
      %v417 = vld [vmem:[%s381 + $0xf0] sm:$0xff]
      %v418 = vld [vmem:[%s381 + $0xf8] sm:$0xff]
      %vm419 = vcmask 31744
      %420 = vst.msk [vmem:[#allocation2] sm:$0xff] %vm419, 0.0
      %421 = vst.msk [vmem:[#allocation2 + $0x8] sm:$0xff] %vm419, 0.0
      %422 = vst.msk [vmem:[#allocation2 + $0x10] sm:$0xff] %vm419, 0.0
      %423 = vst.msk [vmem:[#allocation2 + $0x18] sm:$0xff] %vm419, 0.0
      %s424 = scalar_lea.vmem [#allocation2], 544
      %425 = vst.msk [vmem:[%s424] sm:$0xff] %vm419, 0.0
      %426 = vst.msk [vmem:[%s424 + $0x8] sm:$0xff] %vm419, 0.0
      %427 = vst.msk [vmem:[%s424 + $0x10] sm:$0xff] %vm419, 0.0
      %428 = vst.msk [vmem:[%s424 + $0x18] sm:$0xff] %vm419, 0.0
      %s429 = scalar_lea.vmem [#allocation2], 32
      %vm430 = vcmask 24576
      %431 = vst.msk [vmem:[%s429 + $0x7] sm:$0x1] %vm430, 0.0
      %432 = vst.msk [vmem:[%s429 + $0x27] sm:$0x1] %vm430, 0.0
      %433 = vst.msk [vmem:[%s429 + $0x47] sm:$0x1] %vm430, 0.0
      %434 = vst.msk [vmem:[%s429 + $0x67] sm:$0x1] %vm430, 0.0
      %435 = vst.msk [vmem:[%s429 + $0x87] sm:$0x1] %vm430, 0.0
      %436 = vst.msk [vmem:[%s429 + $0xa7] sm:$0x1] %vm430, 0.0
      %437 = vst.msk [vmem:[%s429 + $0xc7] sm:$0x1] %vm430, 0.0
      %438 = vst.msk [vmem:[%s429 + $0xe7] sm:$0x1] %vm430, 0.0
      %439 = vst.msk [vmem:[%s429 + $0x107] sm:$0x1] %vm430, 0.0
      %440 = vst.msk [vmem:[%s429 + $0x127] sm:$0x1] %vm430, 0.0
      %441 = vst.msk [vmem:[%s429 + $0x147] sm:$0x1] %vm430, 0.0
      %442 = vst.msk [vmem:[%s429 + $0x167] sm:$0x1] %vm430, 0.0
      %443 = vst.msk [vmem:[%s429 + $0x187] sm:$0x1] %vm430, 0.0
      %444 = vst.msk [vmem:[%s429 + $0x1a7] sm:$0x1] %vm430, 0.0
      %445 = vst.msk [vmem:[%s429 + $0x1c7] sm:$0x1] %vm430, 0.0
      %446 = vst.msk [vmem:[%s429 + $0x1e7] sm:$0x1] %vm430, 0.0
      %447 = vst.msk [vmem:[%s429 + $0x18] sm:$0x1] %vm430, 0.0
      %448 = vst.msk [vmem:[%s429 + $0x38] sm:$0x1] %vm430, 0.0
      %449 = vst.msk [vmem:[%s429 + $0x58] sm:$0x1] %vm430, 0.0
      %450 = vst.msk [vmem:[%s429 + $0x78] sm:$0x1] %vm430, 0.0
      %451 = vst.msk [vmem:[%s429 + $0x98] sm:$0x1] %vm430, 0.0
      %452 = vst.msk [vmem:[%s429 + $0xb8] sm:$0x1] %vm430, 0.0
      %453 = vst.msk [vmem:[%s429 + $0xd8] sm:$0x1] %vm430, 0.0
      %454 = vst.msk [vmem:[%s429 + $0xf8] sm:$0x1] %vm430, 0.0
      %455 = vst.msk [vmem:[%s429 + $0x118] sm:$0x1] %vm430, 0.0
      %456 = vst.msk [vmem:[%s429 + $0x138] sm:$0x1] %vm430, 0.0
      %457 = vst.msk [vmem:[%s429 + $0x158] sm:$0x1] %vm430, 0.0
      %458 = vst.msk [vmem:[%s429 + $0x178] sm:$0x1] %vm430, 0.0
      %459 = vst.msk [vmem:[%s429 + $0x198] sm:$0x1] %vm430, 0.0
      %460 = vst.msk [vmem:[%s429 + $0x1b8] sm:$0x1] %vm430, 0.0
      %461 = vst.msk [vmem:[%s429 + $0x1d8] sm:$0x1] %vm430, 0.0
      %462 = vst.msk [vmem:[%s429 + $0x1f8] sm:$0x1] %vm430, 0.0
      %463 = vst.msk [vmem:[%s429 + $0x8] sm:$0xff] %vm419, %v387
      %464 = vst.msk [vmem:[%s429 + $0x10] sm:$0xff] %vm419, %v388
      %465 = vst.msk [vmem:[%s429 + $0x28] sm:$0xff] %vm419, %v389
      %466 = vst.msk [vmem:[%s429 + $0x30] sm:$0xff] %vm419, %v390
      %467 = vst.msk [vmem:[%s429 + $0x48] sm:$0xff] %vm419, %v391
      %468 = vst.msk [vmem:[%s429 + $0x50] sm:$0xff] %vm419, %v392
      %469 = vst.msk [vmem:[%s429 + $0x68] sm:$0xff] %vm419, %v393
      %470 = vst.msk [vmem:[%s429 + $0x70] sm:$0xff] %vm419, %v394
      %471 = vst.msk [vmem:[%s429 + $0x88] sm:$0xff] %vm419, %v395
      %472 = vst.msk [vmem:[%s429 + $0x90] sm:$0xff] %vm419, %v396
      %473 = vst.msk [vmem:[%s429 + $0xa8] sm:$0xff] %vm419, %v397
      %474 = vst.msk [vmem:[%s429 + $0xb0] sm:$0xff] %vm419, %v398
      %475 = vst.msk [vmem:[%s429 + $0xc8] sm:$0xff] %vm419, %v399
      %476 = vst.msk [vmem:[%s429 + $0xd0] sm:$0xff] %vm419, %v400
      %477 = vst.msk [vmem:[%s429 + $0xe8] sm:$0xff] %vm419, %v401
      %478 = vst.msk [vmem:[%s429 + $0xf0] sm:$0xff] %vm419, %v402
      %479 = vst.msk [vmem:[%s429 + $0x108] sm:$0xff] %vm419, %v403
      %480 = vst.msk [vmem:[%s429 + $0x110] sm:$0xff] %vm419, %v404
      %481 = vst.msk [vmem:[%s429 + $0x128] sm:$0xff] %vm419, %v405
      %482 = vst.msk [vmem:[%s429 + $0x130] sm:$0xff] %vm419, %v406
      %483 = vst.msk [vmem:[%s429 + $0x148] sm:$0xff] %vm419, %v407
      %484 = vst.msk [vmem:[%s429 + $0x150] sm:$0xff] %vm419, %v408
      %485 = vst.msk [vmem:[%s429 + $0x168] sm:$0xff] %vm419, %v409
      %486 = vst.msk [vmem:[%s429 + $0x170] sm:$0xff] %vm419, %v410
      %487 = vst.msk [vmem:[%s429 + $0x188] sm:$0xff] %vm419, %v411
      %488 = vst.msk [vmem:[%s429 + $0x190] sm:$0xff] %vm419, %v412
      %489 = vst.msk [vmem:[%s429 + $0x1a8] sm:$0xff] %vm419, %v413
      %490 = vst.msk [vmem:[%s429 + $0x1b0] sm:$0xff] %vm419, %v414
      %491 = vst.msk [vmem:[%s429 + $0x1c8] sm:$0xff] %vm419, %v415
      %492 = vst.msk [vmem:[%s429 + $0x1d0] sm:$0xff] %vm419, %v416
      %493 = vst.msk [vmem:[%s429 + $0x1e8] sm:$0xff] %vm419, %v417
      %494 = vst.msk [vmem:[%s429 + $0x1f0] sm:$0xff] %vm419, %v418
      %v495 = vld [vmem:[#allocation2 + $0x7] sm:$0xff]
      %v496 = vld [vmem:[#allocation2 + $0xf] sm:$0xff]
      %v497 = vld [vmem:[#allocation2 + $0x27] sm:$0xff]
      %v498 = vld [vmem:[#allocation2 + $0x2f] sm:$0xff]
      %v499 = vld [vmem:[#allocation2 + $0x47] sm:$0xff]
      %v500 = vld [vmem:[#allocation2 + $0x4f] sm:$0xff]
      %v501 = vld [vmem:[#allocation2 + $0x67] sm:$0xff]
      %v502 = vld [vmem:[#allocation2 + $0x6f] sm:$0xff]
      %v503 = vld [vmem:[#allocation2 + $0x87] sm:$0xff]
      %v504 = vld [vmem:[#allocation2 + $0x8f] sm:$0xff]
      %v505 = vld [vmem:[#allocation2 + $0xa7] sm:$0xff]
      %v506 = vld [vmem:[#allocation2 + $0xaf] sm:$0xff]
      %v507 = vld [vmem:[#allocation2 + $0xc7] sm:$0xff]
      %v508 = vld [vmem:[#allocation2 + $0xcf] sm:$0xff]
      %v509 = vld [vmem:[#allocation2 + $0xe7] sm:$0xff]
      %v510 = vld [vmem:[#allocation2 + $0xef] sm:$0xff]
      %v511 = vld [vmem:[#allocation2 + $0x107] sm:$0xff]
      %v512 = vld [vmem:[#allocation2 + $0x10f] sm:$0xff]
      %v513 = vld [vmem:[#allocation2 + $0x127] sm:$0xff]
      %v514 = vld [vmem:[#allocation2 + $0x12f] sm:$0xff]
      %v515 = vld [vmem:[#allocation2 + $0x147] sm:$0xff]
      %v516 = vld [vmem:[#allocation2 + $0x14f] sm:$0xff]
      %v517 = vld [vmem:[#allocation2 + $0x167] sm:$0xff]
      %v518 = vld [vmem:[#allocation2 + $0x16f] sm:$0xff]
      %v519 = vld [vmem:[#allocation2 + $0x187] sm:$0xff]
      %v520 = vld [vmem:[#allocation2 + $0x18f] sm:$0xff]
      %v521 = vld [vmem:[#allocation2 + $0x1a7] sm:$0xff]
      %v522 = vld [vmem:[#allocation2 + $0x1af] sm:$0xff]
      %v523 = vld [vmem:[#allocation2 + $0x1c7] sm:$0xff]
      %v524 = vld [vmem:[#allocation2 + $0x1cf] sm:$0xff]
      %v525 = vld [vmem:[#allocation2 + $0x1e7] sm:$0xff]
      %v526 = vld [vmem:[#allocation2 + $0x1ef] sm:$0xff]
      %v527 = vld [vmem:[#allocation2 + $0x8] sm:$0xff]
      %v528 = vld [vmem:[#allocation2 + $0x10] sm:$0xff]
      %v529 = vld [vmem:[#allocation2 + $0x28] sm:$0xff]
      %v530 = vld [vmem:[#allocation2 + $0x30] sm:$0xff]
      %v531 = vld [vmem:[#allocation2 + $0x48] sm:$0xff]
      %v532 = vld [vmem:[#allocation2 + $0x50] sm:$0xff]
      %v533 = vld [vmem:[#allocation2 + $0x68] sm:$0xff]
      %v534 = vld [vmem:[#allocation2 + $0x70] sm:$0xff]
      %v535 = vld [vmem:[#allocation2 + $0x88] sm:$0xff]
      %v536 = vld [vmem:[#allocation2 + $0x90] sm:$0xff]
      %v537 = vld [vmem:[#allocation2 + $0xa8] sm:$0xff]
      %v538 = vld [vmem:[#allocation2 + $0xb0] sm:$0xff]
      %v539 = vld [vmem:[#allocation2 + $0xc8] sm:$0xff]
      %v540 = vld [vmem:[#allocation2 + $0xd0] sm:$0xff]
      %v541 = vld [vmem:[#allocation2 + $0xe8] sm:$0xff]
      %v542 = vld [vmem:[#allocation2 + $0xf0] sm:$0xff]
      %v543 = vld [vmem:[#allocation2 + $0x108] sm:$0xff]
      %v544 = vld [vmem:[#allocation2 + $0x110] sm:$0xff]
      %v545 = vld [vmem:[#allocation2 + $0x128] sm:$0xff]
      %v546 = vld [vmem:[#allocation2 + $0x130] sm:$0xff]
      %v547 = vld [vmem:[#allocation2 + $0x148] sm:$0xff]
      %v548 = vld [vmem:[#allocation2 + $0x150] sm:$0xff]
      %v549 = vld [vmem:[#allocation2 + $0x168] sm:$0xff]
      %v550 = vld [vmem:[#allocation2 + $0x170] sm:$0xff]
      %v551 = vld [vmem:[#allocation2 + $0x188] sm:$0xff]
      %v552 = vld [vmem:[#allocation2 + $0x190] sm:$0xff]
      %v553 = vld [vmem:[#allocation2 + $0x1a8] sm:$0xff]
      %v554 = vld [vmem:[#allocation2 + $0x1b0] sm:$0xff]
      %v555 = vld [vmem:[#allocation2 + $0x1c8] sm:$0xff]
      %v556 = vld [vmem:[#allocation2 + $0x1d0] sm:$0xff]
      %v557 = vld [vmem:[#allocation2 + $0x1e8] sm:$0xff]
      %v558 = vld [vmem:[#allocation2 + $0x1f0] sm:$0xff]
      %v559 = vld [vmem:[#allocation2 + $0x9] sm:$0xff]
      %v560 = vld [vmem:[#allocation2 + $0x11] sm:$0xff]
      %v561 = vld [vmem:[#allocation2 + $0x29] sm:$0xff]
      %v562 = vld [vmem:[#allocation2 + $0x31] sm:$0xff]
      %v563 = vld [vmem:[#allocation2 + $0x49] sm:$0xff]
      %v564 = vld [vmem:[#allocation2 + $0x51] sm:$0xff]
      %v565 = vld [vmem:[#allocation2 + $0x69] sm:$0xff]
      %v566 = vld [vmem:[#allocation2 + $0x71] sm:$0xff]
      %v567 = vld [vmem:[#allocation2 + $0x89] sm:$0xff]
      %v568 = vld [vmem:[#allocation2 + $0x91] sm:$0xff]
      %v569 = vld [vmem:[#allocation2 + $0xa9] sm:$0xff]
      %v570 = vld [vmem:[#allocation2 + $0xb1] sm:$0xff]
      %v571 = vld [vmem:[#allocation2 + $0xc9] sm:$0xff]
      %v572 = vld [vmem:[#allocation2 + $0xd1] sm:$0xff]
      %v573 = vld [vmem:[#allocation2 + $0xe9] sm:$0xff]
      %v574 = vld [vmem:[#allocation2 + $0xf1] sm:$0xff]
      %v575 = vld [vmem:[#allocation2 + $0x109] sm:$0xff]
      %v576 = vld [vmem:[#allocation2 + $0x111] sm:$0xff]
      %v577 = vld [vmem:[#allocation2 + $0x129] sm:$0xff]
      %v578 = vld [vmem:[#allocation2 + $0x131] sm:$0xff]
      %v579 = vld [vmem:[#allocation2 + $0x149] sm:$0xff]
      %v580 = vld [vmem:[#allocation2 + $0x151] sm:$0xff]
      %v581 = vld [vmem:[#allocation2 + $0x169] sm:$0xff]
      %v582 = vld [vmem:[#allocation2 + $0x171] sm:$0xff]
      %v583 = vld [vmem:[#allocation2 + $0x189] sm:$0xff]
      %v584 = vld [vmem:[#allocation2 + $0x191] sm:$0xff]
      %v585 = vld [vmem:[#allocation2 + $0x1a9] sm:$0xff]
      %v586 = vld [vmem:[#allocation2 + $0x1b1] sm:$0xff]
      %v587 = vld [vmem:[#allocation2 + $0x1c9] sm:$0xff]
      %v588 = vld [vmem:[#allocation2 + $0x1d1] sm:$0xff]
      %v589 = vld [vmem:[#allocation2 + $0x1e9] sm:$0xff]
      %v590 = vld [vmem:[#allocation2 + $0x1f1] sm:$0xff]
      %v591 = vld [vmem:[%s429 + $0x7] sm:$0xff]
      %v592 = vld [vmem:[%s429 + $0xf] sm:$0xff]
      %v593 = vld [vmem:[%s429 + $0x27] sm:$0xff]
      %v594 = vld [vmem:[%s429 + $0x2f] sm:$0xff]
      %v595 = vld [vmem:[%s429 + $0x47] sm:$0xff]
      %v596 = vld [vmem:[%s429 + $0x4f] sm:$0xff]
      %v597 = vld [vmem:[%s429 + $0x67] sm:$0xff]
      %v598 = vld [vmem:[%s429 + $0x6f] sm:$0xff]
      %v599 = vld [vmem:[%s429 + $0x87] sm:$0xff]
      %v600 = vld [vmem:[%s429 + $0x8f] sm:$0xff]
      %v601 = vld [vmem:[%s429 + $0xa7] sm:$0xff]
      %v602 = vld [vmem:[%s429 + $0xaf] sm:$0xff]
      %v603 = vld [vmem:[%s429 + $0xc7] sm:$0xff]
      %v604 = vld [vmem:[%s429 + $0xcf] sm:$0xff]
      %v605 = vld [vmem:[%s429 + $0xe7] sm:$0xff]
      %v606 = vld [vmem:[%s429 + $0xef] sm:$0xff]
      %v607 = vld [vmem:[%s429 + $0x107] sm:$0xff]
      %v608 = vld [vmem:[%s429 + $0x10f] sm:$0xff]
      %v609 = vld [vmem:[%s429 + $0x127] sm:$0xff]
      %v610 = vld [vmem:[%s429 + $0x12f] sm:$0xff]
      %v611 = vld [vmem:[%s429 + $0x147] sm:$0xff]
      %v612 = vld [vmem:[%s429 + $0x14f] sm:$0xff]
      %v613 = vld [vmem:[%s429 + $0x167] sm:$0xff]
      %v614 = vld [vmem:[%s429 + $0x16f] sm:$0xff]
      %v615 = vld [vmem:[%s429 + $0x187] sm:$0xff]
      %v616 = vld [vmem:[%s429 + $0x18f] sm:$0xff]
      %v617 = vld [vmem:[%s429 + $0x1a7] sm:$0xff]
      %v618 = vld [vmem:[%s429 + $0x1af] sm:$0xff]
      %v619 = vld [vmem:[%s429 + $0x1c7] sm:$0xff]
      %v620 = vld [vmem:[%s429 + $0x1cf] sm:$0xff]
      %v621 = vld [vmem:[%s429 + $0x1e7] sm:$0xff]
      %v622 = vld [vmem:[%s429 + $0x1ef] sm:$0xff]
      %v623 = vld [vmem:[%s429 + $0x8] sm:$0xff]
      %v624 = vld [vmem:[%s429 + $0x10] sm:$0xff]
      %v625 = vld [vmem:[%s429 + $0x28] sm:$0xff]
      %v626 = vld [vmem:[%s429 + $0x30] sm:$0xff]
      %v627 = vld [vmem:[%s429 + $0x48] sm:$0xff]
      %v628 = vld [vmem:[%s429 + $0x50] sm:$0xff]
      %v629 = vld [vmem:[%s429 + $0x68] sm:$0xff]
      %v630 = vld [vmem:[%s429 + $0x70] sm:$0xff]
      %v631 = vld [vmem:[%s429 + $0x88] sm:$0xff]
      %v632 = vld [vmem:[%s429 + $0x90] sm:$0xff]
      %v633 = vld [vmem:[%s429 + $0xa8] sm:$0xff]
      %v634 = vld [vmem:[%s429 + $0xb0] sm:$0xff]
      %v635 = vld [vmem:[%s429 + $0xc8] sm:$0xff]
      %v636 = vld [vmem:[%s429 + $0xd0] sm:$0xff]
      %v637 = vld [vmem:[%s429 + $0xe8] sm:$0xff]
      %v638 = vld [vmem:[%s429 + $0xf0] sm:$0xff]
      %v639 = vld [vmem:[%s429 + $0x108] sm:$0xff]
      %v640 = vld [vmem:[%s429 + $0x110] sm:$0xff]
      %v641 = vld [vmem:[%s429 + $0x128] sm:$0xff]
      %v642 = vld [vmem:[%s429 + $0x130] sm:$0xff]
      %v643 = vld [vmem:[%s429 + $0x148] sm:$0xff]
      %v644 = vld [vmem:[%s429 + $0x150] sm:$0xff]
      %v645 = vld [vmem:[%s429 + $0x168] sm:$0xff]
      %v646 = vld [vmem:[%s429 + $0x170] sm:$0xff]
      %v647 = vld [vmem:[%s429 + $0x188] sm:$0xff]
      %v648 = vld [vmem:[%s429 + $0x190] sm:$0xff]
      %v649 = vld [vmem:[%s429 + $0x1a8] sm:$0xff]
      %v650 = vld [vmem:[%s429 + $0x1b0] sm:$0xff]
      %v651 = vld [vmem:[%s429 + $0x1c8] sm:$0xff]
      %v652 = vld [vmem:[%s429 + $0x1d0] sm:$0xff]
      %v653 = vld [vmem:[%s429 + $0x1e8] sm:$0xff]
      %v654 = vld [vmem:[%s429 + $0x1f0] sm:$0xff]
      %v655 = vld [vmem:[%s429 + $0x9] sm:$0xff]
      %v656 = vld [vmem:[%s429 + $0x11] sm:$0xff]
      %v657 = vld [vmem:[%s429 + $0x29] sm:$0xff]
      %v658 = vld [vmem:[%s429 + $0x31] sm:$0xff]
      %v659 = vld [vmem:[%s429 + $0x49] sm:$0xff]
      %v660 = vld [vmem:[%s429 + $0x51] sm:$0xff]
      %v661 = vld [vmem:[%s429 + $0x69] sm:$0xff]
      %v662 = vld [vmem:[%s429 + $0x71] sm:$0xff]
      %v663 = vld [vmem:[%s429 + $0x89] sm:$0xff]
      %v664 = vld [vmem:[%s429 + $0x91] sm:$0xff]
      %v665 = vld [vmem:[%s429 + $0xa9] sm:$0xff]
      %v666 = vld [vmem:[%s429 + $0xb1] sm:$0xff]
      %v667 = vld [vmem:[%s429 + $0xc9] sm:$0xff]
      %v668 = vld [vmem:[%s429 + $0xd1] sm:$0xff]
      %v669 = vld [vmem:[%s429 + $0xe9] sm:$0xff]
      %v670 = vld [vmem:[%s429 + $0xf1] sm:$0xff]
      %v671 = vld [vmem:[%s429 + $0x109] sm:$0xff]
      %v672 = vld [vmem:[%s429 + $0x111] sm:$0xff]
      %v673 = vld [vmem:[%s429 + $0x129] sm:$0xff]
      %v674 = vld [vmem:[%s429 + $0x131] sm:$0xff]
      %v675 = vld [vmem:[%s429 + $0x149] sm:$0xff]
      %v676 = vld [vmem:[%s429 + $0x151] sm:$0xff]
      %v677 = vld [vmem:[%s429 + $0x169] sm:$0xff]
      %v678 = vld [vmem:[%s429 + $0x171] sm:$0xff]
      %v679 = vld [vmem:[%s429 + $0x189] sm:$0xff]
      %v680 = vld [vmem:[%s429 + $0x191] sm:$0xff]
      %v681 = vld [vmem:[%s429 + $0x1a9] sm:$0xff]
      %v682 = vld [vmem:[%s429 + $0x1b1] sm:$0xff]
      %v683 = vld [vmem:[%s429 + $0x1c9] sm:$0xff]
      %v684 = vld [vmem:[%s429 + $0x1d1] sm:$0xff]
      %v685 = vld [vmem:[%s429 + $0x1e9] sm:$0xff]
      %v686 = vld [vmem:[%s429 + $0x1f1] sm:$0xff]
      %s687 = scalar_lea.vmem [#allocation2], 64
      %v688 = vld [vmem:[%s687 + $0x7] sm:$0xff]
      %v689 = vld [vmem:[%s687 + $0xf] sm:$0xff]
      %v690 = vld [vmem:[%s687 + $0x27] sm:$0xff]
      %v691 = vld [vmem:[%s687 + $0x2f] sm:$0xff]
      %v692 = vld [vmem:[%s687 + $0x47] sm:$0xff]
      %v693 = vld [vmem:[%s687 + $0x4f] sm:$0xff]
      %v694 = vld [vmem:[%s687 + $0x67] sm:$0xff]
      %v695 = vld [vmem:[%s687 + $0x6f] sm:$0xff]
      %v696 = vld [vmem:[%s687 + $0x87] sm:$0xff]
      %v697 = vld [vmem:[%s687 + $0x8f] sm:$0xff]
      %v698 = vld [vmem:[%s687 + $0xa7] sm:$0xff]
      %v699 = vld [vmem:[%s687 + $0xaf] sm:$0xff]
      %v700 = vld [vmem:[%s687 + $0xc7] sm:$0xff]
      %v701 = vld [vmem:[%s687 + $0xcf] sm:$0xff]
      %v702 = vld [vmem:[%s687 + $0xe7] sm:$0xff]
      %v703 = vld [vmem:[%s687 + $0xef] sm:$0xff]
      %v704 = vld [vmem:[%s687 + $0x107] sm:$0xff]
      %v705 = vld [vmem:[%s687 + $0x10f] sm:$0xff]
      %v706 = vld [vmem:[%s687 + $0x127] sm:$0xff]
      %v707 = vld [vmem:[%s687 + $0x12f] sm:$0xff]
      %v708 = vld [vmem:[%s687 + $0x147] sm:$0xff]
      %v709 = vld [vmem:[%s687 + $0x14f] sm:$0xff]
      %v710 = vld [vmem:[%s687 + $0x167] sm:$0xff]
      %v711 = vld [vmem:[%s687 + $0x16f] sm:$0xff]
      %v712 = vld [vmem:[%s687 + $0x187] sm:$0xff]
      %v713 = vld [vmem:[%s687 + $0x18f] sm:$0xff]
      %v714 = vld [vmem:[%s687 + $0x1a7] sm:$0xff]
      %v715 = vld [vmem:[%s687 + $0x1af] sm:$0xff]
      %v716 = vld [vmem:[%s687 + $0x1c7] sm:$0xff]
      %v717 = vld [vmem:[%s687 + $0x1cf] sm:$0xff]
      %v718 = vld [vmem:[%s687 + $0x1e7] sm:$0xff]
      %v719 = vld [vmem:[%s687 + $0x1ef] sm:$0xff]
      %v720 = vld [vmem:[%s687 + $0x8] sm:$0xff]
      %v721 = vld [vmem:[%s687 + $0x10] sm:$0xff]
      %v722 = vld [vmem:[%s687 + $0x28] sm:$0xff]
      %v723 = vld [vmem:[%s687 + $0x30] sm:$0xff]
      %v724 = vld [vmem:[%s687 + $0x48] sm:$0xff]
      %v725 = vld [vmem:[%s687 + $0x50] sm:$0xff]
      %v726 = vld [vmem:[%s687 + $0x68] sm:$0xff]
      %v727 = vld [vmem:[%s687 + $0x70] sm:$0xff]
      %v728 = vld [vmem:[%s687 + $0x88] sm:$0xff]
      %v729 = vld [vmem:[%s687 + $0x90] sm:$0xff]
      %v730 = vld [vmem:[%s687 + $0xa8] sm:$0xff]
      %v731 = vld [vmem:[%s687 + $0xb0] sm:$0xff]
      %v732 = vld [vmem:[%s687 + $0xc8] sm:$0xff]
      %v733 = vld [vmem:[%s687 + $0xd0] sm:$0xff]
      %v734 = vld [vmem:[%s687 + $0xe8] sm:$0xff]
      %v735 = vld [vmem:[%s687 + $0xf0] sm:$0xff]
      %v736 = vld [vmem:[%s687 + $0x108] sm:$0xff]
      %v737 = vld [vmem:[%s687 + $0x110] sm:$0xff]
      %v738 = vld [vmem:[%s687 + $0x128] sm:$0xff]
      %v739 = vld [vmem:[%s687 + $0x130] sm:$0xff]
      %v740 = vld [vmem:[%s687 + $0x148] sm:$0xff]
      %v741 = vld [vmem:[%s687 + $0x150] sm:$0xff]
      %v742 = vld [vmem:[%s687 + $0x168] sm:$0xff]
      %v743 = vld [vmem:[%s687 + $0x170] sm:$0xff]
      %v744 = vld [vmem:[%s687 + $0x188] sm:$0xff]
      %v745 = vld [vmem:[%s687 + $0x190] sm:$0xff]
      %v746 = vld [vmem:[%s687 + $0x1a8] sm:$0xff]
      %v747 = vld [vmem:[%s687 + $0x1b0] sm:$0xff]
      %v748 = vld [vmem:[%s687 + $0x1c8] sm:$0xff]
      %v749 = vld [vmem:[%s687 + $0x1d0] sm:$0xff]
      %v750 = vld [vmem:[%s687 + $0x1e8] sm:$0xff]
      %v751 = vld [vmem:[%s687 + $0x1f0] sm:$0xff]
      %v752 = vld [vmem:[%s687 + $0x9] sm:$0xff]
      %v753 = vld [vmem:[%s687 + $0x11] sm:$0xff]
      %v754 = vld [vmem:[%s687 + $0x29] sm:$0xff]
      %v755 = vld [vmem:[%s687 + $0x31] sm:$0xff]
      %v756 = vld [vmem:[%s687 + $0x49] sm:$0xff]
      %v757 = vld [vmem:[%s687 + $0x51] sm:$0xff]
      %v758 = vld [vmem:[%s687 + $0x69] sm:$0xff]
      %v759 = vld [vmem:[%s687 + $0x71] sm:$0xff]
      %v760 = vld [vmem:[%s687 + $0x89] sm:$0xff]
      %v761 = vld [vmem:[%s687 + $0x91] sm:$0xff]
      %v762 = vld [vmem:[%s687 + $0xa9] sm:$0xff]
      %v763 = vld [vmem:[%s687 + $0xb1] sm:$0xff]
      %v764 = vld [vmem:[%s687 + $0xc9] sm:$0xff]
      %v765 = vld [vmem:[%s687 + $0xd1] sm:$0xff]
      %v766 = vld [vmem:[%s687 + $0xe9] sm:$0xff]
      %v767 = vld [vmem:[%s687 + $0xf1] sm:$0xff]
      %v768 = vld [vmem:[%s687 + $0x109] sm:$0xff]
      %v769 = vld [vmem:[%s687 + $0x111] sm:$0xff]
      %v770 = vld [vmem:[%s687 + $0x129] sm:$0xff]
      %v771 = vld [vmem:[%s687 + $0x131] sm:$0xff]
      %v772 = vld [vmem:[%s687 + $0x149] sm:$0xff]
      %v773 = vld [vmem:[%s687 + $0x151] sm:$0xff]
      %v774 = vld [vmem:[%s687 + $0x169] sm:$0xff]
      %v775 = vld [vmem:[%s687 + $0x171] sm:$0xff]
      %v776 = vld [vmem:[%s687 + $0x189] sm:$0xff]
      %v777 = vld [vmem:[%s687 + $0x191] sm:$0xff]
      %v778 = vld [vmem:[%s687 + $0x1a9] sm:$0xff]
      %v779 = vld [vmem:[%s687 + $0x1b1] sm:$0xff]
      %v780 = vld [vmem:[%s687 + $0x1c9] sm:$0xff]
      %v781 = vld [vmem:[%s687 + $0x1d1] sm:$0xff]
      %v782 = vld [vmem:[%s687 + $0x1e9] sm:$0xff]
      %v783 = vld [vmem:[%s687 + $0x1f1] sm:$0xff]
      %816 = vrot.lane.b32.xlu0 %v527, 4
      %v817 = vpop.permute.xlu0 %816
      %818 = vrot.lane.b32.xlu0 %v528, 4
      %v819 = vpop.permute.xlu0 %818
      %820 = vrot.lane.b32.xlu0 %v529, 4
      %v821 = vpop.permute.xlu0 %820
      %822 = vrot.lane.b32.xlu0 %v530, 4
      %v823 = vpop.permute.xlu0 %822
      %824 = vrot.lane.b32.xlu0 %v531, 4
      %v825 = vpop.permute.xlu0 %824
      %826 = vrot.lane.b32.xlu0 %v532, 4
      %v827 = vpop.permute.xlu0 %826
      %828 = vrot.lane.b32.xlu0 %v533, 4
      %v829 = vpop.permute.xlu0 %828
      %830 = vrot.lane.b32.xlu0 %v534, 4
      %v831 = vpop.permute.xlu0 %830
      %832 = vrot.lane.b32.xlu0 %v535, 4
      %v833 = vpop.permute.xlu0 %832
      %834 = vrot.lane.b32.xlu0 %v536, 4
      %v835 = vpop.permute.xlu0 %834
      %836 = vrot.lane.b32.xlu0 %v537, 4
      %v837 = vpop.permute.xlu0 %836
      %838 = vrot.lane.b32.xlu0 %v538, 4
      %v839 = vpop.permute.xlu0 %838
      %840 = vrot.lane.b32.xlu0 %v539, 4
      %v841 = vpop.permute.xlu0 %840
      %842 = vrot.lane.b32.xlu0 %v540, 4
      %v843 = vpop.permute.xlu0 %842
      %844 = vrot.lane.b32.xlu0 %v541, 4
      %v845 = vpop.permute.xlu0 %844
      %846 = vrot.lane.b32.xlu0 %v542, 4
      %v847 = vpop.permute.xlu0 %846
      %848 = vrot.lane.b32.xlu0 %v543, 4
      %v849 = vpop.permute.xlu0 %848
      %850 = vrot.lane.b32.xlu0 %v544, 4
      %v851 = vpop.permute.xlu0 %850
      %852 = vrot.lane.b32.xlu0 %v545, 4
      %v853 = vpop.permute.xlu0 %852
      %854 = vrot.lane.b32.xlu0 %v546, 4
      %v855 = vpop.permute.xlu0 %854
      %856 = vrot.lane.b32.xlu0 %v547, 4
      %v857 = vpop.permute.xlu0 %856
      %858 = vrot.lane.b32.xlu0 %v548, 4
      %v859 = vpop.permute.xlu0 %858
      %860 = vrot.lane.b32.xlu0 %v549, 4
      %v861 = vpop.permute.xlu0 %860
      %862 = vrot.lane.b32.xlu0 %v550, 4
      %v863 = vpop.permute.xlu0 %862
      %864 = vrot.lane.b32.xlu0 %v551, 4
      %v865 = vpop.permute.xlu0 %864
      %866 = vrot.lane.b32.xlu0 %v552, 4
      %v867 = vpop.permute.xlu0 %866
      %868 = vrot.lane.b32.xlu0 %v553, 4
      %v869 = vpop.permute.xlu0 %868
      %870 = vrot.lane.b32.xlu0 %v554, 4
      %v871 = vpop.permute.xlu0 %870
      %872 = vrot.lane.b32.xlu0 %v555, 4
      %v873 = vpop.permute.xlu0 %872
      %874 = vrot.lane.b32.xlu0 %v556, 4
      %v875 = vpop.permute.xlu0 %874
      %876 = vrot.lane.b32.xlu0 %v557, 4
      %v877 = vpop.permute.xlu0 %876
      %878 = vrot.lane.b32.xlu0 %v558, 4
      %v879 = vpop.permute.xlu0 %878
      %944 = vrot.lane.b32.xlu0 %v559, 8
      %v945 = vpop.permute.xlu0 %944
      %946 = vrot.lane.b32.xlu0 %v560, 8
      %v947 = vpop.permute.xlu0 %946
      %948 = vrot.lane.b32.xlu0 %v561, 8
      %v949 = vpop.permute.xlu0 %948
      %950 = vrot.lane.b32.xlu0 %v562, 8
      %v951 = vpop.permute.xlu0 %950
      %952 = vrot.lane.b32.xlu0 %v563, 8
      %v953 = vpop.permute.xlu0 %952
      %954 = vrot.lane.b32.xlu0 %v564, 8
      %v955 = vpop.permute.xlu0 %954
      %956 = vrot.lane.b32.xlu0 %v565, 8
      %v957 = vpop.permute.xlu0 %956
      %958 = vrot.lane.b32.xlu0 %v566, 8
      %v959 = vpop.permute.xlu0 %958
      %960 = vrot.lane.b32.xlu0 %v567, 8
      %v961 = vpop.permute.xlu0 %960
      %962 = vrot.lane.b32.xlu0 %v568, 8
      %v963 = vpop.permute.xlu0 %962
      %964 = vrot.lane.b32.xlu0 %v569, 8
      %v965 = vpop.permute.xlu0 %964
      %966 = vrot.lane.b32.xlu0 %v570, 8
      %v967 = vpop.permute.xlu0 %966
      %968 = vrot.lane.b32.xlu0 %v571, 8
      %v969 = vpop.permute.xlu0 %968
      %970 = vrot.lane.b32.xlu0 %v572, 8
      %v971 = vpop.permute.xlu0 %970
      %972 = vrot.lane.b32.xlu0 %v573, 8
      %v973 = vpop.permute.xlu0 %972
      %974 = vrot.lane.b32.xlu0 %v574, 8
      %v975 = vpop.permute.xlu0 %974
      %976 = vrot.lane.b32.xlu0 %v575, 8
      %v977 = vpop.permute.xlu0 %976
      %978 = vrot.lane.b32.xlu0 %v576, 8
      %v979 = vpop.permute.xlu0 %978
      %980 = vrot.lane.b32.xlu0 %v577, 8
      %v981 = vpop.permute.xlu0 %980
      %982 = vrot.lane.b32.xlu0 %v578, 8
      %v983 = vpop.permute.xlu0 %982
      %984 = vrot.lane.b32.xlu0 %v579, 8
      %v985 = vpop.permute.xlu0 %984
      %986 = vrot.lane.b32.xlu0 %v580, 8
      %v987 = vpop.permute.xlu0 %986
      %988 = vrot.lane.b32.xlu0 %v581, 8
      %v989 = vpop.permute.xlu0 %988
      %990 = vrot.lane.b32.xlu0 %v582, 8
      %v991 = vpop.permute.xlu0 %990
      %992 = vrot.lane.b32.xlu0 %v583, 8
      %v993 = vpop.permute.xlu0 %992
      %994 = vrot.lane.b32.xlu0 %v584, 8
      %v995 = vpop.permute.xlu0 %994
      %996 = vrot.lane.b32.xlu0 %v585, 8
      %v997 = vpop.permute.xlu0 %996
      %998 = vrot.lane.b32.xlu0 %v586, 8
      %v999 = vpop.permute.xlu0 %998
      %1000 = vrot.lane.b32.xlu0 %v587, 8
      %v1001 = vpop.permute.xlu0 %1000
      %1002 = vrot.lane.b32.xlu0 %v588, 8
      %v1003 = vpop.permute.xlu0 %1002
      %1004 = vrot.lane.b32.xlu0 %v589, 8
      %v1005 = vpop.permute.xlu0 %1004
      %1006 = vrot.lane.b32.xlu0 %v590, 8
      %v1007 = vpop.permute.xlu0 %1006
      %1072 = vrot.lane.b32.xlu0 %v591, 12
      %v1073 = vpop.permute.xlu0 %1072
      %1074 = vrot.lane.b32.xlu0 %v592, 12
      %v1075 = vpop.permute.xlu0 %1074
      %1076 = vrot.lane.b32.xlu0 %v593, 12
      %v1077 = vpop.permute.xlu0 %1076
      %1078 = vrot.lane.b32.xlu0 %v594, 12
      %v1079 = vpop.permute.xlu0 %1078
      %1080 = vrot.lane.b32.xlu0 %v595, 12
      %v1081 = vpop.permute.xlu0 %1080
      %1082 = vrot.lane.b32.xlu0 %v596, 12
      %v1083 = vpop.permute.xlu0 %1082
      %1084 = vrot.lane.b32.xlu0 %v597, 12
      %v1085 = vpop.permute.xlu0 %1084
      %1086 = vrot.lane.b32.xlu0 %v598, 12
      %v1087 = vpop.permute.xlu0 %1086
      %1088 = vrot.lane.b32.xlu0 %v599, 12
      %v1089 = vpop.permute.xlu0 %1088
      %1090 = vrot.lane.b32.xlu0 %v600, 12
      %v1091 = vpop.permute.xlu0 %1090
      %1092 = vrot.lane.b32.xlu0 %v601, 12
      %v1093 = vpop.permute.xlu0 %1092
      %1094 = vrot.lane.b32.xlu0 %v602, 12
      %v1095 = vpop.permute.xlu0 %1094
      %1096 = vrot.lane.b32.xlu0 %v603, 12
      %v1097 = vpop.permute.xlu0 %1096
      %1098 = vrot.lane.b32.xlu0 %v604, 12
      %v1099 = vpop.permute.xlu0 %1098
      %1100 = vrot.lane.b32.xlu0 %v605, 12
      %v1101 = vpop.permute.xlu0 %1100
      %1102 = vrot.lane.b32.xlu0 %v606, 12
      %v1103 = vpop.permute.xlu0 %1102
      %1104 = vrot.lane.b32.xlu0 %v607, 12
      %v1105 = vpop.permute.xlu0 %1104
      %1106 = vrot.lane.b32.xlu0 %v608, 12
      %v1107 = vpop.permute.xlu0 %1106
      %1108 = vrot.lane.b32.xlu0 %v609, 12
      %v1109 = vpop.permute.xlu0 %1108
      %1110 = vrot.lane.b32.xlu0 %v610, 12
      %v1111 = vpop.permute.xlu0 %1110
      %1112 = vrot.lane.b32.xlu0 %v611, 12
      %v1113 = vpop.permute.xlu0 %1112
      %1114 = vrot.lane.b32.xlu0 %v612, 12
      %v1115 = vpop.permute.xlu0 %1114
      %1116 = vrot.lane.b32.xlu0 %v613, 12
      %v1117 = vpop.permute.xlu0 %1116
      %1118 = vrot.lane.b32.xlu0 %v614, 12
      %v1119 = vpop.permute.xlu0 %1118
      %1120 = vrot.lane.b32.xlu0 %v615, 12
      %v1121 = vpop.permute.xlu0 %1120
      %1122 = vrot.lane.b32.xlu0 %v616, 12
      %v1123 = vpop.permute.xlu0 %1122
      %1124 = vrot.lane.b32.xlu0 %v617, 12
      %v1125 = vpop.permute.xlu0 %1124
      %1126 = vrot.lane.b32.xlu0 %v618, 12
      %v1127 = vpop.permute.xlu0 %1126
      %1128 = vrot.lane.b32.xlu0 %v619, 12
      %v1129 = vpop.permute.xlu0 %1128
      %1130 = vrot.lane.b32.xlu0 %v620, 12
      %v1131 = vpop.permute.xlu0 %1130
      %1132 = vrot.lane.b32.xlu0 %v621, 12
      %v1133 = vpop.permute.xlu0 %1132
      %1134 = vrot.lane.b32.xlu0 %v622, 12
      %v1135 = vpop.permute.xlu0 %1134
      %1200 = vrot.lane.b32.xlu0 %v623, 16
      %v1201 = vpop.permute.xlu0 %1200
      %1202 = vrot.lane.b32.xlu0 %v624, 16
      %v1203 = vpop.permute.xlu0 %1202
      %1204 = vrot.lane.b32.xlu0 %v625, 16
      %v1205 = vpop.permute.xlu0 %1204
      %1206 = vrot.lane.b32.xlu0 %v626, 16
      %v1207 = vpop.permute.xlu0 %1206
      %1208 = vrot.lane.b32.xlu0 %v627, 16
      %v1209 = vpop.permute.xlu0 %1208
      %1210 = vrot.lane.b32.xlu0 %v628, 16
      %v1211 = vpop.permute.xlu0 %1210
      %1212 = vrot.lane.b32.xlu0 %v629, 16
      %v1213 = vpop.permute.xlu0 %1212
      %1214 = vrot.lane.b32.xlu0 %v630, 16
      %v1215 = vpop.permute.xlu0 %1214
      %1216 = vrot.lane.b32.xlu0 %v631, 16
      %v1217 = vpop.permute.xlu0 %1216
      %1218 = vrot.lane.b32.xlu0 %v632, 16
      %v1219 = vpop.permute.xlu0 %1218
      %1220 = vrot.lane.b32.xlu0 %v633, 16
      %v1221 = vpop.permute.xlu0 %1220
      %1222 = vrot.lane.b32.xlu0 %v634, 16
      %v1223 = vpop.permute.xlu0 %1222
      %1224 = vrot.lane.b32.xlu0 %v635, 16
      %v1225 = vpop.permute.xlu0 %1224
      %1226 = vrot.lane.b32.xlu0 %v636, 16
      %v1227 = vpop.permute.xlu0 %1226
      %1228 = vrot.lane.b32.xlu0 %v637, 16
      %v1229 = vpop.permute.xlu0 %1228
      %1230 = vrot.lane.b32.xlu0 %v638, 16
      %v1231 = vpop.permute.xlu0 %1230
      %1232 = vrot.lane.b32.xlu0 %v639, 16
      %v1233 = vpop.permute.xlu0 %1232
      %1234 = vrot.lane.b32.xlu0 %v640, 16
      %v1235 = vpop.permute.xlu0 %1234
      %1236 = vrot.lane.b32.xlu0 %v641, 16
      %v1237 = vpop.permute.xlu0 %1236
      %1238 = vrot.lane.b32.xlu0 %v642, 16
      %v1239 = vpop.permute.xlu0 %1238
      %1240 = vrot.lane.b32.xlu0 %v643, 16
      %v1241 = vpop.permute.xlu0 %1240
      %1242 = vrot.lane.b32.xlu0 %v644, 16
      %v1243 = vpop.permute.xlu0 %1242
      %1244 = vrot.lane.b32.xlu0 %v645, 16
      %v1245 = vpop.permute.xlu0 %1244
      %1246 = vrot.lane.b32.xlu0 %v646, 16
      %v1247 = vpop.permute.xlu0 %1246
      %1248 = vrot.lane.b32.xlu0 %v647, 16
      %v1249 = vpop.permute.xlu0 %1248
      %1250 = vrot.lane.b32.xlu0 %v648, 16
      %v1251 = vpop.permute.xlu0 %1250
      %1252 = vrot.lane.b32.xlu0 %v649, 16
      %v1253 = vpop.permute.xlu0 %1252
      %1254 = vrot.lane.b32.xlu0 %v650, 16
      %v1255 = vpop.permute.xlu0 %1254
      %1256 = vrot.lane.b32.xlu0 %v651, 16
      %v1257 = vpop.permute.xlu0 %1256
      %1258 = vrot.lane.b32.xlu0 %v652, 16
      %v1259 = vpop.permute.xlu0 %1258
      %1260 = vrot.lane.b32.xlu0 %v653, 16
      %v1261 = vpop.permute.xlu0 %1260
      %1262 = vrot.lane.b32.xlu0 %v654, 16
      %v1263 = vpop.permute.xlu0 %1262
      %1328 = vrot.lane.b32.xlu0 %v655, 20
      %v1329 = vpop.permute.xlu0 %1328
      %1330 = vrot.lane.b32.xlu0 %v656, 20
      %v1331 = vpop.permute.xlu0 %1330
      %1332 = vrot.lane.b32.xlu0 %v657, 20
      %v1333 = vpop.permute.xlu0 %1332
      %1334 = vrot.lane.b32.xlu0 %v658, 20
      %v1335 = vpop.permute.xlu0 %1334
      %1336 = vrot.lane.b32.xlu0 %v659, 20
      %v1337 = vpop.permute.xlu0 %1336
      %1338 = vrot.lane.b32.xlu0 %v660, 20
      %v1339 = vpop.permute.xlu0 %1338
      %1340 = vrot.lane.b32.xlu0 %v661, 20
      %v1341 = vpop.permute.xlu0 %1340
      %1342 = vrot.lane.b32.xlu0 %v662, 20
      %v1343 = vpop.permute.xlu0 %1342
      %1344 = vrot.lane.b32.xlu0 %v663, 20
      %v1345 = vpop.permute.xlu0 %1344
      %1346 = vrot.lane.b32.xlu0 %v664, 20
      %v1347 = vpop.permute.xlu0 %1346
      %1348 = vrot.lane.b32.xlu0 %v665, 20
      %v1349 = vpop.permute.xlu0 %1348
      %1350 = vrot.lane.b32.xlu0 %v666, 20
      %v1351 = vpop.permute.xlu0 %1350
      %1352 = vrot.lane.b32.xlu0 %v667, 20
      %v1353 = vpop.permute.xlu0 %1352
      %1354 = vrot.lane.b32.xlu0 %v668, 20
      %v1355 = vpop.permute.xlu0 %1354
      %1356 = vrot.lane.b32.xlu0 %v669, 20
      %v1357 = vpop.permute.xlu0 %1356
      %1358 = vrot.lane.b32.xlu0 %v670, 20
      %v1359 = vpop.permute.xlu0 %1358
      %1360 = vrot.lane.b32.xlu0 %v671, 20
      %v1361 = vpop.permute.xlu0 %1360
      %1362 = vrot.lane.b32.xlu0 %v672, 20
      %v1363 = vpop.permute.xlu0 %1362
      %1364 = vrot.lane.b32.xlu0 %v673, 20
      %v1365 = vpop.permute.xlu0 %1364
      %1366 = vrot.lane.b32.xlu0 %v674, 20
      %v1367 = vpop.permute.xlu0 %1366
      %1368 = vrot.lane.b32.xlu0 %v675, 20
      %v1369 = vpop.permute.xlu0 %1368
      %1370 = vrot.lane.b32.xlu0 %v676, 20
      %v1371 = vpop.permute.xlu0 %1370
      %1372 = vrot.lane.b32.xlu0 %v677, 20
      %v1373 = vpop.permute.xlu0 %1372
      %1374 = vrot.lane.b32.xlu0 %v678, 20
      %v1375 = vpop.permute.xlu0 %1374
      %1376 = vrot.lane.b32.xlu0 %v679, 20
      %v1377 = vpop.permute.xlu0 %1376
      %1378 = vrot.lane.b32.xlu0 %v680, 20
      %v1379 = vpop.permute.xlu0 %1378
      %1380 = vrot.lane.b32.xlu0 %v681, 20
      %v1381 = vpop.permute.xlu0 %1380
      %1382 = vrot.lane.b32.xlu0 %v682, 20
      %v1383 = vpop.permute.xlu0 %1382
      %1384 = vrot.lane.b32.xlu0 %v683, 20
      %v1385 = vpop.permute.xlu0 %1384
      %1386 = vrot.lane.b32.xlu0 %v684, 20
      %v1387 = vpop.permute.xlu0 %1386
      %1388 = vrot.lane.b32.xlu0 %v685, 20
      %v1389 = vpop.permute.xlu0 %1388
      %1390 = vrot.lane.b32.xlu0 %v686, 20
      %v1391 = vpop.permute.xlu0 %1390
      %1456 = vrot.lane.b32.xlu0 %v688, 24
      %v1457 = vpop.permute.xlu0 %1456
      %1458 = vrot.lane.b32.xlu0 %v689, 24
      %v1459 = vpop.permute.xlu0 %1458
      %1460 = vrot.lane.b32.xlu0 %v690, 24
      %v1461 = vpop.permute.xlu0 %1460
      %1462 = vrot.lane.b32.xlu0 %v691, 24
      %v1463 = vpop.permute.xlu0 %1462
      %1464 = vrot.lane.b32.xlu0 %v692, 24
      %v1465 = vpop.permute.xlu0 %1464
      %1466 = vrot.lane.b32.xlu0 %v693, 24
      %v1467 = vpop.permute.xlu0 %1466
      %1468 = vrot.lane.b32.xlu0 %v694, 24
      %v1469 = vpop.permute.xlu0 %1468
      %1470 = vrot.lane.b32.xlu0 %v695, 24
      %v1471 = vpop.permute.xlu0 %1470
      %1472 = vrot.lane.b32.xlu0 %v696, 24
      %v1473 = vpop.permute.xlu0 %1472
      %1474 = vrot.lane.b32.xlu0 %v697, 24
      %v1475 = vpop.permute.xlu0 %1474
      %1476 = vrot.lane.b32.xlu0 %v698, 24
      %v1477 = vpop.permute.xlu0 %1476
      %1478 = vrot.lane.b32.xlu0 %v699, 24
      %v1479 = vpop.permute.xlu0 %1478
      %1480 = vrot.lane.b32.xlu0 %v700, 24
      %v1481 = vpop.permute.xlu0 %1480
      %1482 = vrot.lane.b32.xlu0 %v701, 24
      %v1483 = vpop.permute.xlu0 %1482
      %1484 = vrot.lane.b32.xlu0 %v702, 24
      %v1485 = vpop.permute.xlu0 %1484
      %1486 = vrot.lane.b32.xlu0 %v703, 24
      %v1487 = vpop.permute.xlu0 %1486
      %1488 = vrot.lane.b32.xlu0 %v704, 24
      %v1489 = vpop.permute.xlu0 %1488
      %1490 = vrot.lane.b32.xlu0 %v705, 24
      %v1491 = vpop.permute.xlu0 %1490
      %1492 = vrot.lane.b32.xlu0 %v706, 24
      %v1493 = vpop.permute.xlu0 %1492
      %1494 = vrot.lane.b32.xlu0 %v707, 24
      %v1495 = vpop.permute.xlu0 %1494
      %1496 = vrot.lane.b32.xlu0 %v708, 24
      %v1497 = vpop.permute.xlu0 %1496
      %1498 = vrot.lane.b32.xlu0 %v709, 24
      %v1499 = vpop.permute.xlu0 %1498
      %1500 = vrot.lane.b32.xlu0 %v710, 24
      %v1501 = vpop.permute.xlu0 %1500
      %1502 = vrot.lane.b32.xlu0 %v711, 24
      %v1503 = vpop.permute.xlu0 %1502
      %1504 = vrot.lane.b32.xlu0 %v712, 24
      %v1505 = vpop.permute.xlu0 %1504
      %1506 = vrot.lane.b32.xlu0 %v713, 24
      %v1507 = vpop.permute.xlu0 %1506
      %1508 = vrot.lane.b32.xlu0 %v714, 24
      %v1509 = vpop.permute.xlu0 %1508
      %1510 = vrot.lane.b32.xlu0 %v715, 24
      %v1511 = vpop.permute.xlu0 %1510
      %1512 = vrot.lane.b32.xlu0 %v716, 24
      %v1513 = vpop.permute.xlu0 %1512
      %1514 = vrot.lane.b32.xlu0 %v717, 24
      %v1515 = vpop.permute.xlu0 %1514
      %1516 = vrot.lane.b32.xlu0 %v718, 24
      %v1517 = vpop.permute.xlu0 %1516
      %1518 = vrot.lane.b32.xlu0 %v719, 24
      %v1519 = vpop.permute.xlu0 %1518
      %1584 = vrot.lane.b32.xlu0 %v720, 28
      %v1585 = vpop.permute.xlu0 %1584
      %1586 = vrot.lane.b32.xlu0 %v721, 28
      %v1587 = vpop.permute.xlu0 %1586
      %1588 = vrot.lane.b32.xlu0 %v722, 28
      %v1589 = vpop.permute.xlu0 %1588
      %1590 = vrot.lane.b32.xlu0 %v723, 28
      %v1591 = vpop.permute.xlu0 %1590
      %1592 = vrot.lane.b32.xlu0 %v724, 28
      %v1593 = vpop.permute.xlu0 %1592
      %1594 = vrot.lane.b32.xlu0 %v725, 28
      %v1595 = vpop.permute.xlu0 %1594
      %1596 = vrot.lane.b32.xlu0 %v726, 28
      %v1597 = vpop.permute.xlu0 %1596
      %1598 = vrot.lane.b32.xlu0 %v727, 28
      %v1599 = vpop.permute.xlu0 %1598
      %1600 = vrot.lane.b32.xlu0 %v728, 28
      %v1601 = vpop.permute.xlu0 %1600
      %1602 = vrot.lane.b32.xlu0 %v729, 28
      %v1603 = vpop.permute.xlu0 %1602
      %1604 = vrot.lane.b32.xlu0 %v730, 28
      %v1605 = vpop.permute.xlu0 %1604
      %1606 = vrot.lane.b32.xlu0 %v731, 28
      %v1607 = vpop.permute.xlu0 %1606
      %1608 = vrot.lane.b32.xlu0 %v732, 28
      %v1609 = vpop.permute.xlu0 %1608
      %1610 = vrot.lane.b32.xlu0 %v733, 28
      %v1611 = vpop.permute.xlu0 %1610
      %1612 = vrot.lane.b32.xlu0 %v734, 28
      %v1613 = vpop.permute.xlu0 %1612
      %1614 = vrot.lane.b32.xlu0 %v735, 28
      %v1615 = vpop.permute.xlu0 %1614
      %1616 = vrot.lane.b32.xlu0 %v736, 28
      %v1617 = vpop.permute.xlu0 %1616
      %1618 = vrot.lane.b32.xlu0 %v737, 28
      %v1619 = vpop.permute.xlu0 %1618
      %1620 = vrot.lane.b32.xlu0 %v738, 28
      %v1621 = vpop.permute.xlu0 %1620
      %1622 = vrot.lane.b32.xlu0 %v739, 28
      %v1623 = vpop.permute.xlu0 %1622
      %1624 = vrot.lane.b32.xlu0 %v740, 28
      %v1625 = vpop.permute.xlu0 %1624
      %1626 = vrot.lane.b32.xlu0 %v741, 28
      %v1627 = vpop.permute.xlu0 %1626
      %1628 = vrot.lane.b32.xlu0 %v742, 28
      %v1629 = vpop.permute.xlu0 %1628
      %1630 = vrot.lane.b32.xlu0 %v743, 28
      %v1631 = vpop.permute.xlu0 %1630
      %1632 = vrot.lane.b32.xlu0 %v744, 28
      %v1633 = vpop.permute.xlu0 %1632
      %1634 = vrot.lane.b32.xlu0 %v745, 28
      %v1635 = vpop.permute.xlu0 %1634
      %1636 = vrot.lane.b32.xlu0 %v746, 28
      %v1637 = vpop.permute.xlu0 %1636
      %1638 = vrot.lane.b32.xlu0 %v747, 28
      %v1639 = vpop.permute.xlu0 %1638
      %1640 = vrot.lane.b32.xlu0 %v748, 28
      %v1641 = vpop.permute.xlu0 %1640
      %1642 = vrot.lane.b32.xlu0 %v749, 28
      %v1643 = vpop.permute.xlu0 %1642
      %1644 = vrot.lane.b32.xlu0 %v750, 28
      %v1645 = vpop.permute.xlu0 %1644
      %1646 = vrot.lane.b32.xlu0 %v751, 28
      %v1647 = vpop.permute.xlu0 %1646
      %1712 = vrot.lane.b32.xlu0 %v752, 32
      %v1713 = vpop.permute.xlu0 %1712
      %1714 = vrot.lane.b32.xlu0 %v753, 32
      %v1715 = vpop.permute.xlu0 %1714
      %1716 = vrot.lane.b32.xlu0 %v754, 32
      %v1717 = vpop.permute.xlu0 %1716
      %1718 = vrot.lane.b32.xlu0 %v755, 32
      %v1719 = vpop.permute.xlu0 %1718
      %1720 = vrot.lane.b32.xlu0 %v756, 32
      %v1721 = vpop.permute.xlu0 %1720
      %1722 = vrot.lane.b32.xlu0 %v757, 32
      %v1723 = vpop.permute.xlu0 %1722
      %1724 = vrot.lane.b32.xlu0 %v758, 32
      %v1725 = vpop.permute.xlu0 %1724
      %1726 = vrot.lane.b32.xlu0 %v759, 32
      %v1727 = vpop.permute.xlu0 %1726
      %1728 = vrot.lane.b32.xlu0 %v760, 32
      %v1729 = vpop.permute.xlu0 %1728
      %1730 = vrot.lane.b32.xlu0 %v761, 32
      %v1731 = vpop.permute.xlu0 %1730
      %1732 = vrot.lane.b32.xlu0 %v762, 32
      %v1733 = vpop.permute.xlu0 %1732
      %1734 = vrot.lane.b32.xlu0 %v763, 32
      %v1735 = vpop.permute.xlu0 %1734
      %1736 = vrot.lane.b32.xlu0 %v764, 32
      %v1737 = vpop.permute.xlu0 %1736
      %1738 = vrot.lane.b32.xlu0 %v765, 32
      %v1739 = vpop.permute.xlu0 %1738
      %1740 = vrot.lane.b32.xlu0 %v766, 32
      %v1741 = vpop.permute.xlu0 %1740
      %1742 = vrot.lane.b32.xlu0 %v767, 32
      %v1743 = vpop.permute.xlu0 %1742
      %1744 = vrot.lane.b32.xlu0 %v768, 32
      %v1745 = vpop.permute.xlu0 %1744
      %1746 = vrot.lane.b32.xlu0 %v769, 32
      %v1747 = vpop.permute.xlu0 %1746
      %1748 = vrot.lane.b32.xlu0 %v770, 32
      %v1749 = vpop.permute.xlu0 %1748
      %1750 = vrot.lane.b32.xlu0 %v771, 32
      %v1751 = vpop.permute.xlu0 %1750
      %1752 = vrot.lane.b32.xlu0 %v772, 32
      %v1753 = vpop.permute.xlu0 %1752
      %1754 = vrot.lane.b32.xlu0 %v773, 32
      %v1755 = vpop.permute.xlu0 %1754
      %1756 = vrot.lane.b32.xlu0 %v774, 32
      %v1757 = vpop.permute.xlu0 %1756
      %1758 = vrot.lane.b32.xlu0 %v775, 32
      %v1759 = vpop.permute.xlu0 %1758
      %1760 = vrot.lane.b32.xlu0 %v776, 32
      %v1761 = vpop.permute.xlu0 %1760
      %1762 = vrot.lane.b32.xlu0 %v777, 32
      %v1763 = vpop.permute.xlu0 %1762
      %1764 = vrot.lane.b32.xlu0 %v778, 32
      %v1765 = vpop.permute.xlu0 %1764
      %1766 = vrot.lane.b32.xlu0 %v779, 32
      %v1767 = vpop.permute.xlu0 %1766
      %1768 = vrot.lane.b32.xlu0 %v780, 32
      %v1769 = vpop.permute.xlu0 %1768
      %1770 = vrot.lane.b32.xlu0 %v781, 32
      %v1771 = vpop.permute.xlu0 %1770
      %1772 = vrot.lane.b32.xlu0 %v782, 32
      %v1773 = vpop.permute.xlu0 %1772
      %1774 = vrot.lane.b32.xlu0 %v783, 32
      %v1775 = vpop.permute.xlu0 %1774
      %v1808 = vsel %vm419, %v495, %v817
      %v1809 = vsel %vm419, %v496, %v819
      %v1810 = vsel %vm419, %v497, %v821
      %v1811 = vsel %vm419, %v498, %v823
      %v1812 = vsel %vm419, %v499, %v825
      %v1813 = vsel %vm419, %v500, %v827
      %v1814 = vsel %vm419, %v501, %v829
      %v1815 = vsel %vm419, %v502, %v831
      %v1816 = vsel %vm419, %v503, %v833
      %v1817 = vsel %vm419, %v504, %v835
      %v1818 = vsel %vm419, %v505, %v837
      %v1819 = vsel %vm419, %v506, %v839
      %v1820 = vsel %vm419, %v507, %v841
      %v1821 = vsel %vm419, %v508, %v843
      %v1822 = vsel %vm419, %v509, %v845
      %v1823 = vsel %vm419, %v510, %v847
      %v1824 = vsel %vm419, %v511, %v849
      %v1825 = vsel %vm419, %v512, %v851
      %v1826 = vsel %vm419, %v513, %v853
      %v1827 = vsel %vm419, %v514, %v855
      %v1828 = vsel %vm419, %v515, %v857
      %v1829 = vsel %vm419, %v516, %v859
      %v1830 = vsel %vm419, %v517, %v861
      %v1831 = vsel %vm419, %v518, %v863
      %v1832 = vsel %vm419, %v519, %v865
      %v1833 = vsel %vm419, %v520, %v867
      %v1834 = vsel %vm419, %v521, %v869
      %v1835 = vsel %vm419, %v522, %v871
      %v1836 = vsel %vm419, %v523, %v873
      %v1837 = vsel %vm419, %v524, %v875
      %v1838 = vsel %vm419, %v525, %v877
      %v1839 = vsel %vm419, %v526, %v879
      %vm1840 = vcmask 64512
      %v1841 = vsel %vm1840, %v1808, %v945
      %v1842 = vsel %vm1840, %v1809, %v947
      %v1843 = vsel %vm1840, %v1810, %v949
      %v1844 = vsel %vm1840, %v1811, %v951
      %v1845 = vsel %vm1840, %v1812, %v953
      %v1846 = vsel %vm1840, %v1813, %v955
      %v1847 = vsel %vm1840, %v1814, %v957
      %v1848 = vsel %vm1840, %v1815, %v959
      %v1849 = vsel %vm1840, %v1816, %v961
      %v1850 = vsel %vm1840, %v1817, %v963
      %v1851 = vsel %vm1840, %v1818, %v965
      %v1852 = vsel %vm1840, %v1819, %v967
      %v1853 = vsel %vm1840, %v1820, %v969
      %v1854 = vsel %vm1840, %v1821, %v971
      %v1855 = vsel %vm1840, %v1822, %v973
      %v1856 = vsel %vm1840, %v1823, %v975
      %v1857 = vsel %vm1840, %v1824, %v977
      %v1858 = vsel %vm1840, %v1825, %v979
      %v1859 = vsel %vm1840, %v1826, %v981
      %v1860 = vsel %vm1840, %v1827, %v983
      %v1861 = vsel %vm1840, %v1828, %v985
      %v1862 = vsel %vm1840, %v1829, %v987
      %v1863 = vsel %vm1840, %v1830, %v989
      %v1864 = vsel %vm1840, %v1831, %v991
      %v1865 = vsel %vm1840, %v1832, %v993
      %v1866 = vsel %vm1840, %v1833, %v995
      %v1867 = vsel %vm1840, %v1834, %v997
      %v1868 = vsel %vm1840, %v1835, %v999
      %v1869 = vsel %vm1840, %v1836, %v1001
      %v1870 = vsel %vm1840, %v1837, %v1003
      %v1871 = vsel %vm1840, %v1838, %v1005
      %v1872 = vsel %vm1840, %v1839, %v1007
      %vm1873 = vcmask 97280
      %v1874 = vsel %vm1873, %v1841, %v1073
      %v1875 = vsel %vm1873, %v1842, %v1075
      %v1876 = vsel %vm1873, %v1843, %v1077
      %v1877 = vsel %vm1873, %v1844, %v1079
      %v1878 = vsel %vm1873, %v1845, %v1081
      %v1879 = vsel %vm1873, %v1846, %v1083
      %v1880 = vsel %vm1873, %v1847, %v1085
      %v1881 = vsel %vm1873, %v1848, %v1087
      %v1882 = vsel %vm1873, %v1849, %v1089
      %v1883 = vsel %vm1873, %v1850, %v1091
      %v1884 = vsel %vm1873, %v1851, %v1093
      %v1885 = vsel %vm1873, %v1852, %v1095
      %v1886 = vsel %vm1873, %v1853, %v1097
      %v1887 = vsel %vm1873, %v1854, %v1099
      %v1888 = vsel %vm1873, %v1855, %v1101
      %v1889 = vsel %vm1873, %v1856, %v1103
      %v1890 = vsel %vm1873, %v1857, %v1105
      %v1891 = vsel %vm1873, %v1858, %v1107
      %v1892 = vsel %vm1873, %v1859, %v1109
      %v1893 = vsel %vm1873, %v1860, %v1111
      %v1894 = vsel %vm1873, %v1861, %v1113
      %v1895 = vsel %vm1873, %v1862, %v1115
      %v1896 = vsel %vm1873, %v1863, %v1117
      %v1897 = vsel %vm1873, %v1864, %v1119
      %v1898 = vsel %vm1873, %v1865, %v1121
      %v1899 = vsel %vm1873, %v1866, %v1123
      %v1900 = vsel %vm1873, %v1867, %v1125
      %v1901 = vsel %vm1873, %v1868, %v1127
      %v1902 = vsel %vm1873, %v1869, %v1129
      %v1903 = vsel %vm1873, %v1870, %v1131
      %v1904 = vsel %vm1873, %v1871, %v1133
      %v1905 = vsel %vm1873, %v1872, %v1135
      %vm1906 = vcmask 130048
      %v1907 = vsel %vm1906, %v1874, %v1201
      %v1908 = vsel %vm1906, %v1875, %v1203
      %v1909 = vsel %vm1906, %v1876, %v1205
      %v1910 = vsel %vm1906, %v1877, %v1207
      %v1911 = vsel %vm1906, %v1878, %v1209
      %v1912 = vsel %vm1906, %v1879, %v1211
      %v1913 = vsel %vm1906, %v1880, %v1213
      %v1914 = vsel %vm1906, %v1881, %v1215
      %v1915 = vsel %vm1906, %v1882, %v1217
      %v1916 = vsel %vm1906, %v1883, %v1219
      %v1917 = vsel %vm1906, %v1884, %v1221
      %v1918 = vsel %vm1906, %v1885, %v1223
      %v1919 = vsel %vm1906, %v1886, %v1225
      %v1920 = vsel %vm1906, %v1887, %v1227
      %v1921 = vsel %vm1906, %v1888, %v1229
      %v1922 = vsel %vm1906, %v1889, %v1231
      %v1923 = vsel %vm1906, %v1890, %v1233
      %v1924 = vsel %vm1906, %v1891, %v1235
      %v1925 = vsel %vm1906, %v1892, %v1237
      %v1926 = vsel %vm1906, %v1893, %v1239
      %v1927 = vsel %vm1906, %v1894, %v1241
      %v1928 = vsel %vm1906, %v1895, %v1243
      %v1929 = vsel %vm1906, %v1896, %v1245
      %v1930 = vsel %vm1906, %v1897, %v1247
      %v1931 = vsel %vm1906, %v1898, %v1249
      %v1932 = vsel %vm1906, %v1899, %v1251
      %v1933 = vsel %vm1906, %v1900, %v1253
      %v1934 = vsel %vm1906, %v1901, %v1255
      %v1935 = vsel %vm1906, %v1902, %v1257
      %v1936 = vsel %vm1906, %v1903, %v1259
      %v1937 = vsel %vm1906, %v1904, %v1261
      %v1938 = vsel %vm1906, %v1905, %v1263
      %vm1939 = vcmask 162816
      %v1940 = vsel %vm1939, %v1907, %v1329
      %v1941 = vsel %vm1939, %v1908, %v1331
      %v1942 = vsel %vm1939, %v1909, %v1333
      %v1943 = vsel %vm1939, %v1910, %v1335
      %v1944 = vsel %vm1939, %v1911, %v1337
      %v1945 = vsel %vm1939, %v1912, %v1339
      %v1946 = vsel %vm1939, %v1913, %v1341
      %v1947 = vsel %vm1939, %v1914, %v1343
      %v1948 = vsel %vm1939, %v1915, %v1345
      %v1949 = vsel %vm1939, %v1916, %v1347
      %v1950 = vsel %vm1939, %v1917, %v1349
      %v1951 = vsel %vm1939, %v1918, %v1351
      %v1952 = vsel %vm1939, %v1919, %v1353
      %v1953 = vsel %vm1939, %v1920, %v1355
      %v1954 = vsel %vm1939, %v1921, %v1357
      %v1955 = vsel %vm1939, %v1922, %v1359
      %v1956 = vsel %vm1939, %v1923, %v1361
      %v1957 = vsel %vm1939, %v1924, %v1363
      %v1958 = vsel %vm1939, %v1925, %v1365
      %v1959 = vsel %vm1939, %v1926, %v1367
      %v1960 = vsel %vm1939, %v1927, %v1369
      %v1961 = vsel %vm1939, %v1928, %v1371
      %v1962 = vsel %vm1939, %v1929, %v1373
      %v1963 = vsel %vm1939, %v1930, %v1375
      %v1964 = vsel %vm1939, %v1931, %v1377
      %v1965 = vsel %vm1939, %v1932, %v1379
      %v1966 = vsel %vm1939, %v1933, %v1381
      %v1967 = vsel %vm1939, %v1934, %v1383
      %v1968 = vsel %vm1939, %v1935, %v1385
      %v1969 = vsel %vm1939, %v1936, %v1387
      %v1970 = vsel %vm1939, %v1937, %v1389
      %v1971 = vsel %vm1939, %v1938, %v1391
      %vm1972 = vcmask 195584
      %v1973 = vsel %vm1972, %v1940, %v1457
      %v1974 = vsel %vm1972, %v1941, %v1459
      %v1975 = vsel %vm1972, %v1942, %v1461
      %v1976 = vsel %vm1972, %v1943, %v1463
      %v1977 = vsel %vm1972, %v1944, %v1465
      %v1978 = vsel %vm1972, %v1945, %v1467
      %v1979 = vsel %vm1972, %v1946, %v1469
      %v1980 = vsel %vm1972, %v1947, %v1471
      %v1981 = vsel %vm1972, %v1948, %v1473
      %v1982 = vsel %vm1972, %v1949, %v1475
      %v1983 = vsel %vm1972, %v1950, %v1477
      %v1984 = vsel %vm1972, %v1951, %v1479
      %v1985 = vsel %vm1972, %v1952, %v1481
      %v1986 = vsel %vm1972, %v1953, %v1483
      %v1987 = vsel %vm1972, %v1954, %v1485
      %v1988 = vsel %vm1972, %v1955, %v1487
      %v1989 = vsel %vm1972, %v1956, %v1489
      %v1990 = vsel %vm1972, %v1957, %v1491
      %v1991 = vsel %vm1972, %v1958, %v1493
      %v1992 = vsel %vm1972, %v1959, %v1495
      %v1993 = vsel %vm1972, %v1960, %v1497
      %v1994 = vsel %vm1972, %v1961, %v1499
      %v1995 = vsel %vm1972, %v1962, %v1501
      %v1996 = vsel %vm1972, %v1963, %v1503
      %v1997 = vsel %vm1972, %v1964, %v1505
      %v1998 = vsel %vm1972, %v1965, %v1507
      %v1999 = vsel %vm1972, %v1966, %v1509
      %v2000 = vsel %vm1972, %v1967, %v1511
      %v2001 = vsel %vm1972, %v1968, %v1513
      %v2002 = vsel %vm1972, %v1969, %v1515
      %v2003 = vsel %vm1972, %v1970, %v1517
      %v2004 = vsel %vm1972, %v1971, %v1519
      %vm2005 = vcmask 228352
      %v2006 = vsel %vm2005, %v1973, %v1585
      %v2007 = vsel %vm2005, %v1974, %v1587
      %v2008 = vsel %vm2005, %v1975, %v1589
      %v2009 = vsel %vm2005, %v1976, %v1591
      %v2010 = vsel %vm2005, %v1977, %v1593
      %v2011 = vsel %vm2005, %v1978, %v1595
      %v2012 = vsel %vm2005, %v1979, %v1597
      %v2013 = vsel %vm2005, %v1980, %v1599
      %v2014 = vsel %vm2005, %v1981, %v1601
      %v2015 = vsel %vm2005, %v1982, %v1603
      %v2016 = vsel %vm2005, %v1983, %v1605
      %v2017 = vsel %vm2005, %v1984, %v1607
      %v2018 = vsel %vm2005, %v1985, %v1609
      %v2019 = vsel %vm2005, %v1986, %v1611
      %v2020 = vsel %vm2005, %v1987, %v1613
      %v2021 = vsel %vm2005, %v1988, %v1615
      %v2022 = vsel %vm2005, %v1989, %v1617
      %v2023 = vsel %vm2005, %v1990, %v1619
      %v2024 = vsel %vm2005, %v1991, %v1621
      %v2025 = vsel %vm2005, %v1992, %v1623
      %v2026 = vsel %vm2005, %v1993, %v1625
      %v2027 = vsel %vm2005, %v1994, %v1627
      %v2028 = vsel %vm2005, %v1995, %v1629
      %v2029 = vsel %vm2005, %v1996, %v1631
      %v2030 = vsel %vm2005, %v1997, %v1633
      %v2031 = vsel %vm2005, %v1998, %v1635
      %v2032 = vsel %vm2005, %v1999, %v1637
      %v2033 = vsel %vm2005, %v2000, %v1639
      %v2034 = vsel %vm2005, %v2001, %v1641
      %v2035 = vsel %vm2005, %v2002, %v1643
      %v2036 = vsel %vm2005, %v2003, %v1645
      %v2037 = vsel %vm2005, %v2004, %v1647
      %vm2038 = vcmask 261120
      %v2039 = vsel %vm2038, %v2006, %v1713
      %v2040 = vsel %vm2038, %v2007, %v1715
      %v2041 = vsel %vm2038, %v2008, %v1717
      %v2042 = vsel %vm2038, %v2009, %v1719
      %v2043 = vsel %vm2038, %v2010, %v1721
      %v2044 = vsel %vm2038, %v2011, %v1723
      %v2045 = vsel %vm2038, %v2012, %v1725
      %v2046 = vsel %vm2038, %v2013, %v1727
      %v2047 = vsel %vm2038, %v2014, %v1729
      %v2048 = vsel %vm2038, %v2015, %v1731
      %v2049 = vsel %vm2038, %v2016, %v1733
      %v2050 = vsel %vm2038, %v2017, %v1735
      %v2051 = vsel %vm2038, %v2018, %v1737
      %v2052 = vsel %vm2038, %v2019, %v1739
      %v2053 = vsel %vm2038, %v2020, %v1741
      %v2054 = vsel %vm2038, %v2021, %v1743
      %v2055 = vsel %vm2038, %v2022, %v1745
      %v2056 = vsel %vm2038, %v2023, %v1747
      %v2057 = vsel %vm2038, %v2024, %v1749
      %v2058 = vsel %vm2038, %v2025, %v1751
      %v2059 = vsel %vm2038, %v2026, %v1753
      %v2060 = vsel %vm2038, %v2027, %v1755
      %v2061 = vsel %vm2038, %v2028, %v1757
      %v2062 = vsel %vm2038, %v2029, %v1759
      %v2063 = vsel %vm2038, %v2030, %v1761
      %v2064 = vsel %vm2038, %v2031, %v1763
      %v2065 = vsel %vm2038, %v2032, %v1765
      %v2066 = vsel %vm2038, %v2033, %v1767
      %v2067 = vsel %vm2038, %v2034, %v1769
      %v2068 = vsel %vm2038, %v2035, %v1771
      %v2069 = vsel %vm2038, %v2036, %v1773
      %v2070 = vsel %vm2038, %v2037, %v1775
      %v2071 = vld [vmem:[%s1] sm:$0xff]
      %v2072 = vld [vmem:[%s1 + $0x8] sm:$0xff]
      %v2073 = vld [vmem:[%s1 + $0x10] sm:$0xff]
      %v2074 = vld [vmem:[%s1 + $0x18] sm:$0xff]
      %v2075 = vld [vmem:[%s1 + $0x20] sm:$0xf]
      %v2076 = vld [vmem:[%s6] sm:$0x1]
      %v2078 = vlaneseq
      %v2079 = vshrl.u32 %v2078, 7
      %v2080 = vsub.s32 0, %v2079
      %v2081 = vrot.slane %v2076, %v2080
      %vm2083 = vcmask 293888
      %v2085 = vsel %vm2083, %v2039, 0
      %v2088 = vsel %vm2083, %v2040, 0
      %v2091 = vsel %vm2083, %v2041, 0
      %v2094 = vsel %vm2083, %v2042, 0
      %v2097 = vsel %vm2083, %v2043, 0
      %v2100 = vsel %vm2083, %v2044, 0
      %v2103 = vsel %vm2083, %v2045, 0
      %v2106 = vsel %vm2083, %v2046, 0
      %v2109 = vsel %vm2083, %v2047, 0
      %v2112 = vsel %vm2083, %v2048, 0
      %v2115 = vsel %vm2083, %v2049, 0
      %v2118 = vsel %vm2083, %v2050, 0
      %v2121 = vsel %vm2083, %v2051, 0
      %v2124 = vsel %vm2083, %v2052, 0
      %v2127 = vsel %vm2083, %v2053, 0
      %v2130 = vsel %vm2083, %v2054, 0
      %v2133 = vsel %vm2083, %v2055, 0
      %v2136 = vsel %vm2083, %v2056, 0
      %v2139 = vsel %vm2083, %v2057, 0
      %v2142 = vsel %vm2083, %v2058, 0
      %v2145 = vsel %vm2083, %v2059, 0
      %v2148 = vsel %vm2083, %v2060, 0
      %v2151 = vsel %vm2083, %v2061, 0
      %v2154 = vsel %vm2083, %v2062, 0
      %v2157 = vsel %vm2083, %v2063, 0
      %v2160 = vsel %vm2083, %v2064, 0
      %v2163 = vsel %vm2083, %v2065, 0
      %v2166 = vsel %vm2083, %v2066, 0
      %v2169 = vsel %vm2083, %v2067, 0
      %v2172 = vsel %vm2083, %v2068, 0
      %v2175 = vsel %vm2083, %v2069, 0
      %v2178 = vsel %vm2083, %v2070, 0
      %vm2180 = vcmask 1043456
      %v2182 = vsel %vm2180, %v2075, 0
      %2184 = vmatprep.subr.mxu0 0.0
      %2185 = vmatpush1.msra.mxu0 %v2071
      %2186 = vmatprep.subr.mxu0 0.0
      %2187 = vmatpush1.msra.mxu0 %v2072
      %2188 = vmatprep.subr.mxu0 0.0
      %2189 = vmatpush1.msra.mxu0 %v2073
      %2190 = vmatprep.subr.mxu0 0.0
      %2191 = vmatpush1.msra.mxu0 %v2074
      %2192 = vmatprep.subr.mxu0 0.0
      %2193 = vmatpush1.msra.mxu0 %v2182
      %2194 = vmatprep.subr.mxu0 0.0
      %2195 = vmatpush1.msra.mxu0 0.0
      %2196 = vmatprep.subr.mxu0 0.0
      %2197 = vmatpush1.msra.mxu0 0.0
      %2198 = vmatprep.subr.mxu0 0.0
      %2199 = vmatpush1.msra.mxu0 0.0
      %2200 = vmatprep.subr.mxu0 0.0
      %2201 = vmatpush1.msra.mxu0 0.0
      %2202 = vmatprep.subr.mxu0 0.0
      %2203 = vmatpush1.msra.mxu0 0.0
      %2204 = vmatprep.subr.mxu0 0.0
      %2205 = vmatpush1.msra.mxu0 0.0
      %2206 = vmatprep.subr.mxu0 0.0
      %2207 = vmatpush1.msra.mxu0 0.0
      %2208 = vmatprep.subr.mxu0 0.0
      %2209 = vmatpush1.msra.mxu0 0.0
      %2210 = vmatprep.subr.mxu0 0.0
      %2211 = vmatpush1.msra.mxu0 0.0
      %2212 = vmatprep.subr.mxu0 0.0
      %2213 = vmatpush1.msra.mxu0 0.0
      %2214 = vmatprep.subr.mxu0 0.0
      %2215 = vmatpush1.msra.mxu0 0.0
      %2216 = vmatprep.subr.mxu0 0.0
      %2217 = vmatpush1.msra.mxu0 0.0
      %2218 = vmatprep.subr.mxu0 0.0
      %2219 = vmatpush1.msra.mxu0 0.0
      %2220 = vmatprep.subr.mxu0 0.0
      %2221 = vmatpush1.msra.mxu0 0.0
      %2222 = vmatprep.subr.mxu0 0.0
      %2223 = vmatpush1.msra.mxu0 0.0
      %2224 = vmatprep.subr.mxu0 0.0
      %2225 = vmatpush1.msra.mxu0 0.0
      %2226 = vmatprep.subr.mxu0 0.0
      %2227 = vmatpush1.msra.mxu0 0.0
      %2228 = vmatprep.subr.mxu0 0.0
      %2229 = vmatpush1.msra.mxu0 0.0
      %2230 = vmatprep.subr.mxu0 0.0
      %2231 = vmatpush1.msra.mxu0 0.0
      %2232 = vmatprep.subr.mxu0 0.0
      %2233 = vmatpush1.msra.mxu0 0.0
      %2234 = vmatprep.subr.mxu0 0.0
      %2235 = vmatpush1.msra.mxu0 0.0
      %2236 = vmatprep.subr.mxu0 0.0
      %2237 = vmatpush1.msra.mxu0 0.0
      %2238 = vmatprep.subr.mxu0 0.0
      %2239 = vmatpush1.msra.mxu0 0.0
      %2240 = vmatprep.subr.mxu0 0.0
      %2241 = vmatpush1.msra.mxu0 0.0
      %2242 = vmatprep.subr.mxu0 0.0
      %2243 = vmatpush1.msra.mxu0 0.0
      %2244 = vmatprep.subr.mxu0 0.0
      %2245 = vmatpush1.msra.mxu0 0.0
      %2246 = vmatprep.subr.mxu0 0.0
      %2247 = vmatpush1.msra.mxu0 0.0
      %2248 = vmatprep.mubr.f32.mxu0 0.0
      %2249 = vmatmul.mubr.f32.gmra.mrb[0].mxu0 %v2085
      %v2250 = vpop.f32.mrb[0].mxu0
      %v2251 = vadd.f32 %v2081, %v2250
      %v2252 = vpop.f32.mrb[0].mxu0
      %2253 = vmatprep.mubr.f32.mxu0 0.0
      %2254 = vmatmul.mubr.f32.gmra.mrb[0].mxu0 %v2088
      %v2255 = vpop.f32.mrb[0].mxu0
      %v2256 = vadd.f32 %v2081, %v2255
      %v2257 = vpop.f32.mrb[0].mxu0
      %2258 = vmatprep.mubr.f32.mxu0 0.0
      %2259 = vmatmul.mubr.f32.gmra.mrb[0].mxu0 %v2091
      %v2260 = vpop.f32.mrb[0].mxu0
      %v2261 = vadd.f32 %v2081, %v2260
      %v2262 = vpop.f32.mrb[0].mxu0
      %2263 = vmatprep.mubr.f32.mxu0 0.0
      %2264 = vmatmul.mubr.f32.gmra.mrb[0].mxu0 %v2094
      %v2265 = vpop.f32.mrb[0].mxu0
      %v2266 = vadd.f32 %v2081, %v2265
      %v2267 = vpop.f32.mrb[0].mxu0
      %2268 = vmatprep.mubr.f32.mxu0 0.0
      %2269 = vmatmul.mubr.f32.gmra.mrb[0].mxu0 %v2097
      %v2270 = vpop.f32.mrb[0].mxu0
      %v2271 = vadd.f32 %v2081, %v2270
      %v2272 = vpop.f32.mrb[0].mxu0
      %2273 = vmatprep.mubr.f32.mxu0 0.0
      %2274 = vmatmul.mubr.f32.gmra.mrb[0].mxu0 %v2100
      %v2275 = vpop.f32.mrb[0].mxu0
      %v2276 = vadd.f32 %v2081, %v2275
      %v2277 = vpop.f32.mrb[0].mxu0
      %2278 = vmatprep.mubr.f32.mxu0 0.0
      %2279 = vmatmul.mubr.f32.gmra.mrb[0].mxu0 %v2103
      %v2280 = vpop.f32.mrb[0].mxu0
      %v2281 = vadd.f32 %v2081, %v2280
      %v2282 = vpop.f32.mrb[0].mxu0
      %2283 = vmatprep.mubr.f32.mxu0 0.0
      %2284 = vmatmul.mubr.f32.gmra.mrb[0].mxu0 %v2106
      %v2285 = vpop.f32.mrb[0].mxu0
      %v2286 = vadd.f32 %v2081, %v2285
      %v2287 = vpop.f32.mrb[0].mxu0
      %2288 = vmatprep.mubr.f32.mxu0 0.0
      %2289 = vmatmul.mubr.f32.gmra.mrb[0].mxu0 %v2109
      %v2290 = vpop.f32.mrb[0].mxu0
      %v2291 = vadd.f32 %v2081, %v2290
      %v2292 = vpop.f32.mrb[0].mxu0
      %2293 = vmatprep.mubr.f32.mxu0 0.0
      %2294 = vmatmul.mubr.f32.gmra.mrb[0].mxu0 %v2112
      %v2295 = vpop.f32.mrb[0].mxu0
      %v2296 = vadd.f32 %v2081, %v2295
      %v2297 = vpop.f32.mrb[0].mxu0
      %2298 = vmatprep.mubr.f32.mxu0 0.0
      %2299 = vmatmul.mubr.f32.gmra.mrb[0].mxu0 %v2115
      %v2300 = vpop.f32.mrb[0].mxu0
      %v2301 = vadd.f32 %v2081, %v2300
      %v2302 = vpop.f32.mrb[0].mxu0
      %2303 = vmatprep.mubr.f32.mxu0 0.0
      %2304 = vmatmul.mubr.f32.gmra.mrb[0].mxu0 %v2118
      %v2305 = vpop.f32.mrb[0].mxu0
      %v2306 = vadd.f32 %v2081, %v2305
      %v2307 = vpop.f32.mrb[0].mxu0
      %2308 = vmatprep.mubr.f32.mxu0 0.0
      %2309 = vmatmul.mubr.f32.gmra.mrb[0].mxu0 %v2121
      %v2310 = vpop.f32.mrb[0].mxu0
      %v2311 = vadd.f32 %v2081, %v2310
      %v2312 = vpop.f32.mrb[0].mxu0
      %2313 = vmatprep.mubr.f32.mxu0 0.0
      %2314 = vmatmul.mubr.f32.gmra.mrb[0].mxu0 %v2124
      %v2315 = vpop.f32.mrb[0].mxu0
      %v2316 = vadd.f32 %v2081, %v2315
      %v2317 = vpop.f32.mrb[0].mxu0
      %2318 = vmatprep.mubr.f32.mxu0 0.0
      %2319 = vmatmul.mubr.f32.gmra.mrb[0].mxu0 %v2127
      %v2320 = vpop.f32.mrb[0].mxu0
      %v2321 = vadd.f32 %v2081, %v2320
      %v2322 = vpop.f32.mrb[0].mxu0
      %2323 = vmatprep.mubr.f32.mxu0 0.0
      %2324 = vmatmul.mubr.f32.gmra.mrb[0].mxu0 %v2130
      %v2325 = vpop.f32.mrb[0].mxu0
      %v2326 = vadd.f32 %v2081, %v2325
      %v2327 = vpop.f32.mrb[0].mxu0
      %2328 = vmatprep.mubr.f32.mxu0 0.0
      %2329 = vmatmul.mubr.f32.gmra.mrb[0].mxu0 %v2133
      %v2330 = vpop.f32.mrb[0].mxu0
      %v2331 = vadd.f32 %v2081, %v2330
      %v2332 = vpop.f32.mrb[0].mxu0
      %2333 = vmatprep.mubr.f32.mxu0 0.0
      %2334 = vmatmul.mubr.f32.gmra.mrb[0].mxu0 %v2136
      %v2335 = vpop.f32.mrb[0].mxu0
      %v2336 = vadd.f32 %v2081, %v2335
      %v2337 = vpop.f32.mrb[0].mxu0
      %2338 = vmatprep.mubr.f32.mxu0 0.0
      %2339 = vmatmul.mubr.f32.gmra.mrb[0].mxu0 %v2139
      %v2340 = vpop.f32.mrb[0].mxu0
      %v2341 = vadd.f32 %v2081, %v2340
      %v2342 = vpop.f32.mrb[0].mxu0
      %2343 = vmatprep.mubr.f32.mxu0 0.0
      %2344 = vmatmul.mubr.f32.gmra.mrb[0].mxu0 %v2142
      %v2345 = vpop.f32.mrb[0].mxu0
      %v2346 = vadd.f32 %v2081, %v2345
      %v2347 = vpop.f32.mrb[0].mxu0
      %2348 = vmatprep.mubr.f32.mxu0 0.0
      %2349 = vmatmul.mubr.f32.gmra.mrb[0].mxu0 %v2145
      %v2350 = vpop.f32.mrb[0].mxu0
      %v2351 = vadd.f32 %v2081, %v2350
      %v2352 = vpop.f32.mrb[0].mxu0
      %2353 = vmatprep.mubr.f32.mxu0 0.0
      %2354 = vmatmul.mubr.f32.gmra.mrb[0].mxu0 %v2148
      %v2355 = vpop.f32.mrb[0].mxu0
      %v2356 = vadd.f32 %v2081, %v2355
      %v2357 = vpop.f32.mrb[0].mxu0
      %2358 = vmatprep.mubr.f32.mxu0 0.0
      %2359 = vmatmul.mubr.f32.gmra.mrb[0].mxu0 %v2151
      %v2360 = vpop.f32.mrb[0].mxu0
      %v2361 = vadd.f32 %v2081, %v2360
      %v2362 = vpop.f32.mrb[0].mxu0
      %2363 = vmatprep.mubr.f32.mxu0 0.0
      %2364 = vmatmul.mubr.f32.gmra.mrb[0].mxu0 %v2154
      %v2365 = vpop.f32.mrb[0].mxu0
      %v2366 = vadd.f32 %v2081, %v2365
      %v2367 = vpop.f32.mrb[0].mxu0
      %2368 = vmatprep.mubr.f32.mxu0 0.0
      %2369 = vmatmul.mubr.f32.gmra.mrb[0].mxu0 %v2157
      %v2370 = vpop.f32.mrb[0].mxu0
      %v2371 = vadd.f32 %v2081, %v2370
      %v2372 = vpop.f32.mrb[0].mxu0
      %2373 = vmatprep.mubr.f32.mxu0 0.0
      %2374 = vmatmul.mubr.f32.gmra.mrb[0].mxu0 %v2160
      %v2375 = vpop.f32.mrb[0].mxu0
      %v2376 = vadd.f32 %v2081, %v2375
      %v2377 = vpop.f32.mrb[0].mxu0
      %2378 = vmatprep.mubr.f32.mxu0 0.0
      %2379 = vmatmul.mubr.f32.gmra.mrb[0].mxu0 %v2163
      %v2380 = vpop.f32.mrb[0].mxu0
      %v2381 = vadd.f32 %v2081, %v2380
      %v2382 = vpop.f32.mrb[0].mxu0
      %2383 = vmatprep.mubr.f32.mxu0 0.0
      %2384 = vmatmul.mubr.f32.gmra.mrb[0].mxu0 %v2166
      %v2385 = vpop.f32.mrb[0].mxu0
      %v2386 = vadd.f32 %v2081, %v2385
      %v2387 = vpop.f32.mrb[0].mxu0
      %2388 = vmatprep.mubr.f32.mxu0 0.0
      %2389 = vmatmul.mubr.f32.gmra.mrb[0].mxu0 %v2169
      %v2390 = vpop.f32.mrb[0].mxu0
      %v2391 = vadd.f32 %v2081, %v2390
      %v2392 = vpop.f32.mrb[0].mxu0
      %2393 = vmatprep.mubr.f32.mxu0 0.0
      %2394 = vmatmul.mubr.f32.gmra.mrb[0].mxu0 %v2172
      %v2395 = vpop.f32.mrb[0].mxu0
      %v2396 = vadd.f32 %v2081, %v2395
      %v2397 = vpop.f32.mrb[0].mxu0
      %2398 = vmatprep.mubr.f32.mxu0 0.0
      %2399 = vmatmul.mubr.f32.gmra.mrb[0].mxu0 %v2175
      %v2400 = vpop.f32.mrb[0].mxu0
      %v2401 = vadd.f32 %v2081, %v2400
      %v2402 = vpop.f32.mrb[0].mxu0
      %2403 = vmatprep.mubr.f32.mxu0 0.0
      %2404 = vmatmul.mubr.f32.gmra.mrb[0].mxu0 %v2178
      %v2405 = vpop.f32.mrb[0].mxu0
      %v2406 = vadd.f32 %v2081, %v2405
      %v2407 = vpop.f32.mrb[0].mxu0
      %2408 = vdwg.mxu0
      %v2409 = vmax.f32 %v2251, 0.0
      %v2410 = vmax.f32 %v2256, 0.0
      %v2411 = vmax.f32 %v2261, 0.0
      %v2412 = vmax.f32 %v2266, 0.0
      %v2413 = vmax.f32 %v2271, 0.0
      %v2414 = vmax.f32 %v2276, 0.0
      %v2415 = vmax.f32 %v2281, 0.0
      %v2416 = vmax.f32 %v2286, 0.0
      %v2417 = vmax.f32 %v2291, 0.0
      %v2418 = vmax.f32 %v2296, 0.0
      %v2419 = vmax.f32 %v2301, 0.0
      %v2420 = vmax.f32 %v2306, 0.0
      %v2421 = vmax.f32 %v2311, 0.0
      %v2422 = vmax.f32 %v2316, 0.0
      %v2423 = vmax.f32 %v2321, 0.0
      %v2424 = vmax.f32 %v2326, 0.0
      %v2425 = vmax.f32 %v2331, 0.0
      %v2426 = vmax.f32 %v2336, 0.0
      %v2427 = vmax.f32 %v2341, 0.0
      %v2428 = vmax.f32 %v2346, 0.0
      %v2429 = vmax.f32 %v2351, 0.0
      %v2430 = vmax.f32 %v2356, 0.0
      %v2431 = vmax.f32 %v2361, 0.0
      %v2432 = vmax.f32 %v2366, 0.0
      %v2433 = vmax.f32 %v2371, 0.0
      %v2434 = vmax.f32 %v2376, 0.0
      %v2435 = vmax.f32 %v2381, 0.0
      %v2436 = vmax.f32 %v2386, 0.0
      %v2437 = vmax.f32 %v2391, 0.0
      %v2438 = vmax.f32 %v2396, 0.0
      %v2439 = vmax.f32 %v2401, 0.0
      %v2440 = vmax.f32 %v2406, 0.0
      %2441 = vst.msk [vmem:[#allocation3] sm:$0xff] %vm419, 0.0
      %2442 = vst.msk [vmem:[#allocation3 + $0x8] sm:$0xff] %vm419, 0.0
      %2443 = vst.msk [vmem:[#allocation3 + $0x10] sm:$0xff] %vm419, 0.0
      %2444 = vst.msk [vmem:[#allocation3 + $0x18] sm:$0xff] %vm419, 0.0
      %2445 = vst.msk [vmem:[#allocation3 + $0x20] sm:$0xff] %vm419, 0.0
      %2446 = vst.msk [vmem:[#allocation3 + $0x28] sm:$0xff] %vm419, 0.0
      %2447 = vst.msk [vmem:[#allocation3 + $0x30] sm:$0xff] %vm419, 0.0
      %2448 = vst.msk [vmem:[#allocation3 + $0x38] sm:$0xff] %vm419, 0.0
      %s2449 = scalar_lea.vmem [#allocation3], 576
      %2450 = vst.msk [vmem:[%s2449] sm:$0xff] %vm419, 0.0
      %2451 = vst.msk [vmem:[%s2449 + $0x8] sm:$0xff] %vm419, 0.0
      %2452 = vst.msk [vmem:[%s2449 + $0x10] sm:$0xff] %vm419, 0.0
      %2453 = vst.msk [vmem:[%s2449 + $0x18] sm:$0xff] %vm419, 0.0
      %2454 = vst.msk [vmem:[%s2449 + $0x20] sm:$0xff] %vm419, 0.0
      %2455 = vst.msk [vmem:[%s2449 + $0x28] sm:$0xff] %vm419, 0.0
      %2456 = vst.msk [vmem:[%s2449 + $0x30] sm:$0xff] %vm419, 0.0
      %2457 = vst.msk [vmem:[%s2449 + $0x38] sm:$0xff] %vm419, 0.0
      %s2458 = scalar_lea.vmem [#allocation3], 64
      %vm2459 = vcmask 25600
      %2460 = vst.msk [vmem:[%s2458 + $0x6] sm:$0x3] %vm2459, 0.0
      %2461 = vst.msk [vmem:[%s2458 + $0x26] sm:$0x3] %vm2459, 0.0
      %2462 = vst.msk [vmem:[%s2458 + $0x46] sm:$0x3] %vm2459, 0.0
      %2463 = vst.msk [vmem:[%s2458 + $0x66] sm:$0x3] %vm2459, 0.0
      %2464 = vst.msk [vmem:[%s2458 + $0x86] sm:$0x3] %vm2459, 0.0
      %2465 = vst.msk [vmem:[%s2458 + $0xa6] sm:$0x3] %vm2459, 0.0
      %2466 = vst.msk [vmem:[%s2458 + $0xc6] sm:$0x3] %vm2459, 0.0
      %2467 = vst.msk [vmem:[%s2458 + $0xe6] sm:$0x3] %vm2459, 0.0
      %2468 = vst.msk [vmem:[%s2458 + $0x106] sm:$0x3] %vm2459, 0.0
      %2469 = vst.msk [vmem:[%s2458 + $0x126] sm:$0x3] %vm2459, 0.0
      %2470 = vst.msk [vmem:[%s2458 + $0x146] sm:$0x3] %vm2459, 0.0
      %2471 = vst.msk [vmem:[%s2458 + $0x166] sm:$0x3] %vm2459, 0.0
      %2472 = vst.msk [vmem:[%s2458 + $0x186] sm:$0x3] %vm2459, 0.0
      %2473 = vst.msk [vmem:[%s2458 + $0x1a6] sm:$0x3] %vm2459, 0.0
      %2474 = vst.msk [vmem:[%s2458 + $0x1c6] sm:$0x3] %vm2459, 0.0
      %2475 = vst.msk [vmem:[%s2458 + $0x1e6] sm:$0x3] %vm2459, 0.0
      %2476 = vst.msk [vmem:[%s2458 + $0x18] sm:$0x3] %vm2459, 0.0
      %2477 = vst.msk [vmem:[%s2458 + $0x38] sm:$0x3] %vm2459, 0.0
      %2478 = vst.msk [vmem:[%s2458 + $0x58] sm:$0x3] %vm2459, 0.0
      %2479 = vst.msk [vmem:[%s2458 + $0x78] sm:$0x3] %vm2459, 0.0
      %2480 = vst.msk [vmem:[%s2458 + $0x98] sm:$0x3] %vm2459, 0.0
      %2481 = vst.msk [vmem:[%s2458 + $0xb8] sm:$0x3] %vm2459, 0.0
      %2482 = vst.msk [vmem:[%s2458 + $0xd8] sm:$0x3] %vm2459, 0.0
      %2483 = vst.msk [vmem:[%s2458 + $0xf8] sm:$0x3] %vm2459, 0.0
      %2484 = vst.msk [vmem:[%s2458 + $0x118] sm:$0x3] %vm2459, 0.0
      %2485 = vst.msk [vmem:[%s2458 + $0x138] sm:$0x3] %vm2459, 0.0
      %2486 = vst.msk [vmem:[%s2458 + $0x158] sm:$0x3] %vm2459, 0.0
      %2487 = vst.msk [vmem:[%s2458 + $0x178] sm:$0x3] %vm2459, 0.0
      %2488 = vst.msk [vmem:[%s2458 + $0x198] sm:$0x3] %vm2459, 0.0
      %2489 = vst.msk [vmem:[%s2458 + $0x1b8] sm:$0x3] %vm2459, 0.0
      %2490 = vst.msk [vmem:[%s2458 + $0x1d8] sm:$0x3] %vm2459, 0.0
      %2491 = vst.msk [vmem:[%s2458 + $0x1f8] sm:$0x3] %vm2459, 0.0
      %2492 = vst.msk [vmem:[%s2458 + $0x8] sm:$0xff] %vm419, %v2409
      %2493 = vst.msk [vmem:[%s2458 + $0x10] sm:$0xff] %vm419, %v2410
      %2494 = vst.msk [vmem:[%s2458 + $0x28] sm:$0xff] %vm419, %v2411
      %2495 = vst.msk [vmem:[%s2458 + $0x30] sm:$0xff] %vm419, %v2412
      %2496 = vst.msk [vmem:[%s2458 + $0x48] sm:$0xff] %vm419, %v2413
      %2497 = vst.msk [vmem:[%s2458 + $0x50] sm:$0xff] %vm419, %v2414
      %2498 = vst.msk [vmem:[%s2458 + $0x68] sm:$0xff] %vm419, %v2415
      %2499 = vst.msk [vmem:[%s2458 + $0x70] sm:$0xff] %vm419, %v2416
      %2500 = vst.msk [vmem:[%s2458 + $0x88] sm:$0xff] %vm419, %v2417
      %2501 = vst.msk [vmem:[%s2458 + $0x90] sm:$0xff] %vm419, %v2418
      %2502 = vst.msk [vmem:[%s2458 + $0xa8] sm:$0xff] %vm419, %v2419
      %2503 = vst.msk [vmem:[%s2458 + $0xb0] sm:$0xff] %vm419, %v2420
      %2504 = vst.msk [vmem:[%s2458 + $0xc8] sm:$0xff] %vm419, %v2421
      %2505 = vst.msk [vmem:[%s2458 + $0xd0] sm:$0xff] %vm419, %v2422
      %2506 = vst.msk [vmem:[%s2458 + $0xe8] sm:$0xff] %vm419, %v2423
      %2507 = vst.msk [vmem:[%s2458 + $0xf0] sm:$0xff] %vm419, %v2424
      %2508 = vst.msk [vmem:[%s2458 + $0x108] sm:$0xff] %vm419, %v2425
      %2509 = vst.msk [vmem:[%s2458 + $0x110] sm:$0xff] %vm419, %v2426
      %2510 = vst.msk [vmem:[%s2458 + $0x128] sm:$0xff] %vm419, %v2427
      %2511 = vst.msk [vmem:[%s2458 + $0x130] sm:$0xff] %vm419, %v2428
      %2512 = vst.msk [vmem:[%s2458 + $0x148] sm:$0xff] %vm419, %v2429
      %2513 = vst.msk [vmem:[%s2458 + $0x150] sm:$0xff] %vm419, %v2430
      %2514 = vst.msk [vmem:[%s2458 + $0x168] sm:$0xff] %vm419, %v2431
      %2515 = vst.msk [vmem:[%s2458 + $0x170] sm:$0xff] %vm419, %v2432
      %2516 = vst.msk [vmem:[%s2458 + $0x188] sm:$0xff] %vm419, %v2433
      %2517 = vst.msk [vmem:[%s2458 + $0x190] sm:$0xff] %vm419, %v2434
      %2518 = vst.msk [vmem:[%s2458 + $0x1a8] sm:$0xff] %vm419, %v2435
      %2519 = vst.msk [vmem:[%s2458 + $0x1b0] sm:$0xff] %vm419, %v2436
      %2520 = vst.msk [vmem:[%s2458 + $0x1c8] sm:$0xff] %vm419, %v2437
      %2521 = vst.msk [vmem:[%s2458 + $0x1d0] sm:$0xff] %vm419, %v2438
      %2522 = vst.msk [vmem:[%s2458 + $0x1e8] sm:$0xff] %vm419, %v2439
      %2523 = vst.msk [vmem:[%s2458 + $0x1f0] sm:$0xff] %vm419, %v2440
      %v2524 = vld [vmem:[#allocation3 + $0x6] sm:$0xff]
      %v2525 = vld [vmem:[#allocation3 + $0xe] sm:$0xff]
      %v2526 = vld [vmem:[#allocation3 + $0x26] sm:$0xff]
      %v2527 = vld [vmem:[#allocation3 + $0x2e] sm:$0xff]
      %v2528 = vld [vmem:[#allocation3 + $0x46] sm:$0xff]
      %v2529 = vld [vmem:[#allocation3 + $0x4e] sm:$0xff]
      %v2530 = vld [vmem:[#allocation3 + $0x66] sm:$0xff]
      %v2531 = vld [vmem:[#allocation3 + $0x6e] sm:$0xff]
      %v2532 = vld [vmem:[#allocation3 + $0x86] sm:$0xff]
      %v2533 = vld [vmem:[#allocation3 + $0x8e] sm:$0xff]
      %v2534 = vld [vmem:[#allocation3 + $0xa6] sm:$0xff]
      %v2535 = vld [vmem:[#allocation3 + $0xae] sm:$0xff]
      %v2536 = vld [vmem:[#allocation3 + $0xc6] sm:$0xff]
      %v2537 = vld [vmem:[#allocation3 + $0xce] sm:$0xff]
      %v2538 = vld [vmem:[#allocation3 + $0xe6] sm:$0xff]
      %v2539 = vld [vmem:[#allocation3 + $0xee] sm:$0xff]
      %v2540 = vld [vmem:[#allocation3 + $0x106] sm:$0xff]
      %v2541 = vld [vmem:[#allocation3 + $0x10e] sm:$0xff]
      %v2542 = vld [vmem:[#allocation3 + $0x126] sm:$0xff]
      %v2543 = vld [vmem:[#allocation3 + $0x12e] sm:$0xff]
      %v2544 = vld [vmem:[#allocation3 + $0x146] sm:$0xff]
      %v2545 = vld [vmem:[#allocation3 + $0x14e] sm:$0xff]
      %v2546 = vld [vmem:[#allocation3 + $0x166] sm:$0xff]
      %v2547 = vld [vmem:[#allocation3 + $0x16e] sm:$0xff]
      %v2548 = vld [vmem:[#allocation3 + $0x186] sm:$0xff]
      %v2549 = vld [vmem:[#allocation3 + $0x18e] sm:$0xff]
      %v2550 = vld [vmem:[#allocation3 + $0x1a6] sm:$0xff]
      %v2551 = vld [vmem:[#allocation3 + $0x1ae] sm:$0xff]
      %v2552 = vld [vmem:[#allocation3 + $0x1c6] sm:$0xff]
      %v2553 = vld [vmem:[#allocation3 + $0x1ce] sm:$0xff]
      %v2554 = vld [vmem:[#allocation3 + $0x1e6] sm:$0xff]
      %v2555 = vld [vmem:[#allocation3 + $0x1ee] sm:$0xff]
      %v2556 = vld [vmem:[#allocation3 + $0x8] sm:$0xff]
      %v2557 = vld [vmem:[#allocation3 + $0x10] sm:$0xff]
      %v2558 = vld [vmem:[#allocation3 + $0x28] sm:$0xff]
      %v2559 = vld [vmem:[#allocation3 + $0x30] sm:$0xff]
      %v2560 = vld [vmem:[#allocation3 + $0x48] sm:$0xff]
      %v2561 = vld [vmem:[#allocation3 + $0x50] sm:$0xff]
      %v2562 = vld [vmem:[#allocation3 + $0x68] sm:$0xff]
      %v2563 = vld [vmem:[#allocation3 + $0x70] sm:$0xff]
      %v2564 = vld [vmem:[#allocation3 + $0x88] sm:$0xff]
      %v2565 = vld [vmem:[#allocation3 + $0x90] sm:$0xff]
      %v2566 = vld [vmem:[#allocation3 + $0xa8] sm:$0xff]
      %v2567 = vld [vmem:[#allocation3 + $0xb0] sm:$0xff]
      %v2568 = vld [vmem:[#allocation3 + $0xc8] sm:$0xff]
      %v2569 = vld [vmem:[#allocation3 + $0xd0] sm:$0xff]
      %v2570 = vld [vmem:[#allocation3 + $0xe8] sm:$0xff]
      %v2571 = vld [vmem:[#allocation3 + $0xf0] sm:$0xff]
      %v2572 = vld [vmem:[#allocation3 + $0x108] sm:$0xff]
      %v2573 = vld [vmem:[#allocation3 + $0x110] sm:$0xff]
      %v2574 = vld [vmem:[#allocation3 + $0x128] sm:$0xff]
      %v2575 = vld [vmem:[#allocation3 + $0x130] sm:$0xff]
      %v2576 = vld [vmem:[#allocation3 + $0x148] sm:$0xff]
      %v2577 = vld [vmem:[#allocation3 + $0x150] sm:$0xff]
      %v2578 = vld [vmem:[#allocation3 + $0x168] sm:$0xff]
      %v2579 = vld [vmem:[#allocation3 + $0x170] sm:$0xff]
      %v2580 = vld [vmem:[#allocation3 + $0x188] sm:$0xff]
      %v2581 = vld [vmem:[#allocation3 + $0x190] sm:$0xff]
      %v2582 = vld [vmem:[#allocation3 + $0x1a8] sm:$0xff]
      %v2583 = vld [vmem:[#allocation3 + $0x1b0] sm:$0xff]
      %v2584 = vld [vmem:[#allocation3 + $0x1c8] sm:$0xff]
      %v2585 = vld [vmem:[#allocation3 + $0x1d0] sm:$0xff]
      %v2586 = vld [vmem:[#allocation3 + $0x1e8] sm:$0xff]
      %v2587 = vld [vmem:[#allocation3 + $0x1f0] sm:$0xff]
      %v2588 = vld [vmem:[#allocation3 + $0xa] sm:$0xff]
      %v2589 = vld [vmem:[#allocation3 + $0x12] sm:$0xff]
      %v2590 = vld [vmem:[#allocation3 + $0x2a] sm:$0xff]
      %v2591 = vld [vmem:[#allocation3 + $0x32] sm:$0xff]
      %v2592 = vld [vmem:[#allocation3 + $0x4a] sm:$0xff]
      %v2593 = vld [vmem:[#allocation3 + $0x52] sm:$0xff]
      %v2594 = vld [vmem:[#allocation3 + $0x6a] sm:$0xff]
      %v2595 = vld [vmem:[#allocation3 + $0x72] sm:$0xff]
      %v2596 = vld [vmem:[#allocation3 + $0x8a] sm:$0xff]
      %v2597 = vld [vmem:[#allocation3 + $0x92] sm:$0xff]
      %v2598 = vld [vmem:[#allocation3 + $0xaa] sm:$0xff]
      %v2599 = vld [vmem:[#allocation3 + $0xb2] sm:$0xff]
      %v2600 = vld [vmem:[#allocation3 + $0xca] sm:$0xff]
      %v2601 = vld [vmem:[#allocation3 + $0xd2] sm:$0xff]
      %v2602 = vld [vmem:[#allocation3 + $0xea] sm:$0xff]
      %v2603 = vld [vmem:[#allocation3 + $0xf2] sm:$0xff]
      %v2604 = vld [vmem:[#allocation3 + $0x10a] sm:$0xff]
      %v2605 = vld [vmem:[#allocation3 + $0x112] sm:$0xff]
      %v2606 = vld [vmem:[#allocation3 + $0x12a] sm:$0xff]
      %v2607 = vld [vmem:[#allocation3 + $0x132] sm:$0xff]
      %v2608 = vld [vmem:[#allocation3 + $0x14a] sm:$0xff]
      %v2609 = vld [vmem:[#allocation3 + $0x152] sm:$0xff]
      %v2610 = vld [vmem:[#allocation3 + $0x16a] sm:$0xff]
      %v2611 = vld [vmem:[#allocation3 + $0x172] sm:$0xff]
      %v2612 = vld [vmem:[#allocation3 + $0x18a] sm:$0xff]
      %v2613 = vld [vmem:[#allocation3 + $0x192] sm:$0xff]
      %v2614 = vld [vmem:[#allocation3 + $0x1aa] sm:$0xff]
      %v2615 = vld [vmem:[#allocation3 + $0x1b2] sm:$0xff]
      %v2616 = vld [vmem:[#allocation3 + $0x1ca] sm:$0xff]
      %v2617 = vld [vmem:[#allocation3 + $0x1d2] sm:$0xff]
      %v2618 = vld [vmem:[#allocation3 + $0x1ea] sm:$0xff]
      %v2619 = vld [vmem:[#allocation3 + $0x1f2] sm:$0xff]
      %v2620 = vld [vmem:[%s2458 + $0x6] sm:$0xff]
      %v2621 = vld [vmem:[%s2458 + $0xe] sm:$0xff]
      %v2622 = vld [vmem:[%s2458 + $0x26] sm:$0xff]
      %v2623 = vld [vmem:[%s2458 + $0x2e] sm:$0xff]
      %v2624 = vld [vmem:[%s2458 + $0x46] sm:$0xff]
      %v2625 = vld [vmem:[%s2458 + $0x4e] sm:$0xff]
      %v2626 = vld [vmem:[%s2458 + $0x66] sm:$0xff]
      %v2627 = vld [vmem:[%s2458 + $0x6e] sm:$0xff]
      %v2628 = vld [vmem:[%s2458 + $0x86] sm:$0xff]
      %v2629 = vld [vmem:[%s2458 + $0x8e] sm:$0xff]
      %v2630 = vld [vmem:[%s2458 + $0xa6] sm:$0xff]
      %v2631 = vld [vmem:[%s2458 + $0xae] sm:$0xff]
      %v2632 = vld [vmem:[%s2458 + $0xc6] sm:$0xff]
      %v2633 = vld [vmem:[%s2458 + $0xce] sm:$0xff]
      %v2634 = vld [vmem:[%s2458 + $0xe6] sm:$0xff]
      %v2635 = vld [vmem:[%s2458 + $0xee] sm:$0xff]
      %v2636 = vld [vmem:[%s2458 + $0x106] sm:$0xff]
      %v2637 = vld [vmem:[%s2458 + $0x10e] sm:$0xff]
      %v2638 = vld [vmem:[%s2458 + $0x126] sm:$0xff]
      %v2639 = vld [vmem:[%s2458 + $0x12e] sm:$0xff]
      %v2640 = vld [vmem:[%s2458 + $0x146] sm:$0xff]
      %v2641 = vld [vmem:[%s2458 + $0x14e] sm:$0xff]
      %v2642 = vld [vmem:[%s2458 + $0x166] sm:$0xff]
      %v2643 = vld [vmem:[%s2458 + $0x16e] sm:$0xff]
      %v2644 = vld [vmem:[%s2458 + $0x186] sm:$0xff]
      %v2645 = vld [vmem:[%s2458 + $0x18e] sm:$0xff]
      %v2646 = vld [vmem:[%s2458 + $0x1a6] sm:$0xff]
      %v2647 = vld [vmem:[%s2458 + $0x1ae] sm:$0xff]
      %v2648 = vld [vmem:[%s2458 + $0x1c6] sm:$0xff]
      %v2649 = vld [vmem:[%s2458 + $0x1ce] sm:$0xff]
      %v2650 = vld [vmem:[%s2458 + $0x1e6] sm:$0xff]
      %v2651 = vld [vmem:[%s2458 + $0x1ee] sm:$0xff]
      %v2652 = vld [vmem:[%s2458 + $0x8] sm:$0xff]
      %v2653 = vld [vmem:[%s2458 + $0x10] sm:$0xff]
      %v2654 = vld [vmem:[%s2458 + $0x28] sm:$0xff]
      %v2655 = vld [vmem:[%s2458 + $0x30] sm:$0xff]
      %v2656 = vld [vmem:[%s2458 + $0x48] sm:$0xff]
      %v2657 = vld [vmem:[%s2458 + $0x50] sm:$0xff]
      %v2658 = vld [vmem:[%s2458 + $0x68] sm:$0xff]
      %v2659 = vld [vmem:[%s2458 + $0x70] sm:$0xff]
      %v2660 = vld [vmem:[%s2458 + $0x88] sm:$0xff]
      %v2661 = vld [vmem:[%s2458 + $0x90] sm:$0xff]
      %v2662 = vld [vmem:[%s2458 + $0xa8] sm:$0xff]
      %v2663 = vld [vmem:[%s2458 + $0xb0] sm:$0xff]
      %v2664 = vld [vmem:[%s2458 + $0xc8] sm:$0xff]
      %v2665 = vld [vmem:[%s2458 + $0xd0] sm:$0xff]
      %v2666 = vld [vmem:[%s2458 + $0xe8] sm:$0xff]
      %v2667 = vld [vmem:[%s2458 + $0xf0] sm:$0xff]
      %v2668 = vld [vmem:[%s2458 + $0x108] sm:$0xff]
      %v2669 = vld [vmem:[%s2458 + $0x110] sm:$0xff]
      %v2670 = vld [vmem:[%s2458 + $0x128] sm:$0xff]
      %v2671 = vld [vmem:[%s2458 + $0x130] sm:$0xff]
      %v2672 = vld [vmem:[%s2458 + $0x148] sm:$0xff]
      %v2673 = vld [vmem:[%s2458 + $0x150] sm:$0xff]
      %v2674 = vld [vmem:[%s2458 + $0x168] sm:$0xff]
      %v2675 = vld [vmem:[%s2458 + $0x170] sm:$0xff]
      %v2676 = vld [vmem:[%s2458 + $0x188] sm:$0xff]
      %v2677 = vld [vmem:[%s2458 + $0x190] sm:$0xff]
      %v2678 = vld [vmem:[%s2458 + $0x1a8] sm:$0xff]
      %v2679 = vld [vmem:[%s2458 + $0x1b0] sm:$0xff]
      %v2680 = vld [vmem:[%s2458 + $0x1c8] sm:$0xff]
      %v2681 = vld [vmem:[%s2458 + $0x1d0] sm:$0xff]
      %v2682 = vld [vmem:[%s2458 + $0x1e8] sm:$0xff]
      %v2683 = vld [vmem:[%s2458 + $0x1f0] sm:$0xff]
      %v2684 = vld [vmem:[%s2458 + $0xa] sm:$0xff]
      %v2685 = vld [vmem:[%s2458 + $0x12] sm:$0xff]
      %v2686 = vld [vmem:[%s2458 + $0x2a] sm:$0xff]
      %v2687 = vld [vmem:[%s2458 + $0x32] sm:$0xff]
      %v2688 = vld [vmem:[%s2458 + $0x4a] sm:$0xff]
      %v2689 = vld [vmem:[%s2458 + $0x52] sm:$0xff]
      %v2690 = vld [vmem:[%s2458 + $0x6a] sm:$0xff]
      %v2691 = vld [vmem:[%s2458 + $0x72] sm:$0xff]
      %v2692 = vld [vmem:[%s2458 + $0x8a] sm:$0xff]
      %v2693 = vld [vmem:[%s2458 + $0x92] sm:$0xff]
      %v2694 = vld [vmem:[%s2458 + $0xaa] sm:$0xff]
      %v2695 = vld [vmem:[%s2458 + $0xb2] sm:$0xff]
      %v2696 = vld [vmem:[%s2458 + $0xca] sm:$0xff]
      %v2697 = vld [vmem:[%s2458 + $0xd2] sm:$0xff]
      %v2698 = vld [vmem:[%s2458 + $0xea] sm:$0xff]
      %v2699 = vld [vmem:[%s2458 + $0xf2] sm:$0xff]
      %v2700 = vld [vmem:[%s2458 + $0x10a] sm:$0xff]
      %v2701 = vld [vmem:[%s2458 + $0x112] sm:$0xff]
      %v2702 = vld [vmem:[%s2458 + $0x12a] sm:$0xff]
      %v2703 = vld [vmem:[%s2458 + $0x132] sm:$0xff]
      %v2704 = vld [vmem:[%s2458 + $0x14a] sm:$0xff]
      %v2705 = vld [vmem:[%s2458 + $0x152] sm:$0xff]
      %v2706 = vld [vmem:[%s2458 + $0x16a] sm:$0xff]
      %v2707 = vld [vmem:[%s2458 + $0x172] sm:$0xff]
      %v2708 = vld [vmem:[%s2458 + $0x18a] sm:$0xff]
      %v2709 = vld [vmem:[%s2458 + $0x192] sm:$0xff]
      %v2710 = vld [vmem:[%s2458 + $0x1aa] sm:$0xff]
      %v2711 = vld [vmem:[%s2458 + $0x1b2] sm:$0xff]
      %v2712 = vld [vmem:[%s2458 + $0x1ca] sm:$0xff]
      %v2713 = vld [vmem:[%s2458 + $0x1d2] sm:$0xff]
      %v2714 = vld [vmem:[%s2458 + $0x1ea] sm:$0xff]
      %v2715 = vld [vmem:[%s2458 + $0x1f2] sm:$0xff]
      %s2716 = scalar_lea.vmem [#allocation3], 128
      %v2717 = vld [vmem:[%s2716 + $0x6] sm:$0xff]
      %v2718 = vld [vmem:[%s2716 + $0xe] sm:$0xff]
      %v2719 = vld [vmem:[%s2716 + $0x26] sm:$0xff]
      %v2720 = vld [vmem:[%s2716 + $0x2e] sm:$0xff]
      %v2721 = vld [vmem:[%s2716 + $0x46] sm:$0xff]
      %v2722 = vld [vmem:[%s2716 + $0x4e] sm:$0xff]
      %v2723 = vld [vmem:[%s2716 + $0x66] sm:$0xff]
      %v2724 = vld [vmem:[%s2716 + $0x6e] sm:$0xff]
      %v2725 = vld [vmem:[%s2716 + $0x86] sm:$0xff]
      %v2726 = vld [vmem:[%s2716 + $0x8e] sm:$0xff]
      %v2727 = vld [vmem:[%s2716 + $0xa6] sm:$0xff]
      %v2728 = vld [vmem:[%s2716 + $0xae] sm:$0xff]
      %v2729 = vld [vmem:[%s2716 + $0xc6] sm:$0xff]
      %v2730 = vld [vmem:[%s2716 + $0xce] sm:$0xff]
      %v2731 = vld [vmem:[%s2716 + $0xe6] sm:$0xff]
      %v2732 = vld [vmem:[%s2716 + $0xee] sm:$0xff]
      %v2733 = vld [vmem:[%s2716 + $0x106] sm:$0xff]
      %v2734 = vld [vmem:[%s2716 + $0x10e] sm:$0xff]
      %v2735 = vld [vmem:[%s2716 + $0x126] sm:$0xff]
      %v2736 = vld [vmem:[%s2716 + $0x12e] sm:$0xff]
      %v2737 = vld [vmem:[%s2716 + $0x146] sm:$0xff]
      %v2738 = vld [vmem:[%s2716 + $0x14e] sm:$0xff]
      %v2739 = vld [vmem:[%s2716 + $0x166] sm:$0xff]
      %v2740 = vld [vmem:[%s2716 + $0x16e] sm:$0xff]
      %v2741 = vld [vmem:[%s2716 + $0x186] sm:$0xff]
      %v2742 = vld [vmem:[%s2716 + $0x18e] sm:$0xff]
      %v2743 = vld [vmem:[%s2716 + $0x1a6] sm:$0xff]
      %v2744 = vld [vmem:[%s2716 + $0x1ae] sm:$0xff]
      %v2745 = vld [vmem:[%s2716 + $0x1c6] sm:$0xff]
      %v2746 = vld [vmem:[%s2716 + $0x1ce] sm:$0xff]
      %v2747 = vld [vmem:[%s2716 + $0x1e6] sm:$0xff]
      %v2748 = vld [vmem:[%s2716 + $0x1ee] sm:$0xff]
      %v2749 = vld [vmem:[%s2716 + $0x8] sm:$0xff]
      %v2750 = vld [vmem:[%s2716 + $0x10] sm:$0xff]
      %v2751 = vld [vmem:[%s2716 + $0x28] sm:$0xff]
      %v2752 = vld [vmem:[%s2716 + $0x30] sm:$0xff]
      %v2753 = vld [vmem:[%s2716 + $0x48] sm:$0xff]
      %v2754 = vld [vmem:[%s2716 + $0x50] sm:$0xff]
      %v2755 = vld [vmem:[%s2716 + $0x68] sm:$0xff]
      %v2756 = vld [vmem:[%s2716 + $0x70] sm:$0xff]
      %v2757 = vld [vmem:[%s2716 + $0x88] sm:$0xff]
      %v2758 = vld [vmem:[%s2716 + $0x90] sm:$0xff]
      %v2759 = vld [vmem:[%s2716 + $0xa8] sm:$0xff]
      %v2760 = vld [vmem:[%s2716 + $0xb0] sm:$0xff]
      %v2761 = vld [vmem:[%s2716 + $0xc8] sm:$0xff]
      %v2762 = vld [vmem:[%s2716 + $0xd0] sm:$0xff]
      %v2763 = vld [vmem:[%s2716 + $0xe8] sm:$0xff]
      %v2764 = vld [vmem:[%s2716 + $0xf0] sm:$0xff]
      %v2765 = vld [vmem:[%s2716 + $0x108] sm:$0xff]
      %v2766 = vld [vmem:[%s2716 + $0x110] sm:$0xff]
      %v2767 = vld [vmem:[%s2716 + $0x128] sm:$0xff]
      %v2768 = vld [vmem:[%s2716 + $0x130] sm:$0xff]
      %v2769 = vld [vmem:[%s2716 + $0x148] sm:$0xff]
      %v2770 = vld [vmem:[%s2716 + $0x150] sm:$0xff]
      %v2771 = vld [vmem:[%s2716 + $0x168] sm:$0xff]
      %v2772 = vld [vmem:[%s2716 + $0x170] sm:$0xff]
      %v2773 = vld [vmem:[%s2716 + $0x188] sm:$0xff]
      %v2774 = vld [vmem:[%s2716 + $0x190] sm:$0xff]
      %v2775 = vld [vmem:[%s2716 + $0x1a8] sm:$0xff]
      %v2776 = vld [vmem:[%s2716 + $0x1b0] sm:$0xff]
      %v2777 = vld [vmem:[%s2716 + $0x1c8] sm:$0xff]
      %v2778 = vld [vmem:[%s2716 + $0x1d0] sm:$0xff]
      %v2779 = vld [vmem:[%s2716 + $0x1e8] sm:$0xff]
      %v2780 = vld [vmem:[%s2716 + $0x1f0] sm:$0xff]
      %v2781 = vld [vmem:[%s2716 + $0xa] sm:$0xff]
      %v2782 = vld [vmem:[%s2716 + $0x12] sm:$0xff]
      %v2783 = vld [vmem:[%s2716 + $0x2a] sm:$0xff]
      %v2784 = vld [vmem:[%s2716 + $0x32] sm:$0xff]
      %v2785 = vld [vmem:[%s2716 + $0x4a] sm:$0xff]
      %v2786 = vld [vmem:[%s2716 + $0x52] sm:$0xff]
      %v2787 = vld [vmem:[%s2716 + $0x6a] sm:$0xff]
      %v2788 = vld [vmem:[%s2716 + $0x72] sm:$0xff]
      %v2789 = vld [vmem:[%s2716 + $0x8a] sm:$0xff]
      %v2790 = vld [vmem:[%s2716 + $0x92] sm:$0xff]
      %v2791 = vld [vmem:[%s2716 + $0xaa] sm:$0xff]
      %v2792 = vld [vmem:[%s2716 + $0xb2] sm:$0xff]
      %v2793 = vld [vmem:[%s2716 + $0xca] sm:$0xff]
      %v2794 = vld [vmem:[%s2716 + $0xd2] sm:$0xff]
      %v2795 = vld [vmem:[%s2716 + $0xea] sm:$0xff]
      %v2796 = vld [vmem:[%s2716 + $0xf2] sm:$0xff]
      %v2797 = vld [vmem:[%s2716 + $0x10a] sm:$0xff]
      %v2798 = vld [vmem:[%s2716 + $0x112] sm:$0xff]
      %v2799 = vld [vmem:[%s2716 + $0x12a] sm:$0xff]
      %v2800 = vld [vmem:[%s2716 + $0x132] sm:$0xff]
      %v2801 = vld [vmem:[%s2716 + $0x14a] sm:$0xff]
      %v2802 = vld [vmem:[%s2716 + $0x152] sm:$0xff]
      %v2803 = vld [vmem:[%s2716 + $0x16a] sm:$0xff]
      %v2804 = vld [vmem:[%s2716 + $0x172] sm:$0xff]
      %v2805 = vld [vmem:[%s2716 + $0x18a] sm:$0xff]
      %v2806 = vld [vmem:[%s2716 + $0x192] sm:$0xff]
      %v2807 = vld [vmem:[%s2716 + $0x1aa] sm:$0xff]
      %v2808 = vld [vmem:[%s2716 + $0x1b2] sm:$0xff]
      %v2809 = vld [vmem:[%s2716 + $0x1ca] sm:$0xff]
      %v2810 = vld [vmem:[%s2716 + $0x1d2] sm:$0xff]
      %v2811 = vld [vmem:[%s2716 + $0x1ea] sm:$0xff]
      %v2812 = vld [vmem:[%s2716 + $0x1f2] sm:$0xff]
      %2845 = vrot.lane.b32.xlu0 %v2556, 4
      %v2846 = vpop.permute.xlu0 %2845
      %2847 = vrot.lane.b32.xlu0 %v2557, 4
      %v2848 = vpop.permute.xlu0 %2847
      %2849 = vrot.lane.b32.xlu0 %v2558, 4
      %v2850 = vpop.permute.xlu0 %2849
      %2851 = vrot.lane.b32.xlu0 %v2559, 4
      %v2852 = vpop.permute.xlu0 %2851
      %2853 = vrot.lane.b32.xlu0 %v2560, 4
      %v2854 = vpop.permute.xlu0 %2853
      %2855 = vrot.lane.b32.xlu0 %v2561, 4
      %v2856 = vpop.permute.xlu0 %2855
      %2857 = vrot.lane.b32.xlu0 %v2562, 4
      %v2858 = vpop.permute.xlu0 %2857
      %2859 = vrot.lane.b32.xlu0 %v2563, 4
      %v2860 = vpop.permute.xlu0 %2859
      %2861 = vrot.lane.b32.xlu0 %v2564, 4
      %v2862 = vpop.permute.xlu0 %2861
      %2863 = vrot.lane.b32.xlu0 %v2565, 4
      %v2864 = vpop.permute.xlu0 %2863
      %2865 = vrot.lane.b32.xlu0 %v2566, 4
      %v2866 = vpop.permute.xlu0 %2865
      %2867 = vrot.lane.b32.xlu0 %v2567, 4
      %v2868 = vpop.permute.xlu0 %2867
      %2869 = vrot.lane.b32.xlu0 %v2568, 4
      %v2870 = vpop.permute.xlu0 %2869
      %2871 = vrot.lane.b32.xlu0 %v2569, 4
      %v2872 = vpop.permute.xlu0 %2871
      %2873 = vrot.lane.b32.xlu0 %v2570, 4
      %v2874 = vpop.permute.xlu0 %2873
      %2875 = vrot.lane.b32.xlu0 %v2571, 4
      %v2876 = vpop.permute.xlu0 %2875
      %2877 = vrot.lane.b32.xlu0 %v2572, 4
      %v2878 = vpop.permute.xlu0 %2877
      %2879 = vrot.lane.b32.xlu0 %v2573, 4
      %v2880 = vpop.permute.xlu0 %2879
      %2881 = vrot.lane.b32.xlu0 %v2574, 4
      %v2882 = vpop.permute.xlu0 %2881
      %2883 = vrot.lane.b32.xlu0 %v2575, 4
      %v2884 = vpop.permute.xlu0 %2883
      %2885 = vrot.lane.b32.xlu0 %v2576, 4
      %v2886 = vpop.permute.xlu0 %2885
      %2887 = vrot.lane.b32.xlu0 %v2577, 4
      %v2888 = vpop.permute.xlu0 %2887
      %2889 = vrot.lane.b32.xlu0 %v2578, 4
      %v2890 = vpop.permute.xlu0 %2889
      %2891 = vrot.lane.b32.xlu0 %v2579, 4
      %v2892 = vpop.permute.xlu0 %2891
      %2893 = vrot.lane.b32.xlu0 %v2580, 4
      %v2894 = vpop.permute.xlu0 %2893
      %2895 = vrot.lane.b32.xlu0 %v2581, 4
      %v2896 = vpop.permute.xlu0 %2895
      %2897 = vrot.lane.b32.xlu0 %v2582, 4
      %v2898 = vpop.permute.xlu0 %2897
      %2899 = vrot.lane.b32.xlu0 %v2583, 4
      %v2900 = vpop.permute.xlu0 %2899
      %2901 = vrot.lane.b32.xlu0 %v2584, 4
      %v2902 = vpop.permute.xlu0 %2901
      %2903 = vrot.lane.b32.xlu0 %v2585, 4
      %v2904 = vpop.permute.xlu0 %2903
      %2905 = vrot.lane.b32.xlu0 %v2586, 4
      %v2906 = vpop.permute.xlu0 %2905
      %2907 = vrot.lane.b32.xlu0 %v2587, 4
      %v2908 = vpop.permute.xlu0 %2907
      %2973 = vrot.lane.b32.xlu0 %v2588, 8
      %v2974 = vpop.permute.xlu0 %2973
      %2975 = vrot.lane.b32.xlu0 %v2589, 8
      %v2976 = vpop.permute.xlu0 %2975
      %2977 = vrot.lane.b32.xlu0 %v2590, 8
      %v2978 = vpop.permute.xlu0 %2977
      %2979 = vrot.lane.b32.xlu0 %v2591, 8
      %v2980 = vpop.permute.xlu0 %2979
      %2981 = vrot.lane.b32.xlu0 %v2592, 8
      %v2982 = vpop.permute.xlu0 %2981
      %2983 = vrot.lane.b32.xlu0 %v2593, 8
      %v2984 = vpop.permute.xlu0 %2983
      %2985 = vrot.lane.b32.xlu0 %v2594, 8
      %v2986 = vpop.permute.xlu0 %2985
      %2987 = vrot.lane.b32.xlu0 %v2595, 8
      %v2988 = vpop.permute.xlu0 %2987
      %2989 = vrot.lane.b32.xlu0 %v2596, 8
      %v2990 = vpop.permute.xlu0 %2989
      %2991 = vrot.lane.b32.xlu0 %v2597, 8
      %v2992 = vpop.permute.xlu0 %2991
      %2993 = vrot.lane.b32.xlu0 %v2598, 8
      %v2994 = vpop.permute.xlu0 %2993
      %2995 = vrot.lane.b32.xlu0 %v2599, 8
      %v2996 = vpop.permute.xlu0 %2995
      %2997 = vrot.lane.b32.xlu0 %v2600, 8
      %v2998 = vpop.permute.xlu0 %2997
      %2999 = vrot.lane.b32.xlu0 %v2601, 8
      %v3000 = vpop.permute.xlu0 %2999
      %3001 = vrot.lane.b32.xlu0 %v2602, 8
      %v3002 = vpop.permute.xlu0 %3001
      %3003 = vrot.lane.b32.xlu0 %v2603, 8
      %v3004 = vpop.permute.xlu0 %3003
      %3005 = vrot.lane.b32.xlu0 %v2604, 8
      %v3006 = vpop.permute.xlu0 %3005
      %3007 = vrot.lane.b32.xlu0 %v2605, 8
      %v3008 = vpop.permute.xlu0 %3007
      %3009 = vrot.lane.b32.xlu0 %v2606, 8
      %v3010 = vpop.permute.xlu0 %3009
      %3011 = vrot.lane.b32.xlu0 %v2607, 8
      %v3012 = vpop.permute.xlu0 %3011
      %3013 = vrot.lane.b32.xlu0 %v2608, 8
      %v3014 = vpop.permute.xlu0 %3013
      %3015 = vrot.lane.b32.xlu0 %v2609, 8
      %v3016 = vpop.permute.xlu0 %3015
      %3017 = vrot.lane.b32.xlu0 %v2610, 8
      %v3018 = vpop.permute.xlu0 %3017
      %3019 = vrot.lane.b32.xlu0 %v2611, 8
      %v3020 = vpop.permute.xlu0 %3019
      %3021 = vrot.lane.b32.xlu0 %v2612, 8
      %v3022 = vpop.permute.xlu0 %3021
      %3023 = vrot.lane.b32.xlu0 %v2613, 8
      %v3024 = vpop.permute.xlu0 %3023
      %3025 = vrot.lane.b32.xlu0 %v2614, 8
      %v3026 = vpop.permute.xlu0 %3025
      %3027 = vrot.lane.b32.xlu0 %v2615, 8
      %v3028 = vpop.permute.xlu0 %3027
      %3029 = vrot.lane.b32.xlu0 %v2616, 8
      %v3030 = vpop.permute.xlu0 %3029
      %3031 = vrot.lane.b32.xlu0 %v2617, 8
      %v3032 = vpop.permute.xlu0 %3031
      %3033 = vrot.lane.b32.xlu0 %v2618, 8
      %v3034 = vpop.permute.xlu0 %3033
      %3035 = vrot.lane.b32.xlu0 %v2619, 8
      %v3036 = vpop.permute.xlu0 %3035
      %3101 = vrot.lane.b32.xlu0 %v2620, 12
      %v3102 = vpop.permute.xlu0 %3101
      %3103 = vrot.lane.b32.xlu0 %v2621, 12
      %v3104 = vpop.permute.xlu0 %3103
      %3105 = vrot.lane.b32.xlu0 %v2622, 12
      %v3106 = vpop.permute.xlu0 %3105
      %3107 = vrot.lane.b32.xlu0 %v2623, 12
      %v3108 = vpop.permute.xlu0 %3107
      %3109 = vrot.lane.b32.xlu0 %v2624, 12
      %v3110 = vpop.permute.xlu0 %3109
      %3111 = vrot.lane.b32.xlu0 %v2625, 12
      %v3112 = vpop.permute.xlu0 %3111
      %3113 = vrot.lane.b32.xlu0 %v2626, 12
      %v3114 = vpop.permute.xlu0 %3113
      %3115 = vrot.lane.b32.xlu0 %v2627, 12
      %v3116 = vpop.permute.xlu0 %3115
      %3117 = vrot.lane.b32.xlu0 %v2628, 12
      %v3118 = vpop.permute.xlu0 %3117
      %3119 = vrot.lane.b32.xlu0 %v2629, 12
      %v3120 = vpop.permute.xlu0 %3119
      %3121 = vrot.lane.b32.xlu0 %v2630, 12
      %v3122 = vpop.permute.xlu0 %3121
      %3123 = vrot.lane.b32.xlu0 %v2631, 12
      %v3124 = vpop.permute.xlu0 %3123
      %3125 = vrot.lane.b32.xlu0 %v2632, 12
      %v3126 = vpop.permute.xlu0 %3125
      %3127 = vrot.lane.b32.xlu0 %v2633, 12
      %v3128 = vpop.permute.xlu0 %3127
      %3129 = vrot.lane.b32.xlu0 %v2634, 12
      %v3130 = vpop.permute.xlu0 %3129
      %3131 = vrot.lane.b32.xlu0 %v2635, 12
      %v3132 = vpop.permute.xlu0 %3131
      %3133 = vrot.lane.b32.xlu0 %v2636, 12
      %v3134 = vpop.permute.xlu0 %3133
      %3135 = vrot.lane.b32.xlu0 %v2637, 12
      %v3136 = vpop.permute.xlu0 %3135
      %3137 = vrot.lane.b32.xlu0 %v2638, 12
      %v3138 = vpop.permute.xlu0 %3137
      %3139 = vrot.lane.b32.xlu0 %v2639, 12
      %v3140 = vpop.permute.xlu0 %3139
      %3141 = vrot.lane.b32.xlu0 %v2640, 12
      %v3142 = vpop.permute.xlu0 %3141
      %3143 = vrot.lane.b32.xlu0 %v2641, 12
      %v3144 = vpop.permute.xlu0 %3143
      %3145 = vrot.lane.b32.xlu0 %v2642, 12
      %v3146 = vpop.permute.xlu0 %3145
      %3147 = vrot.lane.b32.xlu0 %v2643, 12
      %v3148 = vpop.permute.xlu0 %3147
      %3149 = vrot.lane.b32.xlu0 %v2644, 12
      %v3150 = vpop.permute.xlu0 %3149
      %3151 = vrot.lane.b32.xlu0 %v2645, 12
      %v3152 = vpop.permute.xlu0 %3151
      %3153 = vrot.lane.b32.xlu0 %v2646, 12
      %v3154 = vpop.permute.xlu0 %3153
      %3155 = vrot.lane.b32.xlu0 %v2647, 12
      %v3156 = vpop.permute.xlu0 %3155
      %3157 = vrot.lane.b32.xlu0 %v2648, 12
      %v3158 = vpop.permute.xlu0 %3157
      %3159 = vrot.lane.b32.xlu0 %v2649, 12
      %v3160 = vpop.permute.xlu0 %3159
      %3161 = vrot.lane.b32.xlu0 %v2650, 12
      %v3162 = vpop.permute.xlu0 %3161
      %3163 = vrot.lane.b32.xlu0 %v2651, 12
      %v3164 = vpop.permute.xlu0 %3163
      %3229 = vrot.lane.b32.xlu0 %v2652, 16
      %v3230 = vpop.permute.xlu0 %3229
      %3231 = vrot.lane.b32.xlu0 %v2653, 16
      %v3232 = vpop.permute.xlu0 %3231
      %3233 = vrot.lane.b32.xlu0 %v2654, 16
      %v3234 = vpop.permute.xlu0 %3233
      %3235 = vrot.lane.b32.xlu0 %v2655, 16
      %v3236 = vpop.permute.xlu0 %3235
      %3237 = vrot.lane.b32.xlu0 %v2656, 16
      %v3238 = vpop.permute.xlu0 %3237
      %3239 = vrot.lane.b32.xlu0 %v2657, 16
      %v3240 = vpop.permute.xlu0 %3239
      %3241 = vrot.lane.b32.xlu0 %v2658, 16
      %v3242 = vpop.permute.xlu0 %3241
      %3243 = vrot.lane.b32.xlu0 %v2659, 16
      %v3244 = vpop.permute.xlu0 %3243
      %3245 = vrot.lane.b32.xlu0 %v2660, 16
      %v3246 = vpop.permute.xlu0 %3245
      %3247 = vrot.lane.b32.xlu0 %v2661, 16
      %v3248 = vpop.permute.xlu0 %3247
      %3249 = vrot.lane.b32.xlu0 %v2662, 16
      %v3250 = vpop.permute.xlu0 %3249
      %3251 = vrot.lane.b32.xlu0 %v2663, 16
      %v3252 = vpop.permute.xlu0 %3251
      %3253 = vrot.lane.b32.xlu0 %v2664, 16
      %v3254 = vpop.permute.xlu0 %3253
      %3255 = vrot.lane.b32.xlu0 %v2665, 16
      %v3256 = vpop.permute.xlu0 %3255
      %3257 = vrot.lane.b32.xlu0 %v2666, 16
      %v3258 = vpop.permute.xlu0 %3257
      %3259 = vrot.lane.b32.xlu0 %v2667, 16
      %v3260 = vpop.permute.xlu0 %3259
      %3261 = vrot.lane.b32.xlu0 %v2668, 16
      %v3262 = vpop.permute.xlu0 %3261
      %3263 = vrot.lane.b32.xlu0 %v2669, 16
      %v3264 = vpop.permute.xlu0 %3263
      %3265 = vrot.lane.b32.xlu0 %v2670, 16
      %v3266 = vpop.permute.xlu0 %3265
      %3267 = vrot.lane.b32.xlu0 %v2671, 16
      %v3268 = vpop.permute.xlu0 %3267
      %3269 = vrot.lane.b32.xlu0 %v2672, 16
      %v3270 = vpop.permute.xlu0 %3269
      %3271 = vrot.lane.b32.xlu0 %v2673, 16
      %v3272 = vpop.permute.xlu0 %3271
      %3273 = vrot.lane.b32.xlu0 %v2674, 16
      %v3274 = vpop.permute.xlu0 %3273
      %3275 = vrot.lane.b32.xlu0 %v2675, 16
      %v3276 = vpop.permute.xlu0 %3275
      %3277 = vrot.lane.b32.xlu0 %v2676, 16
      %v3278 = vpop.permute.xlu0 %3277
      %3279 = vrot.lane.b32.xlu0 %v2677, 16
      %v3280 = vpop.permute.xlu0 %3279
      %3281 = vrot.lane.b32.xlu0 %v2678, 16
      %v3282 = vpop.permute.xlu0 %3281
      %3283 = vrot.lane.b32.xlu0 %v2679, 16
      %v3284 = vpop.permute.xlu0 %3283
      %3285 = vrot.lane.b32.xlu0 %v2680, 16
      %v3286 = vpop.permute.xlu0 %3285
      %3287 = vrot.lane.b32.xlu0 %v2681, 16
      %v3288 = vpop.permute.xlu0 %3287
      %3289 = vrot.lane.b32.xlu0 %v2682, 16
      %v3290 = vpop.permute.xlu0 %3289
      %3291 = vrot.lane.b32.xlu0 %v2683, 16
      %v3292 = vpop.permute.xlu0 %3291
      %3357 = vrot.lane.b32.xlu0 %v2684, 20
      %v3358 = vpop.permute.xlu0 %3357
      %3359 = vrot.lane.b32.xlu0 %v2685, 20
      %v3360 = vpop.permute.xlu0 %3359
      %3361 = vrot.lane.b32.xlu0 %v2686, 20
      %v3362 = vpop.permute.xlu0 %3361
      %3363 = vrot.lane.b32.xlu0 %v2687, 20
      %v3364 = vpop.permute.xlu0 %3363
      %3365 = vrot.lane.b32.xlu0 %v2688, 20
      %v3366 = vpop.permute.xlu0 %3365
      %3367 = vrot.lane.b32.xlu0 %v2689, 20
      %v3368 = vpop.permute.xlu0 %3367
      %3369 = vrot.lane.b32.xlu0 %v2690, 20
      %v3370 = vpop.permute.xlu0 %3369
      %3371 = vrot.lane.b32.xlu0 %v2691, 20
      %v3372 = vpop.permute.xlu0 %3371
      %3373 = vrot.lane.b32.xlu0 %v2692, 20
      %v3374 = vpop.permute.xlu0 %3373
      %3375 = vrot.lane.b32.xlu0 %v2693, 20
      %v3376 = vpop.permute.xlu0 %3375
      %3377 = vrot.lane.b32.xlu0 %v2694, 20
      %v3378 = vpop.permute.xlu0 %3377
      %3379 = vrot.lane.b32.xlu0 %v2695, 20
      %v3380 = vpop.permute.xlu0 %3379
      %3381 = vrot.lane.b32.xlu0 %v2696, 20
      %v3382 = vpop.permute.xlu0 %3381
      %3383 = vrot.lane.b32.xlu0 %v2697, 20
      %v3384 = vpop.permute.xlu0 %3383
      %3385 = vrot.lane.b32.xlu0 %v2698, 20
      %v3386 = vpop.permute.xlu0 %3385
      %3387 = vrot.lane.b32.xlu0 %v2699, 20
      %v3388 = vpop.permute.xlu0 %3387
      %3389 = vrot.lane.b32.xlu0 %v2700, 20
      %v3390 = vpop.permute.xlu0 %3389
      %3391 = vrot.lane.b32.xlu0 %v2701, 20
      %v3392 = vpop.permute.xlu0 %3391
      %3393 = vrot.lane.b32.xlu0 %v2702, 20
      %v3394 = vpop.permute.xlu0 %3393
      %3395 = vrot.lane.b32.xlu0 %v2703, 20
      %v3396 = vpop.permute.xlu0 %3395
      %3397 = vrot.lane.b32.xlu0 %v2704, 20
      %v3398 = vpop.permute.xlu0 %3397
      %3399 = vrot.lane.b32.xlu0 %v2705, 20
      %v3400 = vpop.permute.xlu0 %3399
      %3401 = vrot.lane.b32.xlu0 %v2706, 20
      %v3402 = vpop.permute.xlu0 %3401
      %3403 = vrot.lane.b32.xlu0 %v2707, 20
      %v3404 = vpop.permute.xlu0 %3403
      %3405 = vrot.lane.b32.xlu0 %v2708, 20
      %v3406 = vpop.permute.xlu0 %3405
      %3407 = vrot.lane.b32.xlu0 %v2709, 20
      %v3408 = vpop.permute.xlu0 %3407
      %3409 = vrot.lane.b32.xlu0 %v2710, 20
      %v3410 = vpop.permute.xlu0 %3409
      %3411 = vrot.lane.b32.xlu0 %v2711, 20
      %v3412 = vpop.permute.xlu0 %3411
      %3413 = vrot.lane.b32.xlu0 %v2712, 20
      %v3414 = vpop.permute.xlu0 %3413
      %3415 = vrot.lane.b32.xlu0 %v2713, 20
      %v3416 = vpop.permute.xlu0 %3415
      %3417 = vrot.lane.b32.xlu0 %v2714, 20
      %v3418 = vpop.permute.xlu0 %3417
      %3419 = vrot.lane.b32.xlu0 %v2715, 20
      %v3420 = vpop.permute.xlu0 %3419
      %3485 = vrot.lane.b32.xlu0 %v2717, 24
      %v3486 = vpop.permute.xlu0 %3485
      %3487 = vrot.lane.b32.xlu0 %v2718, 24
      %v3488 = vpop.permute.xlu0 %3487
      %3489 = vrot.lane.b32.xlu0 %v2719, 24
      %v3490 = vpop.permute.xlu0 %3489
      %3491 = vrot.lane.b32.xlu0 %v2720, 24
      %v3492 = vpop.permute.xlu0 %3491
      %3493 = vrot.lane.b32.xlu0 %v2721, 24
      %v3494 = vpop.permute.xlu0 %3493
      %3495 = vrot.lane.b32.xlu0 %v2722, 24
      %v3496 = vpop.permute.xlu0 %3495
      %3497 = vrot.lane.b32.xlu0 %v2723, 24
      %v3498 = vpop.permute.xlu0 %3497
      %3499 = vrot.lane.b32.xlu0 %v2724, 24
      %v3500 = vpop.permute.xlu0 %3499
      %3501 = vrot.lane.b32.xlu0 %v2725, 24
      %v3502 = vpop.permute.xlu0 %3501
      %3503 = vrot.lane.b32.xlu0 %v2726, 24
      %v3504 = vpop.permute.xlu0 %3503
      %3505 = vrot.lane.b32.xlu0 %v2727, 24
      %v3506 = vpop.permute.xlu0 %3505
      %3507 = vrot.lane.b32.xlu0 %v2728, 24
      %v3508 = vpop.permute.xlu0 %3507
      %3509 = vrot.lane.b32.xlu0 %v2729, 24
      %v3510 = vpop.permute.xlu0 %3509
      %3511 = vrot.lane.b32.xlu0 %v2730, 24
      %v3512 = vpop.permute.xlu0 %3511
      %3513 = vrot.lane.b32.xlu0 %v2731, 24
      %v3514 = vpop.permute.xlu0 %3513
      %3515 = vrot.lane.b32.xlu0 %v2732, 24
      %v3516 = vpop.permute.xlu0 %3515
      %3517 = vrot.lane.b32.xlu0 %v2733, 24
      %v3518 = vpop.permute.xlu0 %3517
      %3519 = vrot.lane.b32.xlu0 %v2734, 24
      %v3520 = vpop.permute.xlu0 %3519
      %3521 = vrot.lane.b32.xlu0 %v2735, 24
      %v3522 = vpop.permute.xlu0 %3521
      %3523 = vrot.lane.b32.xlu0 %v2736, 24
      %v3524 = vpop.permute.xlu0 %3523
      %3525 = vrot.lane.b32.xlu0 %v2737, 24
      %v3526 = vpop.permute.xlu0 %3525
      %3527 = vrot.lane.b32.xlu0 %v2738, 24
      %v3528 = vpop.permute.xlu0 %3527
      %3529 = vrot.lane.b32.xlu0 %v2739, 24
      %v3530 = vpop.permute.xlu0 %3529
      %3531 = vrot.lane.b32.xlu0 %v2740, 24
      %v3532 = vpop.permute.xlu0 %3531
      %3533 = vrot.lane.b32.xlu0 %v2741, 24
      %v3534 = vpop.permute.xlu0 %3533
      %3535 = vrot.lane.b32.xlu0 %v2742, 24
      %v3536 = vpop.permute.xlu0 %3535
      %3537 = vrot.lane.b32.xlu0 %v2743, 24
      %v3538 = vpop.permute.xlu0 %3537
      %3539 = vrot.lane.b32.xlu0 %v2744, 24
      %v3540 = vpop.permute.xlu0 %3539
      %3541 = vrot.lane.b32.xlu0 %v2745, 24
      %v3542 = vpop.permute.xlu0 %3541
      %3543 = vrot.lane.b32.xlu0 %v2746, 24
      %v3544 = vpop.permute.xlu0 %3543
      %3545 = vrot.lane.b32.xlu0 %v2747, 24
      %v3546 = vpop.permute.xlu0 %3545
      %3547 = vrot.lane.b32.xlu0 %v2748, 24
      %v3548 = vpop.permute.xlu0 %3547
      %3613 = vrot.lane.b32.xlu0 %v2749, 28
      %v3614 = vpop.permute.xlu0 %3613
      %3615 = vrot.lane.b32.xlu0 %v2750, 28
      %v3616 = vpop.permute.xlu0 %3615
      %3617 = vrot.lane.b32.xlu0 %v2751, 28
      %v3618 = vpop.permute.xlu0 %3617
      %3619 = vrot.lane.b32.xlu0 %v2752, 28
      %v3620 = vpop.permute.xlu0 %3619
      %3621 = vrot.lane.b32.xlu0 %v2753, 28
      %v3622 = vpop.permute.xlu0 %3621
      %3623 = vrot.lane.b32.xlu0 %v2754, 28
      %v3624 = vpop.permute.xlu0 %3623
      %3625 = vrot.lane.b32.xlu0 %v2755, 28
      %v3626 = vpop.permute.xlu0 %3625
      %3627 = vrot.lane.b32.xlu0 %v2756, 28
      %v3628 = vpop.permute.xlu0 %3627
      %3629 = vrot.lane.b32.xlu0 %v2757, 28
      %v3630 = vpop.permute.xlu0 %3629
      %3631 = vrot.lane.b32.xlu0 %v2758, 28
      %v3632 = vpop.permute.xlu0 %3631
      %3633 = vrot.lane.b32.xlu0 %v2759, 28
      %v3634 = vpop.permute.xlu0 %3633
      %3635 = vrot.lane.b32.xlu0 %v2760, 28
      %v3636 = vpop.permute.xlu0 %3635
      %3637 = vrot.lane.b32.xlu0 %v2761, 28
      %v3638 = vpop.permute.xlu0 %3637
      %3639 = vrot.lane.b32.xlu0 %v2762, 28
      %v3640 = vpop.permute.xlu0 %3639
      %3641 = vrot.lane.b32.xlu0 %v2763, 28
      %v3642 = vpop.permute.xlu0 %3641
      %3643 = vrot.lane.b32.xlu0 %v2764, 28
      %v3644 = vpop.permute.xlu0 %3643
      %3645 = vrot.lane.b32.xlu0 %v2765, 28
      %v3646 = vpop.permute.xlu0 %3645
      %3647 = vrot.lane.b32.xlu0 %v2766, 28
      %v3648 = vpop.permute.xlu0 %3647
      %3649 = vrot.lane.b32.xlu0 %v2767, 28
      %v3650 = vpop.permute.xlu0 %3649
      %3651 = vrot.lane.b32.xlu0 %v2768, 28
      %v3652 = vpop.permute.xlu0 %3651
      %3653 = vrot.lane.b32.xlu0 %v2769, 28
      %v3654 = vpop.permute.xlu0 %3653
      %3655 = vrot.lane.b32.xlu0 %v2770, 28
      %v3656 = vpop.permute.xlu0 %3655
      %3657 = vrot.lane.b32.xlu0 %v2771, 28
      %v3658 = vpop.permute.xlu0 %3657
      %3659 = vrot.lane.b32.xlu0 %v2772, 28
      %v3660 = vpop.permute.xlu0 %3659
      %3661 = vrot.lane.b32.xlu0 %v2773, 28
      %v3662 = vpop.permute.xlu0 %3661
      %3663 = vrot.lane.b32.xlu0 %v2774, 28
      %v3664 = vpop.permute.xlu0 %3663
      %3665 = vrot.lane.b32.xlu0 %v2775, 28
      %v3666 = vpop.permute.xlu0 %3665
      %3667 = vrot.lane.b32.xlu0 %v2776, 28
      %v3668 = vpop.permute.xlu0 %3667
      %3669 = vrot.lane.b32.xlu0 %v2777, 28
      %v3670 = vpop.permute.xlu0 %3669
      %3671 = vrot.lane.b32.xlu0 %v2778, 28
      %v3672 = vpop.permute.xlu0 %3671
      %3673 = vrot.lane.b32.xlu0 %v2779, 28
      %v3674 = vpop.permute.xlu0 %3673
      %3675 = vrot.lane.b32.xlu0 %v2780, 28
      %v3676 = vpop.permute.xlu0 %3675
      %3741 = vrot.lane.b32.xlu0 %v2781, 32
      %v3742 = vpop.permute.xlu0 %3741
      %3743 = vrot.lane.b32.xlu0 %v2782, 32
      %v3744 = vpop.permute.xlu0 %3743
      %3745 = vrot.lane.b32.xlu0 %v2783, 32
      %v3746 = vpop.permute.xlu0 %3745
      %3747 = vrot.lane.b32.xlu0 %v2784, 32
      %v3748 = vpop.permute.xlu0 %3747
      %3749 = vrot.lane.b32.xlu0 %v2785, 32
      %v3750 = vpop.permute.xlu0 %3749
      %3751 = vrot.lane.b32.xlu0 %v2786, 32
      %v3752 = vpop.permute.xlu0 %3751
      %3753 = vrot.lane.b32.xlu0 %v2787, 32
      %v3754 = vpop.permute.xlu0 %3753
      %3755 = vrot.lane.b32.xlu0 %v2788, 32
      %v3756 = vpop.permute.xlu0 %3755
      %3757 = vrot.lane.b32.xlu0 %v2789, 32
      %v3758 = vpop.permute.xlu0 %3757
      %3759 = vrot.lane.b32.xlu0 %v2790, 32
      %v3760 = vpop.permute.xlu0 %3759
      %3761 = vrot.lane.b32.xlu0 %v2791, 32
      %v3762 = vpop.permute.xlu0 %3761
      %3763 = vrot.lane.b32.xlu0 %v2792, 32
      %v3764 = vpop.permute.xlu0 %3763
      %3765 = vrot.lane.b32.xlu0 %v2793, 32
      %v3766 = vpop.permute.xlu0 %3765
      %3767 = vrot.lane.b32.xlu0 %v2794, 32
      %v3768 = vpop.permute.xlu0 %3767
      %3769 = vrot.lane.b32.xlu0 %v2795, 32
      %v3770 = vpop.permute.xlu0 %3769
      %3771 = vrot.lane.b32.xlu0 %v2796, 32
      %v3772 = vpop.permute.xlu0 %3771
      %3773 = vrot.lane.b32.xlu0 %v2797, 32
      %v3774 = vpop.permute.xlu0 %3773
      %3775 = vrot.lane.b32.xlu0 %v2798, 32
      %v3776 = vpop.permute.xlu0 %3775
      %3777 = vrot.lane.b32.xlu0 %v2799, 32
      %v3778 = vpop.permute.xlu0 %3777
      %3779 = vrot.lane.b32.xlu0 %v2800, 32
      %v3780 = vpop.permute.xlu0 %3779
      %3781 = vrot.lane.b32.xlu0 %v2801, 32
      %v3782 = vpop.permute.xlu0 %3781
      %3783 = vrot.lane.b32.xlu0 %v2802, 32
      %v3784 = vpop.permute.xlu0 %3783
      %3785 = vrot.lane.b32.xlu0 %v2803, 32
      %v3786 = vpop.permute.xlu0 %3785
      %3787 = vrot.lane.b32.xlu0 %v2804, 32
      %v3788 = vpop.permute.xlu0 %3787
      %3789 = vrot.lane.b32.xlu0 %v2805, 32
      %v3790 = vpop.permute.xlu0 %3789
      %3791 = vrot.lane.b32.xlu0 %v2806, 32
      %v3792 = vpop.permute.xlu0 %3791
      %3793 = vrot.lane.b32.xlu0 %v2807, 32
      %v3794 = vpop.permute.xlu0 %3793
      %3795 = vrot.lane.b32.xlu0 %v2808, 32
      %v3796 = vpop.permute.xlu0 %3795
      %3797 = vrot.lane.b32.xlu0 %v2809, 32
      %v3798 = vpop.permute.xlu0 %3797
      %3799 = vrot.lane.b32.xlu0 %v2810, 32
      %v3800 = vpop.permute.xlu0 %3799
      %3801 = vrot.lane.b32.xlu0 %v2811, 32
      %v3802 = vpop.permute.xlu0 %3801
      %3803 = vrot.lane.b32.xlu0 %v2812, 32
      %v3804 = vpop.permute.xlu0 %3803
      %v3837 = vsel %vm419, %v2524, %v2846
      %v3838 = vsel %vm419, %v2525, %v2848
      %v3839 = vsel %vm419, %v2526, %v2850
      %v3840 = vsel %vm419, %v2527, %v2852
      %v3841 = vsel %vm419, %v2528, %v2854
      %v3842 = vsel %vm419, %v2529, %v2856
      %v3843 = vsel %vm419, %v2530, %v2858
      %v3844 = vsel %vm419, %v2531, %v2860
      %v3845 = vsel %vm419, %v2532, %v2862
      %v3846 = vsel %vm419, %v2533, %v2864
      %v3847 = vsel %vm419, %v2534, %v2866
      %v3848 = vsel %vm419, %v2535, %v2868
      %v3849 = vsel %vm419, %v2536, %v2870
      %v3850 = vsel %vm419, %v2537, %v2872
      %v3851 = vsel %vm419, %v2538, %v2874
      %v3852 = vsel %vm419, %v2539, %v2876
      %v3853 = vsel %vm419, %v2540, %v2878
      %v3854 = vsel %vm419, %v2541, %v2880
      %v3855 = vsel %vm419, %v2542, %v2882
      %v3856 = vsel %vm419, %v2543, %v2884
      %v3857 = vsel %vm419, %v2544, %v2886
      %v3858 = vsel %vm419, %v2545, %v2888
      %v3859 = vsel %vm419, %v2546, %v2890
      %v3860 = vsel %vm419, %v2547, %v2892
      %v3861 = vsel %vm419, %v2548, %v2894
      %v3862 = vsel %vm419, %v2549, %v2896
      %v3863 = vsel %vm419, %v2550, %v2898
      %v3864 = vsel %vm419, %v2551, %v2900
      %v3865 = vsel %vm419, %v2552, %v2902
      %v3866 = vsel %vm419, %v2553, %v2904
      %v3867 = vsel %vm419, %v2554, %v2906
      %v3868 = vsel %vm419, %v2555, %v2908
      %v3869 = vsel %vm1840, %v3837, %v2974
      %v3870 = vsel %vm1840, %v3838, %v2976
      %v3871 = vsel %vm1840, %v3839, %v2978
      %v3872 = vsel %vm1840, %v3840, %v2980
      %v3873 = vsel %vm1840, %v3841, %v2982
      %v3874 = vsel %vm1840, %v3842, %v2984
      %v3875 = vsel %vm1840, %v3843, %v2986
      %v3876 = vsel %vm1840, %v3844, %v2988
      %v3877 = vsel %vm1840, %v3845, %v2990
      %v3878 = vsel %vm1840, %v3846, %v2992
      %v3879 = vsel %vm1840, %v3847, %v2994
      %v3880 = vsel %vm1840, %v3848, %v2996
      %v3881 = vsel %vm1840, %v3849, %v2998
      %v3882 = vsel %vm1840, %v3850, %v3000
      %v3883 = vsel %vm1840, %v3851, %v3002
      %v3884 = vsel %vm1840, %v3852, %v3004
      %v3885 = vsel %vm1840, %v3853, %v3006
      %v3886 = vsel %vm1840, %v3854, %v3008
      %v3887 = vsel %vm1840, %v3855, %v3010
      %v3888 = vsel %vm1840, %v3856, %v3012
      %v3889 = vsel %vm1840, %v3857, %v3014
      %v3890 = vsel %vm1840, %v3858, %v3016
      %v3891 = vsel %vm1840, %v3859, %v3018
      %v3892 = vsel %vm1840, %v3860, %v3020
      %v3893 = vsel %vm1840, %v3861, %v3022
      %v3894 = vsel %vm1840, %v3862, %v3024
      %v3895 = vsel %vm1840, %v3863, %v3026
      %v3896 = vsel %vm1840, %v3864, %v3028
      %v3897 = vsel %vm1840, %v3865, %v3030
      %v3898 = vsel %vm1840, %v3866, %v3032
      %v3899 = vsel %vm1840, %v3867, %v3034
      %v3900 = vsel %vm1840, %v3868, %v3036
      %v3901 = vsel %vm1873, %v3869, %v3102
      %v3902 = vsel %vm1873, %v3870, %v3104
      %v3903 = vsel %vm1873, %v3871, %v3106
      %v3904 = vsel %vm1873, %v3872, %v3108
      %v3905 = vsel %vm1873, %v3873, %v3110
      %v3906 = vsel %vm1873, %v3874, %v3112
      %v3907 = vsel %vm1873, %v3875, %v3114
      %v3908 = vsel %vm1873, %v3876, %v3116
      %v3909 = vsel %vm1873, %v3877, %v3118
      %v3910 = vsel %vm1873, %v3878, %v3120
      %v3911 = vsel %vm1873, %v3879, %v3122
      %v3912 = vsel %vm1873, %v3880, %v3124
      %v3913 = vsel %vm1873, %v3881, %v3126
      %v3914 = vsel %vm1873, %v3882, %v3128
      %v3915 = vsel %vm1873, %v3883, %v3130
      %v3916 = vsel %vm1873, %v3884, %v3132
      %v3917 = vsel %vm1873, %v3885, %v3134
      %v3918 = vsel %vm1873, %v3886, %v3136
      %v3919 = vsel %vm1873, %v3887, %v3138
      %v3920 = vsel %vm1873, %v3888, %v3140
      %v3921 = vsel %vm1873, %v3889, %v3142
      %v3922 = vsel %vm1873, %v3890, %v3144
      %v3923 = vsel %vm1873, %v3891, %v3146
      %v3924 = vsel %vm1873, %v3892, %v3148
      %v3925 = vsel %vm1873, %v3893, %v3150
      %v3926 = vsel %vm1873, %v3894, %v3152
      %v3927 = vsel %vm1873, %v3895, %v3154
      %v3928 = vsel %vm1873, %v3896, %v3156
      %v3929 = vsel %vm1873, %v3897, %v3158
      %v3930 = vsel %vm1873, %v3898, %v3160
      %v3931 = vsel %vm1873, %v3899, %v3162
      %v3932 = vsel %vm1873, %v3900, %v3164
      %v3933 = vsel %vm1906, %v3901, %v3230
      %v3934 = vsel %vm1906, %v3902, %v3232
      %v3935 = vsel %vm1906, %v3903, %v3234
      %v3936 = vsel %vm1906, %v3904, %v3236
      %v3937 = vsel %vm1906, %v3905, %v3238
      %v3938 = vsel %vm1906, %v3906, %v3240
      %v3939 = vsel %vm1906, %v3907, %v3242
      %v3940 = vsel %vm1906, %v3908, %v3244
      %v3941 = vsel %vm1906, %v3909, %v3246
      %v3942 = vsel %vm1906, %v3910, %v3248
      %v3943 = vsel %vm1906, %v3911, %v3250
      %v3944 = vsel %vm1906, %v3912, %v3252
      %v3945 = vsel %vm1906, %v3913, %v3254
      %v3946 = vsel %vm1906, %v3914, %v3256
      %v3947 = vsel %vm1906, %v3915, %v3258
      %v3948 = vsel %vm1906, %v3916, %v3260
      %v3949 = vsel %vm1906, %v3917, %v3262
      %v3950 = vsel %vm1906, %v3918, %v3264
      %v3951 = vsel %vm1906, %v3919, %v3266
      %v3952 = vsel %vm1906, %v3920, %v3268
      %v3953 = vsel %vm1906, %v3921, %v3270
      %v3954 = vsel %vm1906, %v3922, %v3272
      %v3955 = vsel %vm1906, %v3923, %v3274
      %v3956 = vsel %vm1906, %v3924, %v3276
      %v3957 = vsel %vm1906, %v3925, %v3278
      %v3958 = vsel %vm1906, %v3926, %v3280
      %v3959 = vsel %vm1906, %v3927, %v3282
      %v3960 = vsel %vm1906, %v3928, %v3284
      %v3961 = vsel %vm1906, %v3929, %v3286
      %v3962 = vsel %vm1906, %v3930, %v3288
      %v3963 = vsel %vm1906, %v3931, %v3290
      %v3964 = vsel %vm1906, %v3932, %v3292
      %v3965 = vsel %vm1939, %v3933, %v3358
      %v3966 = vsel %vm1939, %v3934, %v3360
      %v3967 = vsel %vm1939, %v3935, %v3362
      %v3968 = vsel %vm1939, %v3936, %v3364
      %v3969 = vsel %vm1939, %v3937, %v3366
      %v3970 = vsel %vm1939, %v3938, %v3368
      %v3971 = vsel %vm1939, %v3939, %v3370
      %v3972 = vsel %vm1939, %v3940, %v3372
      %v3973 = vsel %vm1939, %v3941, %v3374
      %v3974 = vsel %vm1939, %v3942, %v3376
      %v3975 = vsel %vm1939, %v3943, %v3378
      %v3976 = vsel %vm1939, %v3944, %v3380
      %v3977 = vsel %vm1939, %v3945, %v3382
      %v3978 = vsel %vm1939, %v3946, %v3384
      %v3979 = vsel %vm1939, %v3947, %v3386
      %v3980 = vsel %vm1939, %v3948, %v3388
      %v3981 = vsel %vm1939, %v3949, %v3390
      %v3982 = vsel %vm1939, %v3950, %v3392
      %v3983 = vsel %vm1939, %v3951, %v3394
      %v3984 = vsel %vm1939, %v3952, %v3396
      %v3985 = vsel %vm1939, %v3953, %v3398
      %v3986 = vsel %vm1939, %v3954, %v3400
      %v3987 = vsel %vm1939, %v3955, %v3402
      %v3988 = vsel %vm1939, %v3956, %v3404
      %v3989 = vsel %vm1939, %v3957, %v3406
      %v3990 = vsel %vm1939, %v3958, %v3408
      %v3991 = vsel %vm1939, %v3959, %v3410
      %v3992 = vsel %vm1939, %v3960, %v3412
      %v3993 = vsel %vm1939, %v3961, %v3414
      %v3994 = vsel %vm1939, %v3962, %v3416
      %v3995 = vsel %vm1939, %v3963, %v3418
      %v3996 = vsel %vm1939, %v3964, %v3420
      %v3997 = vsel %vm1972, %v3965, %v3486
      %v3998 = vsel %vm1972, %v3966, %v3488
      %v3999 = vsel %vm1972, %v3967, %v3490
      %v4000 = vsel %vm1972, %v3968, %v3492
      %v4001 = vsel %vm1972, %v3969, %v3494
      %v4002 = vsel %vm1972, %v3970, %v3496
      %v4003 = vsel %vm1972, %v3971, %v3498
      %v4004 = vsel %vm1972, %v3972, %v3500
      %v4005 = vsel %vm1972, %v3973, %v3502
      %v4006 = vsel %vm1972, %v3974, %v3504
      %v4007 = vsel %vm1972, %v3975, %v3506
      %v4008 = vsel %vm1972, %v3976, %v3508
      %v4009 = vsel %vm1972, %v3977, %v3510
      %v4010 = vsel %vm1972, %v3978, %v3512
      %v4011 = vsel %vm1972, %v3979, %v3514
      %v4012 = vsel %vm1972, %v3980, %v3516
      %v4013 = vsel %vm1972, %v3981, %v3518
      %v4014 = vsel %vm1972, %v3982, %v3520
      %v4015 = vsel %vm1972, %v3983, %v3522
      %v4016 = vsel %vm1972, %v3984, %v3524
      %v4017 = vsel %vm1972, %v3985, %v3526
      %v4018 = vsel %vm1972, %v3986, %v3528
      %v4019 = vsel %vm1972, %v3987, %v3530
      %v4020 = vsel %vm1972, %v3988, %v3532
      %v4021 = vsel %vm1972, %v3989, %v3534
      %v4022 = vsel %vm1972, %v3990, %v3536
      %v4023 = vsel %vm1972, %v3991, %v3538
      %v4024 = vsel %vm1972, %v3992, %v3540
      %v4025 = vsel %vm1972, %v3993, %v3542
      %v4026 = vsel %vm1972, %v3994, %v3544
      %v4027 = vsel %vm1972, %v3995, %v3546
      %v4028 = vsel %vm1972, %v3996, %v3548
      %v4029 = vsel %vm2005, %v3997, %v3614
      %v4030 = vsel %vm2005, %v3998, %v3616
      %v4031 = vsel %vm2005, %v3999, %v3618
      %v4032 = vsel %vm2005, %v4000, %v3620
      %v4033 = vsel %vm2005, %v4001, %v3622
      %v4034 = vsel %vm2005, %v4002, %v3624
      %v4035 = vsel %vm2005, %v4003, %v3626
      %v4036 = vsel %vm2005, %v4004, %v3628
      %v4037 = vsel %vm2005, %v4005, %v3630
      %v4038 = vsel %vm2005, %v4006, %v3632
      %v4039 = vsel %vm2005, %v4007, %v3634
      %v4040 = vsel %vm2005, %v4008, %v3636
      %v4041 = vsel %vm2005, %v4009, %v3638
      %v4042 = vsel %vm2005, %v4010, %v3640
      %v4043 = vsel %vm2005, %v4011, %v3642
      %v4044 = vsel %vm2005, %v4012, %v3644
      %v4045 = vsel %vm2005, %v4013, %v3646
      %v4046 = vsel %vm2005, %v4014, %v3648
      %v4047 = vsel %vm2005, %v4015, %v3650
      %v4048 = vsel %vm2005, %v4016, %v3652
      %v4049 = vsel %vm2005, %v4017, %v3654
      %v4050 = vsel %vm2005, %v4018, %v3656
      %v4051 = vsel %vm2005, %v4019, %v3658
      %v4052 = vsel %vm2005, %v4020, %v3660
      %v4053 = vsel %vm2005, %v4021, %v3662
      %v4054 = vsel %vm2005, %v4022, %v3664
      %v4055 = vsel %vm2005, %v4023, %v3666
      %v4056 = vsel %vm2005, %v4024, %v3668
      %v4057 = vsel %vm2005, %v4025, %v3670
      %v4058 = vsel %vm2005, %v4026, %v3672
      %v4059 = vsel %vm2005, %v4027, %v3674
      %v4060 = vsel %vm2005, %v4028, %v3676
      %v4061 = vsel %vm2038, %v4029, %v3742
      %v4062 = vsel %vm2038, %v4030, %v3744
      %v4063 = vsel %vm2038, %v4031, %v3746
      %v4064 = vsel %vm2038, %v4032, %v3748
      %v4065 = vsel %vm2038, %v4033, %v3750
      %v4066 = vsel %vm2038, %v4034, %v3752
      %v4067 = vsel %vm2038, %v4035, %v3754
      %v4068 = vsel %vm2038, %v4036, %v3756
      %v4069 = vsel %vm2038, %v4037, %v3758
      %v4070 = vsel %vm2038, %v4038, %v3760
      %v4071 = vsel %vm2038, %v4039, %v3762
      %v4072 = vsel %vm2038, %v4040, %v3764
      %v4073 = vsel %vm2038, %v4041, %v3766
      %v4074 = vsel %vm2038, %v4042, %v3768
      %v4075 = vsel %vm2038, %v4043, %v3770
      %v4076 = vsel %vm2038, %v4044, %v3772
      %v4077 = vsel %vm2038, %v4045, %v3774
      %v4078 = vsel %vm2038, %v4046, %v3776
      %v4079 = vsel %vm2038, %v4047, %v3778
      %v4080 = vsel %vm2038, %v4048, %v3780
      %v4081 = vsel %vm2038, %v4049, %v3782
      %v4082 = vsel %vm2038, %v4050, %v3784
      %v4083 = vsel %vm2038, %v4051, %v3786
      %v4084 = vsel %vm2038, %v4052, %v3788
      %v4085 = vsel %vm2038, %v4053, %v3790
      %v4086 = vsel %vm2038, %v4054, %v3792
      %v4087 = vsel %vm2038, %v4055, %v3794
      %v4088 = vsel %vm2038, %v4056, %v3796
      %v4089 = vsel %vm2038, %v4057, %v3798
      %v4090 = vsel %vm2038, %v4058, %v3800
      %v4091 = vsel %vm2038, %v4059, %v3802
      %v4092 = vsel %vm2038, %v4060, %v3804
      %v4093 = vld [vmem:[%s2] sm:$0xff]
      %v4094 = vld [vmem:[%s2 + $0x8] sm:$0xff]
      %v4095 = vld [vmem:[%s2 + $0x10] sm:$0xff]
      %v4096 = vld [vmem:[%s2 + $0x18] sm:$0xff]
      %v4097 = vld [vmem:[%s2 + $0x20] sm:$0xf]
      %v4098 = vld [vmem:[%s7] sm:$0x1]
      %v4100 = vlaneseq
      %v4101 = vshrl.u32 %v4100, 7
      %v4102 = vsub.s32 0, %v4101
      %v4103 = vrot.slane %v4098, %v4102
      %v4106 = vsel %vm2083, %v4061, 0
      %v4109 = vsel %vm2083, %v4062, 0
      %v4112 = vsel %vm2083, %v4063, 0
      %v4115 = vsel %vm2083, %v4064, 0
      %v4118 = vsel %vm2083, %v4065, 0
      %v4121 = vsel %vm2083, %v4066, 0
      %v4124 = vsel %vm2083, %v4067, 0
      %v4127 = vsel %vm2083, %v4068, 0
      %v4130 = vsel %vm2083, %v4069, 0
      %v4133 = vsel %vm2083, %v4070, 0
      %v4136 = vsel %vm2083, %v4071, 0
      %v4139 = vsel %vm2083, %v4072, 0
      %v4142 = vsel %vm2083, %v4073, 0
      %v4145 = vsel %vm2083, %v4074, 0
      %v4148 = vsel %vm2083, %v4075, 0
      %v4151 = vsel %vm2083, %v4076, 0
      %v4154 = vsel %vm2083, %v4077, 0
      %v4157 = vsel %vm2083, %v4078, 0
      %v4160 = vsel %vm2083, %v4079, 0
      %v4163 = vsel %vm2083, %v4080, 0
      %v4166 = vsel %vm2083, %v4081, 0
      %v4169 = vsel %vm2083, %v4082, 0
      %v4172 = vsel %vm2083, %v4083, 0
      %v4175 = vsel %vm2083, %v4084, 0
      %v4178 = vsel %vm2083, %v4085, 0
      %v4181 = vsel %vm2083, %v4086, 0
      %v4184 = vsel %vm2083, %v4087, 0
      %v4187 = vsel %vm2083, %v4088, 0
      %v4190 = vsel %vm2083, %v4089, 0
      %v4193 = vsel %vm2083, %v4090, 0
      %v4196 = vsel %vm2083, %v4091, 0
      %v4199 = vsel %vm2083, %v4092, 0
      %v4202 = vsel %vm2180, %v4097, 0
      %4204 = vmatprep.subr.mxu0 0.0
      %4205 = vmatpush1.msra.mxu0 %v4093
      %4206 = vmatprep.subr.mxu0 0.0
      %4207 = vmatpush1.msra.mxu0 %v4094
      %4208 = vmatprep.subr.mxu0 0.0
      %4209 = vmatpush1.msra.mxu0 %v4095
      %4210 = vmatprep.subr.mxu0 0.0
      %4211 = vmatpush1.msra.mxu0 %v4096
      %4212 = vmatprep.subr.mxu0 0.0
      %4213 = vmatpush1.msra.mxu0 %v4202
      %4214 = vmatprep.subr.mxu0 0.0
      %4215 = vmatpush1.msra.mxu0 0.0
      %4216 = vmatprep.subr.mxu0 0.0
      %4217 = vmatpush1.msra.mxu0 0.0
      %4218 = vmatprep.subr.mxu0 0.0
      %4219 = vmatpush1.msra.mxu0 0.0
      %4220 = vmatprep.subr.mxu0 0.0
      %4221 = vmatpush1.msra.mxu0 0.0
      %4222 = vmatprep.subr.mxu0 0.0
      %4223 = vmatpush1.msra.mxu0 0.0
      %4224 = vmatprep.subr.mxu0 0.0
      %4225 = vmatpush1.msra.mxu0 0.0
      %4226 = vmatprep.subr.mxu0 0.0
      %4227 = vmatpush1.msra.mxu0 0.0
      %4228 = vmatprep.subr.mxu0 0.0
      %4229 = vmatpush1.msra.mxu0 0.0
      %4230 = vmatprep.subr.mxu0 0.0
      %4231 = vmatpush1.msra.mxu0 0.0
      %4232 = vmatprep.subr.mxu0 0.0
      %4233 = vmatpush1.msra.mxu0 0.0
      %4234 = vmatprep.subr.mxu0 0.0
      %4235 = vmatpush1.msra.mxu0 0.0
      %4236 = vmatprep.subr.mxu0 0.0
      %4237 = vmatpush1.msra.mxu0 0.0
      %4238 = vmatprep.subr.mxu0 0.0
      %4239 = vmatpush1.msra.mxu0 0.0
      %4240 = vmatprep.subr.mxu0 0.0
      %4241 = vmatpush1.msra.mxu0 0.0
      %4242 = vmatprep.subr.mxu0 0.0
      %4243 = vmatpush1.msra.mxu0 0.0
      %4244 = vmatprep.subr.mxu0 0.0
      %4245 = vmatpush1.msra.mxu0 0.0
      %4246 = vmatprep.subr.mxu0 0.0
      %4247 = vmatpush1.msra.mxu0 0.0
      %4248 = vmatprep.subr.mxu0 0.0
      %4249 = vmatpush1.msra.mxu0 0.0
      %4250 = vmatprep.subr.mxu0 0.0
      %4251 = vmatpush1.msra.mxu0 0.0
      %4252 = vmatprep.subr.mxu0 0.0
      %4253 = vmatpush1.msra.mxu0 0.0
      %4254 = vmatprep.subr.mxu0 0.0
      %4255 = vmatpush1.msra.mxu0 0.0
      %4256 = vmatprep.subr.mxu0 0.0
      %4257 = vmatpush1.msra.mxu0 0.0
      %4258 = vmatprep.subr.mxu0 0.0
      %4259 = vmatpush1.msra.mxu0 0.0
      %4260 = vmatprep.subr.mxu0 0.0
      %4261 = vmatpush1.msra.mxu0 0.0
      %4262 = vmatprep.subr.mxu0 0.0
      %4263 = vmatpush1.msra.mxu0 0.0
      %4264 = vmatprep.subr.mxu0 0.0
      %4265 = vmatpush1.msra.mxu0 0.0
      %4266 = vmatprep.subr.mxu0 0.0
      %4267 = vmatpush1.msra.mxu0 0.0
      %4268 = vmatprep.mubr.f32.mxu0 0.0
      %4269 = vmatmul.mubr.f32.gmra.mrb[0].mxu0 %v4106
      %v4270 = vpop.f32.mrb[0].mxu0
      %v4271 = vadd.f32 %v4103, %v4270
      %v4272 = vpop.f32.mrb[0].mxu0
      %4273 = vmatprep.mubr.f32.mxu0 0.0
      %4274 = vmatmul.mubr.f32.gmra.mrb[0].mxu0 %v4109
      %v4275 = vpop.f32.mrb[0].mxu0
      %v4276 = vadd.f32 %v4103, %v4275
      %v4277 = vpop.f32.mrb[0].mxu0
      %4278 = vmatprep.mubr.f32.mxu0 0.0
      %4279 = vmatmul.mubr.f32.gmra.mrb[0].mxu0 %v4112
      %v4280 = vpop.f32.mrb[0].mxu0
      %v4281 = vadd.f32 %v4103, %v4280
      %v4282 = vpop.f32.mrb[0].mxu0
      %4283 = vmatprep.mubr.f32.mxu0 0.0
      %4284 = vmatmul.mubr.f32.gmra.mrb[0].mxu0 %v4115
      %v4285 = vpop.f32.mrb[0].mxu0
      %v4286 = vadd.f32 %v4103, %v4285
      %v4287 = vpop.f32.mrb[0].mxu0
      %4288 = vmatprep.mubr.f32.mxu0 0.0
      %4289 = vmatmul.mubr.f32.gmra.mrb[0].mxu0 %v4118
      %v4290 = vpop.f32.mrb[0].mxu0
      %v4291 = vadd.f32 %v4103, %v4290
      %v4292 = vpop.f32.mrb[0].mxu0
      %4293 = vmatprep.mubr.f32.mxu0 0.0
      %4294 = vmatmul.mubr.f32.gmra.mrb[0].mxu0 %v4121
      %v4295 = vpop.f32.mrb[0].mxu0
      %v4296 = vadd.f32 %v4103, %v4295
      %v4297 = vpop.f32.mrb[0].mxu0
      %4298 = vmatprep.mubr.f32.mxu0 0.0
      %4299 = vmatmul.mubr.f32.gmra.mrb[0].mxu0 %v4124
      %v4300 = vpop.f32.mrb[0].mxu0
      %v4301 = vadd.f32 %v4103, %v4300
      %v4302 = vpop.f32.mrb[0].mxu0
      %4303 = vmatprep.mubr.f32.mxu0 0.0
      %4304 = vmatmul.mubr.f32.gmra.mrb[0].mxu0 %v4127
      %v4305 = vpop.f32.mrb[0].mxu0
      %v4306 = vadd.f32 %v4103, %v4305
      %v4307 = vpop.f32.mrb[0].mxu0
      %4308 = vmatprep.mubr.f32.mxu0 0.0
      %4309 = vmatmul.mubr.f32.gmra.mrb[0].mxu0 %v4130
      %v4310 = vpop.f32.mrb[0].mxu0
      %v4311 = vadd.f32 %v4103, %v4310
      %v4312 = vpop.f32.mrb[0].mxu0
      %4313 = vmatprep.mubr.f32.mxu0 0.0
      %4314 = vmatmul.mubr.f32.gmra.mrb[0].mxu0 %v4133
      %v4315 = vpop.f32.mrb[0].mxu0
      %v4316 = vadd.f32 %v4103, %v4315
      %v4317 = vpop.f32.mrb[0].mxu0
      %4318 = vmatprep.mubr.f32.mxu0 0.0
      %4319 = vmatmul.mubr.f32.gmra.mrb[0].mxu0 %v4136
      %v4320 = vpop.f32.mrb[0].mxu0
      %v4321 = vadd.f32 %v4103, %v4320
      %v4322 = vpop.f32.mrb[0].mxu0
      %4323 = vmatprep.mubr.f32.mxu0 0.0
      %4324 = vmatmul.mubr.f32.gmra.mrb[0].mxu0 %v4139
      %v4325 = vpop.f32.mrb[0].mxu0
      %v4326 = vadd.f32 %v4103, %v4325
      %v4327 = vpop.f32.mrb[0].mxu0
      %4328 = vmatprep.mubr.f32.mxu0 0.0
      %4329 = vmatmul.mubr.f32.gmra.mrb[0].mxu0 %v4142
      %v4330 = vpop.f32.mrb[0].mxu0
      %v4331 = vadd.f32 %v4103, %v4330
      %v4332 = vpop.f32.mrb[0].mxu0
      %4333 = vmatprep.mubr.f32.mxu0 0.0
      %4334 = vmatmul.mubr.f32.gmra.mrb[0].mxu0 %v4145
      %v4335 = vpop.f32.mrb[0].mxu0
      %v4336 = vadd.f32 %v4103, %v4335
      %v4337 = vpop.f32.mrb[0].mxu0
      %4338 = vmatprep.mubr.f32.mxu0 0.0
      %4339 = vmatmul.mubr.f32.gmra.mrb[0].mxu0 %v4148
      %v4340 = vpop.f32.mrb[0].mxu0
      %v4341 = vadd.f32 %v4103, %v4340
      %v4342 = vpop.f32.mrb[0].mxu0
      %4343 = vmatprep.mubr.f32.mxu0 0.0
      %4344 = vmatmul.mubr.f32.gmra.mrb[0].mxu0 %v4151
      %v4345 = vpop.f32.mrb[0].mxu0
      %v4346 = vadd.f32 %v4103, %v4345
      %v4347 = vpop.f32.mrb[0].mxu0
      %4348 = vmatprep.mubr.f32.mxu0 0.0
      %4349 = vmatmul.mubr.f32.gmra.mrb[0].mxu0 %v4154
      %v4350 = vpop.f32.mrb[0].mxu0
      %v4351 = vadd.f32 %v4103, %v4350
      %v4352 = vpop.f32.mrb[0].mxu0
      %4353 = vmatprep.mubr.f32.mxu0 0.0
      %4354 = vmatmul.mubr.f32.gmra.mrb[0].mxu0 %v4157
      %v4355 = vpop.f32.mrb[0].mxu0
      %v4356 = vadd.f32 %v4103, %v4355
      %v4357 = vpop.f32.mrb[0].mxu0
      %4358 = vmatprep.mubr.f32.mxu0 0.0
      %4359 = vmatmul.mubr.f32.gmra.mrb[0].mxu0 %v4160
      %v4360 = vpop.f32.mrb[0].mxu0
      %v4361 = vadd.f32 %v4103, %v4360
      %v4362 = vpop.f32.mrb[0].mxu0
      %4363 = vmatprep.mubr.f32.mxu0 0.0
      %4364 = vmatmul.mubr.f32.gmra.mrb[0].mxu0 %v4163
      %v4365 = vpop.f32.mrb[0].mxu0
      %v4366 = vadd.f32 %v4103, %v4365
      %v4367 = vpop.f32.mrb[0].mxu0
      %4368 = vmatprep.mubr.f32.mxu0 0.0
      %4369 = vmatmul.mubr.f32.gmra.mrb[0].mxu0 %v4166
      %v4370 = vpop.f32.mrb[0].mxu0
      %v4371 = vadd.f32 %v4103, %v4370
      %v4372 = vpop.f32.mrb[0].mxu0
      %4373 = vmatprep.mubr.f32.mxu0 0.0
      %4374 = vmatmul.mubr.f32.gmra.mrb[0].mxu0 %v4169
      %v4375 = vpop.f32.mrb[0].mxu0
      %v4376 = vadd.f32 %v4103, %v4375
      %v4377 = vpop.f32.mrb[0].mxu0
      %4378 = vmatprep.mubr.f32.mxu0 0.0
      %4379 = vmatmul.mubr.f32.gmra.mrb[0].mxu0 %v4172
      %v4380 = vpop.f32.mrb[0].mxu0
      %v4381 = vadd.f32 %v4103, %v4380
      %v4382 = vpop.f32.mrb[0].mxu0
      %4383 = vmatprep.mubr.f32.mxu0 0.0
      %4384 = vmatmul.mubr.f32.gmra.mrb[0].mxu0 %v4175
      %v4385 = vpop.f32.mrb[0].mxu0
      %v4386 = vadd.f32 %v4103, %v4385
      %v4387 = vpop.f32.mrb[0].mxu0
      %4388 = vmatprep.mubr.f32.mxu0 0.0
      %4389 = vmatmul.mubr.f32.gmra.mrb[0].mxu0 %v4178
      %v4390 = vpop.f32.mrb[0].mxu0
      %v4391 = vadd.f32 %v4103, %v4390
      %v4392 = vpop.f32.mrb[0].mxu0
      %4393 = vmatprep.mubr.f32.mxu0 0.0
      %4394 = vmatmul.mubr.f32.gmra.mrb[0].mxu0 %v4181
      %v4395 = vpop.f32.mrb[0].mxu0
      %v4396 = vadd.f32 %v4103, %v4395
      %v4397 = vpop.f32.mrb[0].mxu0
      %4398 = vmatprep.mubr.f32.mxu0 0.0
      %4399 = vmatmul.mubr.f32.gmra.mrb[0].mxu0 %v4184
      %v4400 = vpop.f32.mrb[0].mxu0
      %v4401 = vadd.f32 %v4103, %v4400
      %v4402 = vpop.f32.mrb[0].mxu0
      %4403 = vmatprep.mubr.f32.mxu0 0.0
      %4404 = vmatmul.mubr.f32.gmra.mrb[0].mxu0 %v4187
      %v4405 = vpop.f32.mrb[0].mxu0
      %v4406 = vadd.f32 %v4103, %v4405
      %v4407 = vpop.f32.mrb[0].mxu0
      %4408 = vmatprep.mubr.f32.mxu0 0.0
      %4409 = vmatmul.mubr.f32.gmra.mrb[0].mxu0 %v4190
      %v4410 = vpop.f32.mrb[0].mxu0
      %v4411 = vadd.f32 %v4103, %v4410
      %v4412 = vpop.f32.mrb[0].mxu0
      %4413 = vmatprep.mubr.f32.mxu0 0.0
      %4414 = vmatmul.mubr.f32.gmra.mrb[0].mxu0 %v4193
      %v4415 = vpop.f32.mrb[0].mxu0
      %v4416 = vadd.f32 %v4103, %v4415
      %v4417 = vpop.f32.mrb[0].mxu0
      %4418 = vmatprep.mubr.f32.mxu0 0.0
      %4419 = vmatmul.mubr.f32.gmra.mrb[0].mxu0 %v4196
      %v4420 = vpop.f32.mrb[0].mxu0
      %v4421 = vadd.f32 %v4103, %v4420
      %v4422 = vpop.f32.mrb[0].mxu0
      %4423 = vmatprep.mubr.f32.mxu0 0.0
      %4424 = vmatmul.mubr.f32.gmra.mrb[0].mxu0 %v4199
      %v4425 = vpop.f32.mrb[0].mxu0
      %v4426 = vadd.f32 %v4103, %v4425
      %v4427 = vpop.f32.mrb[0].mxu0
      %4428 = vdwg.mxu0
      %v4429 = vmax.f32 %v4271, 0.0
      %v4430 = vmax.f32 %v4276, 0.0
      %v4431 = vmax.f32 %v4281, 0.0
      %v4432 = vmax.f32 %v4286, 0.0
      %v4433 = vmax.f32 %v4291, 0.0
      %v4434 = vmax.f32 %v4296, 0.0
      %v4435 = vmax.f32 %v4301, 0.0
      %v4436 = vmax.f32 %v4306, 0.0
      %v4437 = vmax.f32 %v4311, 0.0
      %v4438 = vmax.f32 %v4316, 0.0
      %v4439 = vmax.f32 %v4321, 0.0
      %v4440 = vmax.f32 %v4326, 0.0
      %v4441 = vmax.f32 %v4331, 0.0
      %v4442 = vmax.f32 %v4336, 0.0
      %v4443 = vmax.f32 %v4341, 0.0
      %v4444 = vmax.f32 %v4346, 0.0
      %v4445 = vmax.f32 %v4351, 0.0
      %v4446 = vmax.f32 %v4356, 0.0
      %v4447 = vmax.f32 %v4361, 0.0
      %v4448 = vmax.f32 %v4366, 0.0
      %v4449 = vmax.f32 %v4371, 0.0
      %v4450 = vmax.f32 %v4376, 0.0
      %v4451 = vmax.f32 %v4381, 0.0
      %v4452 = vmax.f32 %v4386, 0.0
      %v4453 = vmax.f32 %v4391, 0.0
      %v4454 = vmax.f32 %v4396, 0.0
      %v4455 = vmax.f32 %v4401, 0.0
      %v4456 = vmax.f32 %v4406, 0.0
      %v4457 = vmax.f32 %v4411, 0.0
      %v4458 = vmax.f32 %v4416, 0.0
      %v4459 = vmax.f32 %v4421, 0.0
      %v4460 = vmax.f32 %v4426, 0.0
      %4461 = vst.msk [vmem:[#allocation4] sm:$0xff] %vm419, 0.0
      %4462 = vst.msk [vmem:[#allocation4 + $0x8] sm:$0xff] %vm419, 0.0
      %4463 = vst.msk [vmem:[#allocation4 + $0x10] sm:$0xff] %vm419, 0.0
      %4464 = vst.msk [vmem:[#allocation4 + $0x18] sm:$0xff] %vm419, 0.0
      %s4465 = scalar_lea.vmem [#allocation4], 544
      %4466 = vst.msk [vmem:[%s4465] sm:$0xff] %vm419, 0.0
      %4467 = vst.msk [vmem:[%s4465 + $0x8] sm:$0xff] %vm419, 0.0
      %4468 = vst.msk [vmem:[%s4465 + $0x10] sm:$0xff] %vm419, 0.0
      %4469 = vst.msk [vmem:[%s4465 + $0x18] sm:$0xff] %vm419, 0.0
      %s4470 = scalar_lea.vmem [#allocation4], 32
      %4471 = vst.msk [vmem:[%s4470 + $0x7] sm:$0x1] %vm430, 0.0
      %4472 = vst.msk [vmem:[%s4470 + $0x27] sm:$0x1] %vm430, 0.0
      %4473 = vst.msk [vmem:[%s4470 + $0x47] sm:$0x1] %vm430, 0.0
      %4474 = vst.msk [vmem:[%s4470 + $0x67] sm:$0x1] %vm430, 0.0
      %4475 = vst.msk [vmem:[%s4470 + $0x87] sm:$0x1] %vm430, 0.0
      %4476 = vst.msk [vmem:[%s4470 + $0xa7] sm:$0x1] %vm430, 0.0
      %4477 = vst.msk [vmem:[%s4470 + $0xc7] sm:$0x1] %vm430, 0.0
      %4478 = vst.msk [vmem:[%s4470 + $0xe7] sm:$0x1] %vm430, 0.0
      %4479 = vst.msk [vmem:[%s4470 + $0x107] sm:$0x1] %vm430, 0.0
      %4480 = vst.msk [vmem:[%s4470 + $0x127] sm:$0x1] %vm430, 0.0
      %4481 = vst.msk [vmem:[%s4470 + $0x147] sm:$0x1] %vm430, 0.0
      %4482 = vst.msk [vmem:[%s4470 + $0x167] sm:$0x1] %vm430, 0.0
      %4483 = vst.msk [vmem:[%s4470 + $0x187] sm:$0x1] %vm430, 0.0
      %4484 = vst.msk [vmem:[%s4470 + $0x1a7] sm:$0x1] %vm430, 0.0
      %4485 = vst.msk [vmem:[%s4470 + $0x1c7] sm:$0x1] %vm430, 0.0
      %4486 = vst.msk [vmem:[%s4470 + $0x1e7] sm:$0x1] %vm430, 0.0
      %4487 = vst.msk [vmem:[%s4470 + $0x18] sm:$0x1] %vm430, 0.0
      %4488 = vst.msk [vmem:[%s4470 + $0x38] sm:$0x1] %vm430, 0.0
      %4489 = vst.msk [vmem:[%s4470 + $0x58] sm:$0x1] %vm430, 0.0
      %4490 = vst.msk [vmem:[%s4470 + $0x78] sm:$0x1] %vm430, 0.0
      %4491 = vst.msk [vmem:[%s4470 + $0x98] sm:$0x1] %vm430, 0.0
      %4492 = vst.msk [vmem:[%s4470 + $0xb8] sm:$0x1] %vm430, 0.0
      %4493 = vst.msk [vmem:[%s4470 + $0xd8] sm:$0x1] %vm430, 0.0
      %4494 = vst.msk [vmem:[%s4470 + $0xf8] sm:$0x1] %vm430, 0.0
      %4495 = vst.msk [vmem:[%s4470 + $0x118] sm:$0x1] %vm430, 0.0
      %4496 = vst.msk [vmem:[%s4470 + $0x138] sm:$0x1] %vm430, 0.0
      %4497 = vst.msk [vmem:[%s4470 + $0x158] sm:$0x1] %vm430, 0.0
      %4498 = vst.msk [vmem:[%s4470 + $0x178] sm:$0x1] %vm430, 0.0
      %4499 = vst.msk [vmem:[%s4470 + $0x198] sm:$0x1] %vm430, 0.0
      %4500 = vst.msk [vmem:[%s4470 + $0x1b8] sm:$0x1] %vm430, 0.0
      %4501 = vst.msk [vmem:[%s4470 + $0x1d8] sm:$0x1] %vm430, 0.0
      %4502 = vst.msk [vmem:[%s4470 + $0x1f8] sm:$0x1] %vm430, 0.0
      %4503 = vst.msk [vmem:[%s4470 + $0x8] sm:$0xff] %vm419, %v4429
      %4504 = vst.msk [vmem:[%s4470 + $0x10] sm:$0xff] %vm419, %v4430
      %4505 = vst.msk [vmem:[%s4470 + $0x28] sm:$0xff] %vm419, %v4431
      %4506 = vst.msk [vmem:[%s4470 + $0x30] sm:$0xff] %vm419, %v4432
      %4507 = vst.msk [vmem:[%s4470 + $0x48] sm:$0xff] %vm419, %v4433
      %4508 = vst.msk [vmem:[%s4470 + $0x50] sm:$0xff] %vm419, %v4434
      %4509 = vst.msk [vmem:[%s4470 + $0x68] sm:$0xff] %vm419, %v4435
      %4510 = vst.msk [vmem:[%s4470 + $0x70] sm:$0xff] %vm419, %v4436
      %4511 = vst.msk [vmem:[%s4470 + $0x88] sm:$0xff] %vm419, %v4437
      %4512 = vst.msk [vmem:[%s4470 + $0x90] sm:$0xff] %vm419, %v4438
      %4513 = vst.msk [vmem:[%s4470 + $0xa8] sm:$0xff] %vm419, %v4439
      %4514 = vst.msk [vmem:[%s4470 + $0xb0] sm:$0xff] %vm419, %v4440
      %4515 = vst.msk [vmem:[%s4470 + $0xc8] sm:$0xff] %vm419, %v4441
      %4516 = vst.msk [vmem:[%s4470 + $0xd0] sm:$0xff] %vm419, %v4442
      %4517 = vst.msk [vmem:[%s4470 + $0xe8] sm:$0xff] %vm419, %v4443
      %4518 = vst.msk [vmem:[%s4470 + $0xf0] sm:$0xff] %vm419, %v4444
      %4519 = vst.msk [vmem:[%s4470 + $0x108] sm:$0xff] %vm419, %v4445
      %4520 = vst.msk [vmem:[%s4470 + $0x110] sm:$0xff] %vm419, %v4446
      %4521 = vst.msk [vmem:[%s4470 + $0x128] sm:$0xff] %vm419, %v4447
      %4522 = vst.msk [vmem:[%s4470 + $0x130] sm:$0xff] %vm419, %v4448
      %4523 = vst.msk [vmem:[%s4470 + $0x148] sm:$0xff] %vm419, %v4449
      %4524 = vst.msk [vmem:[%s4470 + $0x150] sm:$0xff] %vm419, %v4450
      %4525 = vst.msk [vmem:[%s4470 + $0x168] sm:$0xff] %vm419, %v4451
      %4526 = vst.msk [vmem:[%s4470 + $0x170] sm:$0xff] %vm419, %v4452
      %4527 = vst.msk [vmem:[%s4470 + $0x188] sm:$0xff] %vm419, %v4453
      %4528 = vst.msk [vmem:[%s4470 + $0x190] sm:$0xff] %vm419, %v4454
      %4529 = vst.msk [vmem:[%s4470 + $0x1a8] sm:$0xff] %vm419, %v4455
      %4530 = vst.msk [vmem:[%s4470 + $0x1b0] sm:$0xff] %vm419, %v4456
      %4531 = vst.msk [vmem:[%s4470 + $0x1c8] sm:$0xff] %vm419, %v4457
      %4532 = vst.msk [vmem:[%s4470 + $0x1d0] sm:$0xff] %vm419, %v4458
      %4533 = vst.msk [vmem:[%s4470 + $0x1e8] sm:$0xff] %vm419, %v4459
      %4534 = vst.msk [vmem:[%s4470 + $0x1f0] sm:$0xff] %vm419, %v4460
      %v4535 = vld [vmem:[#allocation4 + $0x7] sm:$0xff]
      %v4536 = vld [vmem:[#allocation4 + $0xf] sm:$0xff]
      %v4537 = vld [vmem:[#allocation4 + $0x27] sm:$0xff]
      %v4538 = vld [vmem:[#allocation4 + $0x2f] sm:$0xff]
      %v4539 = vld [vmem:[#allocation4 + $0x47] sm:$0xff]
      %v4540 = vld [vmem:[#allocation4 + $0x4f] sm:$0xff]
      %v4541 = vld [vmem:[#allocation4 + $0x67] sm:$0xff]
      %v4542 = vld [vmem:[#allocation4 + $0x6f] sm:$0xff]
      %v4543 = vld [vmem:[#allocation4 + $0x87] sm:$0xff]
      %v4544 = vld [vmem:[#allocation4 + $0x8f] sm:$0xff]
      %v4545 = vld [vmem:[#allocation4 + $0xa7] sm:$0xff]
      %v4546 = vld [vmem:[#allocation4 + $0xaf] sm:$0xff]
      %v4547 = vld [vmem:[#allocation4 + $0xc7] sm:$0xff]
      %v4548 = vld [vmem:[#allocation4 + $0xcf] sm:$0xff]
      %v4549 = vld [vmem:[#allocation4 + $0xe7] sm:$0xff]
      %v4550 = vld [vmem:[#allocation4 + $0xef] sm:$0xff]
      %v4551 = vld [vmem:[#allocation4 + $0x107] sm:$0xff]
      %v4552 = vld [vmem:[#allocation4 + $0x10f] sm:$0xff]
      %v4553 = vld [vmem:[#allocation4 + $0x127] sm:$0xff]
      %v4554 = vld [vmem:[#allocation4 + $0x12f] sm:$0xff]
      %v4555 = vld [vmem:[#allocation4 + $0x147] sm:$0xff]
      %v4556 = vld [vmem:[#allocation4 + $0x14f] sm:$0xff]
      %v4557 = vld [vmem:[#allocation4 + $0x167] sm:$0xff]
      %v4558 = vld [vmem:[#allocation4 + $0x16f] sm:$0xff]
      %v4559 = vld [vmem:[#allocation4 + $0x187] sm:$0xff]
      %v4560 = vld [vmem:[#allocation4 + $0x18f] sm:$0xff]
      %v4561 = vld [vmem:[#allocation4 + $0x1a7] sm:$0xff]
      %v4562 = vld [vmem:[#allocation4 + $0x1af] sm:$0xff]
      %v4563 = vld [vmem:[#allocation4 + $0x1c7] sm:$0xff]
      %v4564 = vld [vmem:[#allocation4 + $0x1cf] sm:$0xff]
      %v4565 = vld [vmem:[#allocation4 + $0x1e7] sm:$0xff]
      %v4566 = vld [vmem:[#allocation4 + $0x1ef] sm:$0xff]
      %v4567 = vld [vmem:[#allocation4 + $0x9] sm:$0xff]
      %v4568 = vld [vmem:[#allocation4 + $0x11] sm:$0xff]
      %v4569 = vld [vmem:[#allocation4 + $0x29] sm:$0xff]
      %v4570 = vld [vmem:[#allocation4 + $0x31] sm:$0xff]
      %v4571 = vld [vmem:[#allocation4 + $0x49] sm:$0xff]
      %v4572 = vld [vmem:[#allocation4 + $0x51] sm:$0xff]
      %v4573 = vld [vmem:[#allocation4 + $0x69] sm:$0xff]
      %v4574 = vld [vmem:[#allocation4 + $0x71] sm:$0xff]
      %v4575 = vld [vmem:[#allocation4 + $0x89] sm:$0xff]
      %v4576 = vld [vmem:[#allocation4 + $0x91] sm:$0xff]
      %v4577 = vld [vmem:[#allocation4 + $0xa9] sm:$0xff]
      %v4578 = vld [vmem:[#allocation4 + $0xb1] sm:$0xff]
      %v4579 = vld [vmem:[#allocation4 + $0xc9] sm:$0xff]
      %v4580 = vld [vmem:[#allocation4 + $0xd1] sm:$0xff]
      %v4581 = vld [vmem:[#allocation4 + $0xe9] sm:$0xff]
      %v4582 = vld [vmem:[#allocation4 + $0xf1] sm:$0xff]
      %v4583 = vld [vmem:[#allocation4 + $0x109] sm:$0xff]
      %v4584 = vld [vmem:[#allocation4 + $0x111] sm:$0xff]
      %v4585 = vld [vmem:[#allocation4 + $0x129] sm:$0xff]
      %v4586 = vld [vmem:[#allocation4 + $0x131] sm:$0xff]
      %v4587 = vld [vmem:[#allocation4 + $0x149] sm:$0xff]
      %v4588 = vld [vmem:[#allocation4 + $0x151] sm:$0xff]
      %v4589 = vld [vmem:[#allocation4 + $0x169] sm:$0xff]
      %v4590 = vld [vmem:[#allocation4 + $0x171] sm:$0xff]
      %v4591 = vld [vmem:[#allocation4 + $0x189] sm:$0xff]
      %v4592 = vld [vmem:[#allocation4 + $0x191] sm:$0xff]
      %v4593 = vld [vmem:[#allocation4 + $0x1a9] sm:$0xff]
      %v4594 = vld [vmem:[#allocation4 + $0x1b1] sm:$0xff]
      %v4595 = vld [vmem:[#allocation4 + $0x1c9] sm:$0xff]
      %v4596 = vld [vmem:[#allocation4 + $0x1d1] sm:$0xff]
      %v4597 = vld [vmem:[#allocation4 + $0x1e9] sm:$0xff]
      %v4598 = vld [vmem:[#allocation4 + $0x1f1] sm:$0xff]
      %s4599 = scalar_lea.vmem [#allocation4], 64
      %v4600 = vld [vmem:[%s4599 + $0x7] sm:$0xff]
      %v4601 = vld [vmem:[%s4599 + $0xf] sm:$0xff]
      %v4602 = vld [vmem:[%s4599 + $0x27] sm:$0xff]
      %v4603 = vld [vmem:[%s4599 + $0x2f] sm:$0xff]
      %v4604 = vld [vmem:[%s4599 + $0x47] sm:$0xff]
      %v4605 = vld [vmem:[%s4599 + $0x4f] sm:$0xff]
      %v4606 = vld [vmem:[%s4599 + $0x67] sm:$0xff]
      %v4607 = vld [vmem:[%s4599 + $0x6f] sm:$0xff]
      %v4608 = vld [vmem:[%s4599 + $0x87] sm:$0xff]
      %v4609 = vld [vmem:[%s4599 + $0x8f] sm:$0xff]
      %v4610 = vld [vmem:[%s4599 + $0xa7] sm:$0xff]
      %v4611 = vld [vmem:[%s4599 + $0xaf] sm:$0xff]
      %v4612 = vld [vmem:[%s4599 + $0xc7] sm:$0xff]
      %v4613 = vld [vmem:[%s4599 + $0xcf] sm:$0xff]
      %v4614 = vld [vmem:[%s4599 + $0xe7] sm:$0xff]
      %v4615 = vld [vmem:[%s4599 + $0xef] sm:$0xff]
      %v4616 = vld [vmem:[%s4599 + $0x107] sm:$0xff]
      %v4617 = vld [vmem:[%s4599 + $0x10f] sm:$0xff]
      %v4618 = vld [vmem:[%s4599 + $0x127] sm:$0xff]
      %v4619 = vld [vmem:[%s4599 + $0x12f] sm:$0xff]
      %v4620 = vld [vmem:[%s4599 + $0x147] sm:$0xff]
      %v4621 = vld [vmem:[%s4599 + $0x14f] sm:$0xff]
      %v4622 = vld [vmem:[%s4599 + $0x167] sm:$0xff]
      %v4623 = vld [vmem:[%s4599 + $0x16f] sm:$0xff]
      %v4624 = vld [vmem:[%s4599 + $0x187] sm:$0xff]
      %v4625 = vld [vmem:[%s4599 + $0x18f] sm:$0xff]
      %v4626 = vld [vmem:[%s4599 + $0x1a7] sm:$0xff]
      %v4627 = vld [vmem:[%s4599 + $0x1af] sm:$0xff]
      %v4628 = vld [vmem:[%s4599 + $0x1c7] sm:$0xff]
      %v4629 = vld [vmem:[%s4599 + $0x1cf] sm:$0xff]
      %v4630 = vld [vmem:[%s4599 + $0x1e7] sm:$0xff]
      %v4631 = vld [vmem:[%s4599 + $0x1ef] sm:$0xff]
      %v4632 = vld [vmem:[%s4599 + $0x9] sm:$0xff]
      %v4633 = vld [vmem:[%s4599 + $0x11] sm:$0xff]
      %v4634 = vld [vmem:[%s4599 + $0x29] sm:$0xff]
      %v4635 = vld [vmem:[%s4599 + $0x31] sm:$0xff]
      %v4636 = vld [vmem:[%s4599 + $0x49] sm:$0xff]
      %v4637 = vld [vmem:[%s4599 + $0x51] sm:$0xff]
      %v4638 = vld [vmem:[%s4599 + $0x69] sm:$0xff]
      %v4639 = vld [vmem:[%s4599 + $0x71] sm:$0xff]
      %v4640 = vld [vmem:[%s4599 + $0x89] sm:$0xff]
      %v4641 = vld [vmem:[%s4599 + $0x91] sm:$0xff]
      %v4642 = vld [vmem:[%s4599 + $0xa9] sm:$0xff]
      %v4643 = vld [vmem:[%s4599 + $0xb1] sm:$0xff]
      %v4644 = vld [vmem:[%s4599 + $0xc9] sm:$0xff]
      %v4645 = vld [vmem:[%s4599 + $0xd1] sm:$0xff]
      %v4646 = vld [vmem:[%s4599 + $0xe9] sm:$0xff]
      %v4647 = vld [vmem:[%s4599 + $0xf1] sm:$0xff]
      %v4648 = vld [vmem:[%s4599 + $0x109] sm:$0xff]
      %v4649 = vld [vmem:[%s4599 + $0x111] sm:$0xff]
      %v4650 = vld [vmem:[%s4599 + $0x129] sm:$0xff]
      %v4651 = vld [vmem:[%s4599 + $0x131] sm:$0xff]
      %v4652 = vld [vmem:[%s4599 + $0x149] sm:$0xff]
      %v4653 = vld [vmem:[%s4599 + $0x151] sm:$0xff]
      %v4654 = vld [vmem:[%s4599 + $0x169] sm:$0xff]
      %v4655 = vld [vmem:[%s4599 + $0x171] sm:$0xff]
      %v4656 = vld [vmem:[%s4599 + $0x189] sm:$0xff]
      %v4657 = vld [vmem:[%s4599 + $0x191] sm:$0xff]
      %v4658 = vld [vmem:[%s4599 + $0x1a9] sm:$0xff]
      %v4659 = vld [vmem:[%s4599 + $0x1b1] sm:$0xff]
      %v4660 = vld [vmem:[%s4599 + $0x1c9] sm:$0xff]
      %v4661 = vld [vmem:[%s4599 + $0x1d1] sm:$0xff]
      %v4662 = vld [vmem:[%s4599 + $0x1e9] sm:$0xff]
      %v4663 = vld [vmem:[%s4599 + $0x1f1] sm:$0xff]
      %4696 = vrot.lane.b32.xlu0 %v4567, 4
      %v4697 = vpop.permute.xlu0 %4696
      %4698 = vrot.lane.b32.xlu0 %v4568, 4
      %v4699 = vpop.permute.xlu0 %4698
      %4700 = vrot.lane.b32.xlu0 %v4569, 4
      %v4701 = vpop.permute.xlu0 %4700
      %4702 = vrot.lane.b32.xlu0 %v4570, 4
      %v4703 = vpop.permute.xlu0 %4702
      %4704 = vrot.lane.b32.xlu0 %v4571, 4
      %v4705 = vpop.permute.xlu0 %4704
      %4706 = vrot.lane.b32.xlu0 %v4572, 4
      %v4707 = vpop.permute.xlu0 %4706
      %4708 = vrot.lane.b32.xlu0 %v4573, 4
      %v4709 = vpop.permute.xlu0 %4708
      %4710 = vrot.lane.b32.xlu0 %v4574, 4
      %v4711 = vpop.permute.xlu0 %4710
      %4712 = vrot.lane.b32.xlu0 %v4575, 4
      %v4713 = vpop.permute.xlu0 %4712
      %4714 = vrot.lane.b32.xlu0 %v4576, 4
      %v4715 = vpop.permute.xlu0 %4714
      %4716 = vrot.lane.b32.xlu0 %v4577, 4
      %v4717 = vpop.permute.xlu0 %4716
      %4718 = vrot.lane.b32.xlu0 %v4578, 4
      %v4719 = vpop.permute.xlu0 %4718
      %4720 = vrot.lane.b32.xlu0 %v4579, 4
      %v4721 = vpop.permute.xlu0 %4720
      %4722 = vrot.lane.b32.xlu0 %v4580, 4
      %v4723 = vpop.permute.xlu0 %4722
      %4724 = vrot.lane.b32.xlu0 %v4581, 4
      %v4725 = vpop.permute.xlu0 %4724
      %4726 = vrot.lane.b32.xlu0 %v4582, 4
      %v4727 = vpop.permute.xlu0 %4726
      %4728 = vrot.lane.b32.xlu0 %v4583, 4
      %v4729 = vpop.permute.xlu0 %4728
      %4730 = vrot.lane.b32.xlu0 %v4584, 4
      %v4731 = vpop.permute.xlu0 %4730
      %4732 = vrot.lane.b32.xlu0 %v4585, 4
      %v4733 = vpop.permute.xlu0 %4732
      %4734 = vrot.lane.b32.xlu0 %v4586, 4
      %v4735 = vpop.permute.xlu0 %4734
      %4736 = vrot.lane.b32.xlu0 %v4587, 4
      %v4737 = vpop.permute.xlu0 %4736
      %4738 = vrot.lane.b32.xlu0 %v4588, 4
      %v4739 = vpop.permute.xlu0 %4738
      %4740 = vrot.lane.b32.xlu0 %v4589, 4
      %v4741 = vpop.permute.xlu0 %4740
      %4742 = vrot.lane.b32.xlu0 %v4590, 4
      %v4743 = vpop.permute.xlu0 %4742
      %4744 = vrot.lane.b32.xlu0 %v4591, 4
      %v4745 = vpop.permute.xlu0 %4744
      %4746 = vrot.lane.b32.xlu0 %v4592, 4
      %v4747 = vpop.permute.xlu0 %4746
      %4748 = vrot.lane.b32.xlu0 %v4593, 4
      %v4749 = vpop.permute.xlu0 %4748
      %4750 = vrot.lane.b32.xlu0 %v4594, 4
      %v4751 = vpop.permute.xlu0 %4750
      %4752 = vrot.lane.b32.xlu0 %v4595, 4
      %v4753 = vpop.permute.xlu0 %4752
      %4754 = vrot.lane.b32.xlu0 %v4596, 4
      %v4755 = vpop.permute.xlu0 %4754
      %4756 = vrot.lane.b32.xlu0 %v4597, 4
      %v4757 = vpop.permute.xlu0 %4756
      %4758 = vrot.lane.b32.xlu0 %v4598, 4
      %v4759 = vpop.permute.xlu0 %4758
      %4824 = vrot.lane.b32.xlu0 %v4600, 8
      %v4825 = vpop.permute.xlu0 %4824
      %4826 = vrot.lane.b32.xlu0 %v4601, 8
      %v4827 = vpop.permute.xlu0 %4826
      %4828 = vrot.lane.b32.xlu0 %v4602, 8
      %v4829 = vpop.permute.xlu0 %4828
      %4830 = vrot.lane.b32.xlu0 %v4603, 8
      %v4831 = vpop.permute.xlu0 %4830
      %4832 = vrot.lane.b32.xlu0 %v4604, 8
      %v4833 = vpop.permute.xlu0 %4832
      %4834 = vrot.lane.b32.xlu0 %v4605, 8
      %v4835 = vpop.permute.xlu0 %4834
      %4836 = vrot.lane.b32.xlu0 %v4606, 8
      %v4837 = vpop.permute.xlu0 %4836
      %4838 = vrot.lane.b32.xlu0 %v4607, 8
      %v4839 = vpop.permute.xlu0 %4838
      %4840 = vrot.lane.b32.xlu0 %v4608, 8
      %v4841 = vpop.permute.xlu0 %4840
      %4842 = vrot.lane.b32.xlu0 %v4609, 8
      %v4843 = vpop.permute.xlu0 %4842
      %4844 = vrot.lane.b32.xlu0 %v4610, 8
      %v4845 = vpop.permute.xlu0 %4844
      %4846 = vrot.lane.b32.xlu0 %v4611, 8
      %v4847 = vpop.permute.xlu0 %4846
      %4848 = vrot.lane.b32.xlu0 %v4612, 8
      %v4849 = vpop.permute.xlu0 %4848
      %4850 = vrot.lane.b32.xlu0 %v4613, 8
      %v4851 = vpop.permute.xlu0 %4850
      %4852 = vrot.lane.b32.xlu0 %v4614, 8
      %v4853 = vpop.permute.xlu0 %4852
      %4854 = vrot.lane.b32.xlu0 %v4615, 8
      %v4855 = vpop.permute.xlu0 %4854
      %4856 = vrot.lane.b32.xlu0 %v4616, 8
      %v4857 = vpop.permute.xlu0 %4856
      %4858 = vrot.lane.b32.xlu0 %v4617, 8
      %v4859 = vpop.permute.xlu0 %4858
      %4860 = vrot.lane.b32.xlu0 %v4618, 8
      %v4861 = vpop.permute.xlu0 %4860
      %4862 = vrot.lane.b32.xlu0 %v4619, 8
      %v4863 = vpop.permute.xlu0 %4862
      %4864 = vrot.lane.b32.xlu0 %v4620, 8
      %v4865 = vpop.permute.xlu0 %4864
      %4866 = vrot.lane.b32.xlu0 %v4621, 8
      %v4867 = vpop.permute.xlu0 %4866
      %4868 = vrot.lane.b32.xlu0 %v4622, 8
      %v4869 = vpop.permute.xlu0 %4868
      %4870 = vrot.lane.b32.xlu0 %v4623, 8
      %v4871 = vpop.permute.xlu0 %4870
      %4872 = vrot.lane.b32.xlu0 %v4624, 8
      %v4873 = vpop.permute.xlu0 %4872
      %4874 = vrot.lane.b32.xlu0 %v4625, 8
      %v4875 = vpop.permute.xlu0 %4874
      %4876 = vrot.lane.b32.xlu0 %v4626, 8
      %v4877 = vpop.permute.xlu0 %4876
      %4878 = vrot.lane.b32.xlu0 %v4627, 8
      %v4879 = vpop.permute.xlu0 %4878
      %4880 = vrot.lane.b32.xlu0 %v4628, 8
      %v4881 = vpop.permute.xlu0 %4880
      %4882 = vrot.lane.b32.xlu0 %v4629, 8
      %v4883 = vpop.permute.xlu0 %4882
      %4884 = vrot.lane.b32.xlu0 %v4630, 8
      %v4885 = vpop.permute.xlu0 %4884
      %4886 = vrot.lane.b32.xlu0 %v4631, 8
      %v4887 = vpop.permute.xlu0 %4886
      %4952 = vrot.lane.b32.xlu0 %v4632, 12
      %v4953 = vpop.permute.xlu0 %4952
      %4954 = vrot.lane.b32.xlu0 %v4633, 12
      %v4955 = vpop.permute.xlu0 %4954
      %4956 = vrot.lane.b32.xlu0 %v4634, 12
      %v4957 = vpop.permute.xlu0 %4956
      %4958 = vrot.lane.b32.xlu0 %v4635, 12
      %v4959 = vpop.permute.xlu0 %4958
      %4960 = vrot.lane.b32.xlu0 %v4636, 12
      %v4961 = vpop.permute.xlu0 %4960
      %4962 = vrot.lane.b32.xlu0 %v4637, 12
      %v4963 = vpop.permute.xlu0 %4962
      %4964 = vrot.lane.b32.xlu0 %v4638, 12
      %v4965 = vpop.permute.xlu0 %4964
      %4966 = vrot.lane.b32.xlu0 %v4639, 12
      %v4967 = vpop.permute.xlu0 %4966
      %4968 = vrot.lane.b32.xlu0 %v4640, 12
      %v4969 = vpop.permute.xlu0 %4968
      %4970 = vrot.lane.b32.xlu0 %v4641, 12
      %v4971 = vpop.permute.xlu0 %4970
      %4972 = vrot.lane.b32.xlu0 %v4642, 12
      %v4973 = vpop.permute.xlu0 %4972
      %4974 = vrot.lane.b32.xlu0 %v4643, 12
      %v4975 = vpop.permute.xlu0 %4974
      %4976 = vrot.lane.b32.xlu0 %v4644, 12
      %v4977 = vpop.permute.xlu0 %4976
      %4978 = vrot.lane.b32.xlu0 %v4645, 12
      %v4979 = vpop.permute.xlu0 %4978
      %4980 = vrot.lane.b32.xlu0 %v4646, 12
      %v4981 = vpop.permute.xlu0 %4980
      %4982 = vrot.lane.b32.xlu0 %v4647, 12
      %v4983 = vpop.permute.xlu0 %4982
      %4984 = vrot.lane.b32.xlu0 %v4648, 12
      %v4985 = vpop.permute.xlu0 %4984
      %4986 = vrot.lane.b32.xlu0 %v4649, 12
      %v4987 = vpop.permute.xlu0 %4986
      %4988 = vrot.lane.b32.xlu0 %v4650, 12
      %v4989 = vpop.permute.xlu0 %4988
      %4990 = vrot.lane.b32.xlu0 %v4651, 12
      %v4991 = vpop.permute.xlu0 %4990
      %4992 = vrot.lane.b32.xlu0 %v4652, 12
      %v4993 = vpop.permute.xlu0 %4992
      %4994 = vrot.lane.b32.xlu0 %v4653, 12
      %v4995 = vpop.permute.xlu0 %4994
      %4996 = vrot.lane.b32.xlu0 %v4654, 12
      %v4997 = vpop.permute.xlu0 %4996
      %4998 = vrot.lane.b32.xlu0 %v4655, 12
      %v4999 = vpop.permute.xlu0 %4998
      %5000 = vrot.lane.b32.xlu0 %v4656, 12
      %v5001 = vpop.permute.xlu0 %5000
      %5002 = vrot.lane.b32.xlu0 %v4657, 12
      %v5003 = vpop.permute.xlu0 %5002
      %5004 = vrot.lane.b32.xlu0 %v4658, 12
      %v5005 = vpop.permute.xlu0 %5004
      %5006 = vrot.lane.b32.xlu0 %v4659, 12
      %v5007 = vpop.permute.xlu0 %5006
      %5008 = vrot.lane.b32.xlu0 %v4660, 12
      %v5009 = vpop.permute.xlu0 %5008
      %5010 = vrot.lane.b32.xlu0 %v4661, 12
      %v5011 = vpop.permute.xlu0 %5010
      %5012 = vrot.lane.b32.xlu0 %v4662, 12
      %v5013 = vpop.permute.xlu0 %5012
      %5014 = vrot.lane.b32.xlu0 %v4663, 12
      %v5015 = vpop.permute.xlu0 %5014
      %v5048 = vsel %vm419, %v4535, %v4697
      %v5049 = vsel %vm419, %v4536, %v4699
      %v5050 = vsel %vm419, %v4537, %v4701
      %v5051 = vsel %vm419, %v4538, %v4703
      %v5052 = vsel %vm419, %v4539, %v4705
      %v5053 = vsel %vm419, %v4540, %v4707
      %v5054 = vsel %vm419, %v4541, %v4709
      %v5055 = vsel %vm419, %v4542, %v4711
      %v5056 = vsel %vm419, %v4543, %v4713
      %v5057 = vsel %vm419, %v4544, %v4715
      %v5058 = vsel %vm419, %v4545, %v4717
      %v5059 = vsel %vm419, %v4546, %v4719
      %v5060 = vsel %vm419, %v4547, %v4721
      %v5061 = vsel %vm419, %v4548, %v4723
      %v5062 = vsel %vm419, %v4549, %v4725
      %v5063 = vsel %vm419, %v4550, %v4727
      %v5064 = vsel %vm419, %v4551, %v4729
      %v5065 = vsel %vm419, %v4552, %v4731
      %v5066 = vsel %vm419, %v4553, %v4733
      %v5067 = vsel %vm419, %v4554, %v4735
      %v5068 = vsel %vm419, %v4555, %v4737
      %v5069 = vsel %vm419, %v4556, %v4739
      %v5070 = vsel %vm419, %v4557, %v4741
      %v5071 = vsel %vm419, %v4558, %v4743
      %v5072 = vsel %vm419, %v4559, %v4745
      %v5073 = vsel %vm419, %v4560, %v4747
      %v5074 = vsel %vm419, %v4561, %v4749
      %v5075 = vsel %vm419, %v4562, %v4751
      %v5076 = vsel %vm419, %v4563, %v4753
      %v5077 = vsel %vm419, %v4564, %v4755
      %v5078 = vsel %vm419, %v4565, %v4757
      %v5079 = vsel %vm419, %v4566, %v4759
      %v5080 = vsel %vm1840, %v5048, %v4825
      %v5081 = vsel %vm1840, %v5049, %v4827
      %v5082 = vsel %vm1840, %v5050, %v4829
      %v5083 = vsel %vm1840, %v5051, %v4831
      %v5084 = vsel %vm1840, %v5052, %v4833
      %v5085 = vsel %vm1840, %v5053, %v4835
      %v5086 = vsel %vm1840, %v5054, %v4837
      %v5087 = vsel %vm1840, %v5055, %v4839
      %v5088 = vsel %vm1840, %v5056, %v4841
      %v5089 = vsel %vm1840, %v5057, %v4843
      %v5090 = vsel %vm1840, %v5058, %v4845
      %v5091 = vsel %vm1840, %v5059, %v4847
      %v5092 = vsel %vm1840, %v5060, %v4849
      %v5093 = vsel %vm1840, %v5061, %v4851
      %v5094 = vsel %vm1840, %v5062, %v4853
      %v5095 = vsel %vm1840, %v5063, %v4855
      %v5096 = vsel %vm1840, %v5064, %v4857
      %v5097 = vsel %vm1840, %v5065, %v4859
      %v5098 = vsel %vm1840, %v5066, %v4861
      %v5099 = vsel %vm1840, %v5067, %v4863
      %v5100 = vsel %vm1840, %v5068, %v4865
      %v5101 = vsel %vm1840, %v5069, %v4867
      %v5102 = vsel %vm1840, %v5070, %v4869
      %v5103 = vsel %vm1840, %v5071, %v4871
      %v5104 = vsel %vm1840, %v5072, %v4873
      %v5105 = vsel %vm1840, %v5073, %v4875
      %v5106 = vsel %vm1840, %v5074, %v4877
      %v5107 = vsel %vm1840, %v5075, %v4879
      %v5108 = vsel %vm1840, %v5076, %v4881
      %v5109 = vsel %vm1840, %v5077, %v4883
      %v5110 = vsel %vm1840, %v5078, %v4885
      %v5111 = vsel %vm1840, %v5079, %v4887
      %v5112 = vsel %vm1873, %v5080, %v4953
      %v5113 = vsel %vm1873, %v5081, %v4955
      %v5114 = vsel %vm1873, %v5082, %v4957
      %v5115 = vsel %vm1873, %v5083, %v4959
      %v5116 = vsel %vm1873, %v5084, %v4961
      %v5117 = vsel %vm1873, %v5085, %v4963
      %v5118 = vsel %vm1873, %v5086, %v4965
      %v5119 = vsel %vm1873, %v5087, %v4967
      %v5120 = vsel %vm1873, %v5088, %v4969
      %v5121 = vsel %vm1873, %v5089, %v4971
      %v5122 = vsel %vm1873, %v5090, %v4973
      %v5123 = vsel %vm1873, %v5091, %v4975
      %v5124 = vsel %vm1873, %v5092, %v4977
      %v5125 = vsel %vm1873, %v5093, %v4979
      %v5126 = vsel %vm1873, %v5094, %v4981
      %v5127 = vsel %vm1873, %v5095, %v4983
      %v5128 = vsel %vm1873, %v5096, %v4985
      %v5129 = vsel %vm1873, %v5097, %v4987
      %v5130 = vsel %vm1873, %v5098, %v4989
      %v5131 = vsel %vm1873, %v5099, %v4991
      %v5132 = vsel %vm1873, %v5100, %v4993
      %v5133 = vsel %vm1873, %v5101, %v4995
      %v5134 = vsel %vm1873, %v5102, %v4997
      %v5135 = vsel %vm1873, %v5103, %v4999
      %v5136 = vsel %vm1873, %v5104, %v5001
      %v5137 = vsel %vm1873, %v5105, %v5003
      %v5138 = vsel %vm1873, %v5106, %v5005
      %v5139 = vsel %vm1873, %v5107, %v5007
      %v5140 = vsel %vm1873, %v5108, %v5009
      %v5141 = vsel %vm1873, %v5109, %v5011
      %v5142 = vsel %vm1873, %v5110, %v5013
      %v5143 = vsel %vm1873, %v5111, %v5015
      %v5144 = vld [vmem:[%s3] sm:$0xff]
      %v5145 = vld [vmem:[%s3 + $0x8] sm:$0xff]
      %v5146 = vld [vmem:[%s8] sm:$0x1]
      %v5148 = vlaneseq
      %v5149 = vshrl.u32 %v5148, 7
      %v5150 = vsub.s32 0, %v5149
      %v5151 = vrot.slane %v5146, %v5150
      %v5154 = vsel %vm1906, %v5112, 0
      %v5157 = vsel %vm1906, %v5113, 0
      %v5160 = vsel %vm1906, %v5114, 0
      %v5163 = vsel %vm1906, %v5115, 0
      %v5166 = vsel %vm1906, %v5116, 0
      %v5169 = vsel %vm1906, %v5117, 0
      %v5172 = vsel %vm1906, %v5118, 0
      %v5175 = vsel %vm1906, %v5119, 0
      %v5178 = vsel %vm1906, %v5120, 0
      %v5181 = vsel %vm1906, %v5121, 0
      %v5184 = vsel %vm1906, %v5122, 0
      %v5187 = vsel %vm1906, %v5123, 0
      %v5190 = vsel %vm1906, %v5124, 0
      %v5193 = vsel %vm1906, %v5125, 0
      %v5196 = vsel %vm1906, %v5126, 0
      %v5199 = vsel %vm1906, %v5127, 0
      %v5202 = vsel %vm1906, %v5128, 0
      %v5205 = vsel %vm1906, %v5129, 0
      %v5208 = vsel %vm1906, %v5130, 0
      %v5211 = vsel %vm1906, %v5131, 0
      %v5214 = vsel %vm1906, %v5132, 0
      %v5217 = vsel %vm1906, %v5133, 0
      %v5220 = vsel %vm1906, %v5134, 0
      %v5223 = vsel %vm1906, %v5135, 0
      %v5226 = vsel %vm1906, %v5136, 0
      %v5229 = vsel %vm1906, %v5137, 0
      %v5232 = vsel %vm1906, %v5138, 0
      %v5235 = vsel %vm1906, %v5139, 0
      %v5238 = vsel %vm1906, %v5140, 0
      %v5241 = vsel %vm1906, %v5141, 0
      %v5244 = vsel %vm1906, %v5142, 0
      %v5247 = vsel %vm1906, %v5143, 0
      %5249 = vmatprep.subr.mxu0 0.0
      %5250 = vmatpush1.msra.mxu0 %v5144
      %5251 = vmatprep.subr.mxu0 0.0
      %5252 = vmatpush1.msra.mxu0 %v5145
      %5253 = vmatprep.subr.mxu0 0.0
      %5254 = vmatpush1.msra.mxu0 0.0
      %5255 = vmatprep.subr.mxu0 0.0
      %5256 = vmatpush1.msra.mxu0 0.0
      %5257 = vmatprep.subr.mxu0 0.0
      %5258 = vmatpush1.msra.mxu0 0.0
      %5259 = vmatprep.subr.mxu0 0.0
      %5260 = vmatpush1.msra.mxu0 0.0
      %5261 = vmatprep.subr.mxu0 0.0
      %5262 = vmatpush1.msra.mxu0 0.0
      %5263 = vmatprep.subr.mxu0 0.0
      %5264 = vmatpush1.msra.mxu0 0.0
      %5265 = vmatprep.subr.mxu0 0.0
      %5266 = vmatpush1.msra.mxu0 0.0
      %5267 = vmatprep.subr.mxu0 0.0
      %5268 = vmatpush1.msra.mxu0 0.0
      %5269 = vmatprep.subr.mxu0 0.0
      %5270 = vmatpush1.msra.mxu0 0.0
      %5271 = vmatprep.subr.mxu0 0.0
      %5272 = vmatpush1.msra.mxu0 0.0
      %5273 = vmatprep.subr.mxu0 0.0
      %5274 = vmatpush1.msra.mxu0 0.0
      %5275 = vmatprep.subr.mxu0 0.0
      %5276 = vmatpush1.msra.mxu0 0.0
      %5277 = vmatprep.subr.mxu0 0.0
      %5278 = vmatpush1.msra.mxu0 0.0
      %5279 = vmatprep.subr.mxu0 0.0
      %5280 = vmatpush1.msra.mxu0 0.0
      %5281 = vmatprep.subr.mxu0 0.0
      %5282 = vmatpush1.msra.mxu0 0.0
      %5283 = vmatprep.subr.mxu0 0.0
      %5284 = vmatpush1.msra.mxu0 0.0
      %5285 = vmatprep.subr.mxu0 0.0
      %5286 = vmatpush1.msra.mxu0 0.0
      %5287 = vmatprep.subr.mxu0 0.0
      %5288 = vmatpush1.msra.mxu0 0.0
      %5289 = vmatprep.subr.mxu0 0.0
      %5290 = vmatpush1.msra.mxu0 0.0
      %5291 = vmatprep.subr.mxu0 0.0
      %5292 = vmatpush1.msra.mxu0 0.0
      %5293 = vmatprep.subr.mxu0 0.0
      %5294 = vmatpush1.msra.mxu0 0.0
      %5295 = vmatprep.subr.mxu0 0.0
      %5296 = vmatpush1.msra.mxu0 0.0
      %5297 = vmatprep.subr.mxu0 0.0
      %5298 = vmatpush1.msra.mxu0 0.0
      %5299 = vmatprep.subr.mxu0 0.0
      %5300 = vmatpush1.msra.mxu0 0.0
      %5301 = vmatprep.subr.mxu0 0.0
      %5302 = vmatpush1.msra.mxu0 0.0
      %5303 = vmatprep.subr.mxu0 0.0
      %5304 = vmatpush1.msra.mxu0 0.0
      %5305 = vmatprep.subr.mxu0 0.0
      %5306 = vmatpush1.msra.mxu0 0.0
      %5307 = vmatprep.subr.mxu0 0.0
      %5308 = vmatpush1.msra.mxu0 0.0
      %5309 = vmatprep.subr.mxu0 0.0
      %5310 = vmatpush1.msra.mxu0 0.0
      %5311 = vmatprep.subr.mxu0 0.0
      %5312 = vmatpush1.msra.mxu0 0.0
      %5313 = vmatprep.mubr.f32.mxu0 0.0
      %5314 = vmatmul.mubr.f32.gmra.mrb[0].mxu0 %v5154
      %v5315 = vpop.f32.mrb[0].mxu0
      %v5316 = vadd.f32 %v5151, %v5315
      %v5317 = vpop.f32.mrb[0].mxu0
      %5318 = vmatprep.mubr.f32.mxu0 0.0
      %5319 = vmatmul.mubr.f32.gmra.mrb[0].mxu0 %v5157
      %v5320 = vpop.f32.mrb[0].mxu0
      %v5321 = vadd.f32 %v5151, %v5320
      %v5322 = vpop.f32.mrb[0].mxu0
      %5323 = vmatprep.mubr.f32.mxu0 0.0
      %5324 = vmatmul.mubr.f32.gmra.mrb[0].mxu0 %v5160
      %v5325 = vpop.f32.mrb[0].mxu0
      %v5326 = vadd.f32 %v5151, %v5325
      %v5327 = vpop.f32.mrb[0].mxu0
      %5328 = vmatprep.mubr.f32.mxu0 0.0
      %5329 = vmatmul.mubr.f32.gmra.mrb[0].mxu0 %v5163
      %v5330 = vpop.f32.mrb[0].mxu0
      %v5331 = vadd.f32 %v5151, %v5330
      %v5332 = vpop.f32.mrb[0].mxu0
      %5333 = vmatprep.mubr.f32.mxu0 0.0
      %5334 = vmatmul.mubr.f32.gmra.mrb[0].mxu0 %v5166
      %v5335 = vpop.f32.mrb[0].mxu0
      %v5336 = vadd.f32 %v5151, %v5335
      %v5337 = vpop.f32.mrb[0].mxu0
      %5338 = vmatprep.mubr.f32.mxu0 0.0
      %5339 = vmatmul.mubr.f32.gmra.mrb[0].mxu0 %v5169
      %v5340 = vpop.f32.mrb[0].mxu0
      %v5341 = vadd.f32 %v5151, %v5340
      %v5342 = vpop.f32.mrb[0].mxu0
      %5343 = vmatprep.mubr.f32.mxu0 0.0
      %5344 = vmatmul.mubr.f32.gmra.mrb[0].mxu0 %v5172
      %v5345 = vpop.f32.mrb[0].mxu0
      %v5346 = vadd.f32 %v5151, %v5345
      %v5347 = vpop.f32.mrb[0].mxu0
      %5348 = vmatprep.mubr.f32.mxu0 0.0
      %5349 = vmatmul.mubr.f32.gmra.mrb[0].mxu0 %v5175
      %v5350 = vpop.f32.mrb[0].mxu0
      %v5351 = vadd.f32 %v5151, %v5350
      %v5352 = vpop.f32.mrb[0].mxu0
      %5353 = vmatprep.mubr.f32.mxu0 0.0
      %5354 = vmatmul.mubr.f32.gmra.mrb[0].mxu0 %v5178
      %v5355 = vpop.f32.mrb[0].mxu0
      %v5356 = vadd.f32 %v5151, %v5355
      %v5357 = vpop.f32.mrb[0].mxu0
      %5358 = vmatprep.mubr.f32.mxu0 0.0
      %5359 = vmatmul.mubr.f32.gmra.mrb[0].mxu0 %v5181
      %v5360 = vpop.f32.mrb[0].mxu0
      %v5361 = vadd.f32 %v5151, %v5360
      %v5362 = vpop.f32.mrb[0].mxu0
      %5363 = vmatprep.mubr.f32.mxu0 0.0
      %5364 = vmatmul.mubr.f32.gmra.mrb[0].mxu0 %v5184
      %v5365 = vpop.f32.mrb[0].mxu0
      %v5366 = vadd.f32 %v5151, %v5365
      %v5367 = vpop.f32.mrb[0].mxu0
      %5368 = vmatprep.mubr.f32.mxu0 0.0
      %5369 = vmatmul.mubr.f32.gmra.mrb[0].mxu0 %v5187
      %v5370 = vpop.f32.mrb[0].mxu0
      %v5371 = vadd.f32 %v5151, %v5370
      %v5372 = vpop.f32.mrb[0].mxu0
      %5373 = vmatprep.mubr.f32.mxu0 0.0
      %5374 = vmatmul.mubr.f32.gmra.mrb[0].mxu0 %v5190
      %v5375 = vpop.f32.mrb[0].mxu0
      %v5376 = vadd.f32 %v5151, %v5375
      %v5377 = vpop.f32.mrb[0].mxu0
      %5378 = vmatprep.mubr.f32.mxu0 0.0
      %5379 = vmatmul.mubr.f32.gmra.mrb[0].mxu0 %v5193
      %v5380 = vpop.f32.mrb[0].mxu0
      %v5381 = vadd.f32 %v5151, %v5380
      %v5382 = vpop.f32.mrb[0].mxu0
      %5383 = vmatprep.mubr.f32.mxu0 0.0
      %5384 = vmatmul.mubr.f32.gmra.mrb[0].mxu0 %v5196
      %v5385 = vpop.f32.mrb[0].mxu0
      %v5386 = vadd.f32 %v5151, %v5385
      %v5387 = vpop.f32.mrb[0].mxu0
      %5388 = vmatprep.mubr.f32.mxu0 0.0
      %5389 = vmatmul.mubr.f32.gmra.mrb[0].mxu0 %v5199
      %v5390 = vpop.f32.mrb[0].mxu0
      %v5391 = vadd.f32 %v5151, %v5390
      %v5392 = vpop.f32.mrb[0].mxu0
      %5393 = vmatprep.mubr.f32.mxu0 0.0
      %5394 = vmatmul.mubr.f32.gmra.mrb[0].mxu0 %v5202
      %v5395 = vpop.f32.mrb[0].mxu0
      %v5396 = vadd.f32 %v5151, %v5395
      %v5397 = vpop.f32.mrb[0].mxu0
      %5398 = vmatprep.mubr.f32.mxu0 0.0
      %5399 = vmatmul.mubr.f32.gmra.mrb[0].mxu0 %v5205
      %v5400 = vpop.f32.mrb[0].mxu0
      %v5401 = vadd.f32 %v5151, %v5400
      %v5402 = vpop.f32.mrb[0].mxu0
      %5403 = vmatprep.mubr.f32.mxu0 0.0
      %5404 = vmatmul.mubr.f32.gmra.mrb[0].mxu0 %v5208
      %v5405 = vpop.f32.mrb[0].mxu0
      %v5406 = vadd.f32 %v5151, %v5405
      %v5407 = vpop.f32.mrb[0].mxu0
      %5408 = vmatprep.mubr.f32.mxu0 0.0
      %5409 = vmatmul.mubr.f32.gmra.mrb[0].mxu0 %v5211
      %v5410 = vpop.f32.mrb[0].mxu0
      %v5411 = vadd.f32 %v5151, %v5410
      %v5412 = vpop.f32.mrb[0].mxu0
      %5413 = vmatprep.mubr.f32.mxu0 0.0
      %5414 = vmatmul.mubr.f32.gmra.mrb[0].mxu0 %v5214
      %v5415 = vpop.f32.mrb[0].mxu0
      %v5416 = vadd.f32 %v5151, %v5415
      %v5417 = vpop.f32.mrb[0].mxu0
      %5418 = vmatprep.mubr.f32.mxu0 0.0
      %5419 = vmatmul.mubr.f32.gmra.mrb[0].mxu0 %v5217
      %v5420 = vpop.f32.mrb[0].mxu0
      %v5421 = vadd.f32 %v5151, %v5420
      %v5422 = vpop.f32.mrb[0].mxu0
      %5423 = vmatprep.mubr.f32.mxu0 0.0
      %5424 = vmatmul.mubr.f32.gmra.mrb[0].mxu0 %v5220
      %v5425 = vpop.f32.mrb[0].mxu0
      %v5426 = vadd.f32 %v5151, %v5425
      %v5427 = vpop.f32.mrb[0].mxu0
      %5428 = vmatprep.mubr.f32.mxu0 0.0
      %5429 = vmatmul.mubr.f32.gmra.mrb[0].mxu0 %v5223
      %v5430 = vpop.f32.mrb[0].mxu0
      %v5431 = vadd.f32 %v5151, %v5430
      %v5432 = vpop.f32.mrb[0].mxu0
      %5433 = vmatprep.mubr.f32.mxu0 0.0
      %5434 = vmatmul.mubr.f32.gmra.mrb[0].mxu0 %v5226
      %v5435 = vpop.f32.mrb[0].mxu0
      %v5436 = vadd.f32 %v5151, %v5435
      %v5437 = vpop.f32.mrb[0].mxu0
      %5438 = vmatprep.mubr.f32.mxu0 0.0
      %5439 = vmatmul.mubr.f32.gmra.mrb[0].mxu0 %v5229
      %v5440 = vpop.f32.mrb[0].mxu0
      %v5441 = vadd.f32 %v5151, %v5440
      %v5442 = vpop.f32.mrb[0].mxu0
      %5443 = vmatprep.mubr.f32.mxu0 0.0
      %5444 = vmatmul.mubr.f32.gmra.mrb[0].mxu0 %v5232
      %v5445 = vpop.f32.mrb[0].mxu0
      %v5446 = vadd.f32 %v5151, %v5445
      %v5447 = vpop.f32.mrb[0].mxu0
      %5448 = vmatprep.mubr.f32.mxu0 0.0
      %5449 = vmatmul.mubr.f32.gmra.mrb[0].mxu0 %v5235
      %v5450 = vpop.f32.mrb[0].mxu0
      %v5451 = vadd.f32 %v5151, %v5450
      %v5452 = vpop.f32.mrb[0].mxu0
      %5453 = vmatprep.mubr.f32.mxu0 0.0
      %5454 = vmatmul.mubr.f32.gmra.mrb[0].mxu0 %v5238
      %v5455 = vpop.f32.mrb[0].mxu0
      %v5456 = vadd.f32 %v5151, %v5455
      %v5457 = vpop.f32.mrb[0].mxu0
      %5458 = vmatprep.mubr.f32.mxu0 0.0
      %5459 = vmatmul.mubr.f32.gmra.mrb[0].mxu0 %v5241
      %v5460 = vpop.f32.mrb[0].mxu0
      %v5461 = vadd.f32 %v5151, %v5460
      %v5462 = vpop.f32.mrb[0].mxu0
      %5463 = vmatprep.mubr.f32.mxu0 0.0
      %5464 = vmatmul.mubr.f32.gmra.mrb[0].mxu0 %v5244
      %v5465 = vpop.f32.mrb[0].mxu0
      %v5466 = vadd.f32 %v5151, %v5465
      %v5467 = vpop.f32.mrb[0].mxu0
      %5468 = vmatprep.mubr.f32.mxu0 0.0
      %5469 = vmatmul.mubr.f32.gmra.mrb[0].mxu0 %v5247
      %v5470 = vpop.f32.mrb[0].mxu0
      %v5471 = vadd.f32 %v5151, %v5470
      %v5472 = vpop.f32.mrb[0].mxu0
      %5473 = vdwg.mxu0
      %v5474 = vmax.f32 %v5316, 0.0
      %v5475 = vmax.f32 %v5321, 0.0
      %v5476 = vmax.f32 %v5326, 0.0
      %v5477 = vmax.f32 %v5331, 0.0
      %v5478 = vmax.f32 %v5336, 0.0
      %v5479 = vmax.f32 %v5341, 0.0
      %v5480 = vmax.f32 %v5346, 0.0
      %v5481 = vmax.f32 %v5351, 0.0
      %v5482 = vmax.f32 %v5356, 0.0
      %v5483 = vmax.f32 %v5361, 0.0
      %v5484 = vmax.f32 %v5366, 0.0
      %v5485 = vmax.f32 %v5371, 0.0
      %v5486 = vmax.f32 %v5376, 0.0
      %v5487 = vmax.f32 %v5381, 0.0
      %v5488 = vmax.f32 %v5386, 0.0
      %v5489 = vmax.f32 %v5391, 0.0
      %v5490 = vmax.f32 %v5396, 0.0
      %v5491 = vmax.f32 %v5401, 0.0
      %v5492 = vmax.f32 %v5406, 0.0
      %v5493 = vmax.f32 %v5411, 0.0
      %v5494 = vmax.f32 %v5416, 0.0
      %v5495 = vmax.f32 %v5421, 0.0
      %v5496 = vmax.f32 %v5426, 0.0
      %v5497 = vmax.f32 %v5431, 0.0
      %v5498 = vmax.f32 %v5436, 0.0
      %v5499 = vmax.f32 %v5441, 0.0
      %v5500 = vmax.f32 %v5446, 0.0
      %v5501 = vmax.f32 %v5451, 0.0
      %v5502 = vmax.f32 %v5456, 0.0
      %v5503 = vmax.f32 %v5461, 0.0
      %v5504 = vmax.f32 %v5466, 0.0
      %v5505 = vmax.f32 %v5471, 0.0
      %5538 = vrot.lane.b32.xlu0 %v4429, 4
      %v5539 = vpop.permute.xlu0 %5538
      %5540 = vrot.lane.b32.xlu0 %v4430, 4
      %v5541 = vpop.permute.xlu0 %5540
      %5542 = vrot.lane.b32.xlu0 %v4431, 4
      %v5543 = vpop.permute.xlu0 %5542
      %5544 = vrot.lane.b32.xlu0 %v4432, 4
      %v5545 = vpop.permute.xlu0 %5544
      %5546 = vrot.lane.b32.xlu0 %v4433, 4
      %v5547 = vpop.permute.xlu0 %5546
      %5548 = vrot.lane.b32.xlu0 %v4434, 4
      %v5549 = vpop.permute.xlu0 %5548
      %5550 = vrot.lane.b32.xlu0 %v4435, 4
      %v5551 = vpop.permute.xlu0 %5550
      %5552 = vrot.lane.b32.xlu0 %v4436, 4
      %v5553 = vpop.permute.xlu0 %5552
      %5554 = vrot.lane.b32.xlu0 %v4437, 4
      %v5555 = vpop.permute.xlu0 %5554
      %5556 = vrot.lane.b32.xlu0 %v4438, 4
      %v5557 = vpop.permute.xlu0 %5556
      %5558 = vrot.lane.b32.xlu0 %v4439, 4
      %v5559 = vpop.permute.xlu0 %5558
      %5560 = vrot.lane.b32.xlu0 %v4440, 4
      %v5561 = vpop.permute.xlu0 %5560
      %5562 = vrot.lane.b32.xlu0 %v4441, 4
      %v5563 = vpop.permute.xlu0 %5562
      %5564 = vrot.lane.b32.xlu0 %v4442, 4
      %v5565 = vpop.permute.xlu0 %5564
      %5566 = vrot.lane.b32.xlu0 %v4443, 4
      %v5567 = vpop.permute.xlu0 %5566
      %5568 = vrot.lane.b32.xlu0 %v4444, 4
      %v5569 = vpop.permute.xlu0 %5568
      %5570 = vrot.lane.b32.xlu0 %v4445, 4
      %v5571 = vpop.permute.xlu0 %5570
      %5572 = vrot.lane.b32.xlu0 %v4446, 4
      %v5573 = vpop.permute.xlu0 %5572
      %5574 = vrot.lane.b32.xlu0 %v4447, 4
      %v5575 = vpop.permute.xlu0 %5574
      %5576 = vrot.lane.b32.xlu0 %v4448, 4
      %v5577 = vpop.permute.xlu0 %5576
      %5578 = vrot.lane.b32.xlu0 %v4449, 4
      %v5579 = vpop.permute.xlu0 %5578
      %5580 = vrot.lane.b32.xlu0 %v4450, 4
      %v5581 = vpop.permute.xlu0 %5580
      %5582 = vrot.lane.b32.xlu0 %v4451, 4
      %v5583 = vpop.permute.xlu0 %5582
      %5584 = vrot.lane.b32.xlu0 %v4452, 4
      %v5585 = vpop.permute.xlu0 %5584
      %5586 = vrot.lane.b32.xlu0 %v4453, 4
      %v5587 = vpop.permute.xlu0 %5586
      %5588 = vrot.lane.b32.xlu0 %v4454, 4
      %v5589 = vpop.permute.xlu0 %5588
      %5590 = vrot.lane.b32.xlu0 %v4455, 4
      %v5591 = vpop.permute.xlu0 %5590
      %5592 = vrot.lane.b32.xlu0 %v4456, 4
      %v5593 = vpop.permute.xlu0 %5592
      %5594 = vrot.lane.b32.xlu0 %v4457, 4
      %v5595 = vpop.permute.xlu0 %5594
      %5596 = vrot.lane.b32.xlu0 %v4458, 4
      %v5597 = vpop.permute.xlu0 %5596
      %5598 = vrot.lane.b32.xlu0 %v4459, 4
      %v5599 = vpop.permute.xlu0 %5598
      %5600 = vrot.lane.b32.xlu0 %v4460, 4
      %v5601 = vpop.permute.xlu0 %5600
      %5666 = vrot.lane.b32.xlu0 %v5474, 8
      %v5667 = vpop.permute.xlu0 %5666
      %5668 = vrot.lane.b32.xlu0 %v5475, 8
      %v5669 = vpop.permute.xlu0 %5668
      %5670 = vrot.lane.b32.xlu0 %v5476, 8
      %v5671 = vpop.permute.xlu0 %5670
      %5672 = vrot.lane.b32.xlu0 %v5477, 8
      %v5673 = vpop.permute.xlu0 %5672
      %5674 = vrot.lane.b32.xlu0 %v5478, 8
      %v5675 = vpop.permute.xlu0 %5674
      %5676 = vrot.lane.b32.xlu0 %v5479, 8
      %v5677 = vpop.permute.xlu0 %5676
      %5678 = vrot.lane.b32.xlu0 %v5480, 8
      %v5679 = vpop.permute.xlu0 %5678
      %5680 = vrot.lane.b32.xlu0 %v5481, 8
      %v5681 = vpop.permute.xlu0 %5680
      %5682 = vrot.lane.b32.xlu0 %v5482, 8
      %v5683 = vpop.permute.xlu0 %5682
      %5684 = vrot.lane.b32.xlu0 %v5483, 8
      %v5685 = vpop.permute.xlu0 %5684
      %5686 = vrot.lane.b32.xlu0 %v5484, 8
      %v5687 = vpop.permute.xlu0 %5686
      %5688 = vrot.lane.b32.xlu0 %v5485, 8
      %v5689 = vpop.permute.xlu0 %5688
      %5690 = vrot.lane.b32.xlu0 %v5486, 8
      %v5691 = vpop.permute.xlu0 %5690
      %5692 = vrot.lane.b32.xlu0 %v5487, 8
      %v5693 = vpop.permute.xlu0 %5692
      %5694 = vrot.lane.b32.xlu0 %v5488, 8
      %v5695 = vpop.permute.xlu0 %5694
      %5696 = vrot.lane.b32.xlu0 %v5489, 8
      %v5697 = vpop.permute.xlu0 %5696
      %5698 = vrot.lane.b32.xlu0 %v5490, 8
      %v5699 = vpop.permute.xlu0 %5698
      %5700 = vrot.lane.b32.xlu0 %v5491, 8
      %v5701 = vpop.permute.xlu0 %5700
      %5702 = vrot.lane.b32.xlu0 %v5492, 8
      %v5703 = vpop.permute.xlu0 %5702
      %5704 = vrot.lane.b32.xlu0 %v5493, 8
      %v5705 = vpop.permute.xlu0 %5704
      %5706 = vrot.lane.b32.xlu0 %v5494, 8
      %v5707 = vpop.permute.xlu0 %5706
      %5708 = vrot.lane.b32.xlu0 %v5495, 8
      %v5709 = vpop.permute.xlu0 %5708
      %5710 = vrot.lane.b32.xlu0 %v5496, 8
      %v5711 = vpop.permute.xlu0 %5710
      %5712 = vrot.lane.b32.xlu0 %v5497, 8
      %v5713 = vpop.permute.xlu0 %5712
      %5714 = vrot.lane.b32.xlu0 %v5498, 8
      %v5715 = vpop.permute.xlu0 %5714
      %5716 = vrot.lane.b32.xlu0 %v5499, 8
      %v5717 = vpop.permute.xlu0 %5716
      %5718 = vrot.lane.b32.xlu0 %v5500, 8
      %v5719 = vpop.permute.xlu0 %5718
      %5720 = vrot.lane.b32.xlu0 %v5501, 8
      %v5721 = vpop.permute.xlu0 %5720
      %5722 = vrot.lane.b32.xlu0 %v5502, 8
      %v5723 = vpop.permute.xlu0 %5722
      %5724 = vrot.lane.b32.xlu0 %v5503, 8
      %v5725 = vpop.permute.xlu0 %5724
      %5726 = vrot.lane.b32.xlu0 %v5504, 8
      %v5727 = vpop.permute.xlu0 %5726
      %5728 = vrot.lane.b32.xlu0 %v5505, 8
      %v5729 = vpop.permute.xlu0 %5728
      %v5762 = vsel %vm419, %v2409, %v5539
      %v5763 = vsel %vm419, %v2410, %v5541
      %v5764 = vsel %vm419, %v2411, %v5543
      %v5765 = vsel %vm419, %v2412, %v5545
      %v5766 = vsel %vm419, %v2413, %v5547
      %v5767 = vsel %vm419, %v2414, %v5549
      %v5768 = vsel %vm419, %v2415, %v5551
      %v5769 = vsel %vm419, %v2416, %v5553
      %v5770 = vsel %vm419, %v2417, %v5555
      %v5771 = vsel %vm419, %v2418, %v5557
      %v5772 = vsel %vm419, %v2419, %v5559
      %v5773 = vsel %vm419, %v2420, %v5561
      %v5774 = vsel %vm419, %v2421, %v5563
      %v5775 = vsel %vm419, %v2422, %v5565
      %v5776 = vsel %vm419, %v2423, %v5567
      %v5777 = vsel %vm419, %v2424, %v5569
      %v5778 = vsel %vm419, %v2425, %v5571
      %v5779 = vsel %vm419, %v2426, %v5573
      %v5780 = vsel %vm419, %v2427, %v5575
      %v5781 = vsel %vm419, %v2428, %v5577
      %v5782 = vsel %vm419, %v2429, %v5579
      %v5783 = vsel %vm419, %v2430, %v5581
      %v5784 = vsel %vm419, %v2431, %v5583
      %v5785 = vsel %vm419, %v2432, %v5585
      %v5786 = vsel %vm419, %v2433, %v5587
      %v5787 = vsel %vm419, %v2434, %v5589
      %v5788 = vsel %vm419, %v2435, %v5591
      %v5789 = vsel %vm419, %v2436, %v5593
      %v5790 = vsel %vm419, %v2437, %v5595
      %v5791 = vsel %vm419, %v2438, %v5597
      %v5792 = vsel %vm419, %v2439, %v5599
      %v5793 = vsel %vm419, %v2440, %v5601
      %v5794 = vsel %vm1840, %v5762, %v5667
      %v5795 = vsel %vm1840, %v5763, %v5669
      %v5796 = vsel %vm1840, %v5764, %v5671
      %v5797 = vsel %vm1840, %v5765, %v5673
      %v5798 = vsel %vm1840, %v5766, %v5675
      %v5799 = vsel %vm1840, %v5767, %v5677
      %v5800 = vsel %vm1840, %v5768, %v5679
      %v5801 = vsel %vm1840, %v5769, %v5681
      %v5802 = vsel %vm1840, %v5770, %v5683
      %v5803 = vsel %vm1840, %v5771, %v5685
      %v5804 = vsel %vm1840, %v5772, %v5687
      %v5805 = vsel %vm1840, %v5773, %v5689
      %v5806 = vsel %vm1840, %v5774, %v5691
      %v5807 = vsel %vm1840, %v5775, %v5693
      %v5808 = vsel %vm1840, %v5776, %v5695
      %v5809 = vsel %vm1840, %v5777, %v5697
      %v5810 = vsel %vm1840, %v5778, %v5699
      %v5811 = vsel %vm1840, %v5779, %v5701
      %v5812 = vsel %vm1840, %v5780, %v5703
      %v5813 = vsel %vm1840, %v5781, %v5705
      %v5814 = vsel %vm1840, %v5782, %v5707
      %v5815 = vsel %vm1840, %v5783, %v5709
      %v5816 = vsel %vm1840, %v5784, %v5711
      %v5817 = vsel %vm1840, %v5785, %v5713
      %v5818 = vsel %vm1840, %v5786, %v5715
      %v5819 = vsel %vm1840, %v5787, %v5717
      %v5820 = vsel %vm1840, %v5788, %v5719
      %v5821 = vsel %vm1840, %v5789, %v5721
      %v5822 = vsel %vm1840, %v5790, %v5723
      %v5823 = vsel %vm1840, %v5791, %v5725
      %v5824 = vsel %vm1840, %v5792, %v5727
      %v5825 = vsel %vm1840, %v5793, %v5729
      %v5826 = vld [vmem:[%s4] sm:$0xff]
      %v5827 = vld [vmem:[%s4 + $0x8] sm:$0xf]
      %v5828 = vld [vmem:[%s9] sm:$0x1]
      %v5830 = vlaneseq
      %v5831 = vshrl.u32 %v5830, 7
      %v5832 = vsub.s32 0, %v5831
      %v5833 = vrot.slane %v5828, %v5832
      %v5836 = vsel %vm1873, %v5794, 0
      %v5839 = vsel %vm1873, %v5795, 0
      %v5842 = vsel %vm1873, %v5796, 0
      %v5845 = vsel %vm1873, %v5797, 0
      %v5848 = vsel %vm1873, %v5798, 0
      %v5851 = vsel %vm1873, %v5799, 0
      %v5854 = vsel %vm1873, %v5800, 0
      %v5857 = vsel %vm1873, %v5801, 0
      %v5860 = vsel %vm1873, %v5802, 0
      %v5863 = vsel %vm1873, %v5803, 0
      %v5866 = vsel %vm1873, %v5804, 0
      %v5869 = vsel %vm1873, %v5805, 0
      %v5872 = vsel %vm1873, %v5806, 0
      %v5875 = vsel %vm1873, %v5807, 0
      %v5878 = vsel %vm1873, %v5808, 0
      %v5881 = vsel %vm1873, %v5809, 0
      %v5884 = vsel %vm1873, %v5810, 0
      %v5887 = vsel %vm1873, %v5811, 0
      %v5890 = vsel %vm1873, %v5812, 0
      %v5893 = vsel %vm1873, %v5813, 0
      %v5896 = vsel %vm1873, %v5814, 0
      %v5899 = vsel %vm1873, %v5815, 0
      %v5902 = vsel %vm1873, %v5816, 0
      %v5905 = vsel %vm1873, %v5817, 0
      %v5908 = vsel %vm1873, %v5818, 0
      %v5911 = vsel %vm1873, %v5819, 0
      %v5914 = vsel %vm1873, %v5820, 0
      %v5917 = vsel %vm1873, %v5821, 0
      %v5920 = vsel %vm1873, %v5822, 0
      %v5923 = vsel %vm1873, %v5823, 0
      %v5926 = vsel %vm1873, %v5824, 0
      %v5929 = vsel %vm1873, %v5825, 0
      %v5932 = vsel %vm2180, %v5827, 0
      %5934 = vmatprep.subr.mxu0 0.0
      %5935 = vmatpush1.msra.mxu0 %v5826
      %5936 = vmatprep.subr.mxu0 0.0
      %5937 = vmatpush1.msra.mxu0 %v5932
      %5938 = vmatprep.subr.mxu0 0.0
      %5939 = vmatpush1.msra.mxu0 0.0
      %5940 = vmatprep.subr.mxu0 0.0
      %5941 = vmatpush1.msra.mxu0 0.0
      %5942 = vmatprep.subr.mxu0 0.0
      %5943 = vmatpush1.msra.mxu0 0.0
      %5944 = vmatprep.subr.mxu0 0.0
      %5945 = vmatpush1.msra.mxu0 0.0
      %5946 = vmatprep.subr.mxu0 0.0
      %5947 = vmatpush1.msra.mxu0 0.0
      %5948 = vmatprep.subr.mxu0 0.0
      %5949 = vmatpush1.msra.mxu0 0.0
      %5950 = vmatprep.subr.mxu0 0.0
      %5951 = vmatpush1.msra.mxu0 0.0
      %5952 = vmatprep.subr.mxu0 0.0
      %5953 = vmatpush1.msra.mxu0 0.0
      %5954 = vmatprep.subr.mxu0 0.0
      %5955 = vmatpush1.msra.mxu0 0.0
      %5956 = vmatprep.subr.mxu0 0.0
      %5957 = vmatpush1.msra.mxu0 0.0
      %5958 = vmatprep.subr.mxu0 0.0
      %5959 = vmatpush1.msra.mxu0 0.0
      %5960 = vmatprep.subr.mxu0 0.0
      %5961 = vmatpush1.msra.mxu0 0.0
      %5962 = vmatprep.subr.mxu0 0.0
      %5963 = vmatpush1.msra.mxu0 0.0
      %5964 = vmatprep.subr.mxu0 0.0
      %5965 = vmatpush1.msra.mxu0 0.0
      %5966 = vmatprep.subr.mxu0 0.0
      %5967 = vmatpush1.msra.mxu0 0.0
      %5968 = vmatprep.subr.mxu0 0.0
      %5969 = vmatpush1.msra.mxu0 0.0
      %5970 = vmatprep.subr.mxu0 0.0
      %5971 = vmatpush1.msra.mxu0 0.0
      %5972 = vmatprep.subr.mxu0 0.0
      %5973 = vmatpush1.msra.mxu0 0.0
      %5974 = vmatprep.subr.mxu0 0.0
      %5975 = vmatpush1.msra.mxu0 0.0
      %5976 = vmatprep.subr.mxu0 0.0
      %5977 = vmatpush1.msra.mxu0 0.0
      %5978 = vmatprep.subr.mxu0 0.0
      %5979 = vmatpush1.msra.mxu0 0.0
      %5980 = vmatprep.subr.mxu0 0.0
      %5981 = vmatpush1.msra.mxu0 0.0
      %5982 = vmatprep.subr.mxu0 0.0
      %5983 = vmatpush1.msra.mxu0 0.0
      %5984 = vmatprep.subr.mxu0 0.0
      %5985 = vmatpush1.msra.mxu0 0.0
      %5986 = vmatprep.subr.mxu0 0.0
      %5987 = vmatpush1.msra.mxu0 0.0
      %5988 = vmatprep.subr.mxu0 0.0
      %5989 = vmatpush1.msra.mxu0 0.0
      %5990 = vmatprep.subr.mxu0 0.0
      %5991 = vmatpush1.msra.mxu0 0.0
      %5992 = vmatprep.subr.mxu0 0.0
      %5993 = vmatpush1.msra.mxu0 0.0
      %5994 = vmatprep.subr.mxu0 0.0
      %5995 = vmatpush1.msra.mxu0 0.0
      %5996 = vmatprep.subr.mxu0 0.0
      %5997 = vmatpush1.msra.mxu0 0.0
      %5998 = vmatprep.mubr.f32.mxu0 0.0
      %5999 = vmatmul.mubr.f32.gmra.mrb[0].mxu0 %v5836
      %v6000 = vpop.f32.mrb[0].mxu0
      %v6001 = vadd.f32 %v5833, %v6000
      %v6002 = vpop.f32.mrb[0].mxu0
      %6003 = vmatprep.mubr.f32.mxu0 0.0
      %6004 = vmatmul.mubr.f32.gmra.mrb[0].mxu0 %v5839
      %v6005 = vpop.f32.mrb[0].mxu0
      %v6006 = vadd.f32 %v5833, %v6005
      %v6007 = vpop.f32.mrb[0].mxu0
      %6008 = vmatprep.mubr.f32.mxu0 0.0
      %6009 = vmatmul.mubr.f32.gmra.mrb[0].mxu0 %v5842
      %v6010 = vpop.f32.mrb[0].mxu0
      %v6011 = vadd.f32 %v5833, %v6010
      %v6012 = vpop.f32.mrb[0].mxu0
      %6013 = vmatprep.mubr.f32.mxu0 0.0
      %6014 = vmatmul.mubr.f32.gmra.mrb[0].mxu0 %v5845
      %v6015 = vpop.f32.mrb[0].mxu0
      %v6016 = vadd.f32 %v5833, %v6015
      %v6017 = vpop.f32.mrb[0].mxu0
      %6018 = vmatprep.mubr.f32.mxu0 0.0
      %6019 = vmatmul.mubr.f32.gmra.mrb[0].mxu0 %v5848
      %v6020 = vpop.f32.mrb[0].mxu0
      %v6021 = vadd.f32 %v5833, %v6020
      %v6022 = vpop.f32.mrb[0].mxu0
      %6023 = vmatprep.mubr.f32.mxu0 0.0
      %6024 = vmatmul.mubr.f32.gmra.mrb[0].mxu0 %v5851
      %v6025 = vpop.f32.mrb[0].mxu0
      %v6026 = vadd.f32 %v5833, %v6025
      %v6027 = vpop.f32.mrb[0].mxu0
      %6028 = vmatprep.mubr.f32.mxu0 0.0
      %6029 = vmatmul.mubr.f32.gmra.mrb[0].mxu0 %v5854
      %v6030 = vpop.f32.mrb[0].mxu0
      %v6031 = vadd.f32 %v5833, %v6030
      %v6032 = vpop.f32.mrb[0].mxu0
      %6033 = vmatprep.mubr.f32.mxu0 0.0
      %6034 = vmatmul.mubr.f32.gmra.mrb[0].mxu0 %v5857
      %v6035 = vpop.f32.mrb[0].mxu0
      %v6036 = vadd.f32 %v5833, %v6035
      %v6037 = vpop.f32.mrb[0].mxu0
      %6038 = vmatprep.mubr.f32.mxu0 0.0
      %6039 = vmatmul.mubr.f32.gmra.mrb[0].mxu0 %v5860
      %v6040 = vpop.f32.mrb[0].mxu0
      %v6041 = vadd.f32 %v5833, %v6040
      %v6042 = vpop.f32.mrb[0].mxu0
      %6043 = vmatprep.mubr.f32.mxu0 0.0
      %6044 = vmatmul.mubr.f32.gmra.mrb[0].mxu0 %v5863
      %v6045 = vpop.f32.mrb[0].mxu0
      %v6046 = vadd.f32 %v5833, %v6045
      %v6047 = vpop.f32.mrb[0].mxu0
      %6048 = vmatprep.mubr.f32.mxu0 0.0
      %6049 = vmatmul.mubr.f32.gmra.mrb[0].mxu0 %v5866
      %v6050 = vpop.f32.mrb[0].mxu0
      %v6051 = vadd.f32 %v5833, %v6050
      %v6052 = vpop.f32.mrb[0].mxu0
      %6053 = vmatprep.mubr.f32.mxu0 0.0
      %6054 = vmatmul.mubr.f32.gmra.mrb[0].mxu0 %v5869
      %v6055 = vpop.f32.mrb[0].mxu0
      %v6056 = vadd.f32 %v5833, %v6055
      %v6057 = vpop.f32.mrb[0].mxu0
      %6058 = vmatprep.mubr.f32.mxu0 0.0
      %6059 = vmatmul.mubr.f32.gmra.mrb[0].mxu0 %v5872
      %v6060 = vpop.f32.mrb[0].mxu0
      %v6061 = vadd.f32 %v5833, %v6060
      %v6062 = vpop.f32.mrb[0].mxu0
      %6063 = vmatprep.mubr.f32.mxu0 0.0
      %6064 = vmatmul.mubr.f32.gmra.mrb[0].mxu0 %v5875
      %v6065 = vpop.f32.mrb[0].mxu0
      %v6066 = vadd.f32 %v5833, %v6065
      %v6067 = vpop.f32.mrb[0].mxu0
      %6068 = vmatprep.mubr.f32.mxu0 0.0
      %6069 = vmatmul.mubr.f32.gmra.mrb[0].mxu0 %v5878
      %v6070 = vpop.f32.mrb[0].mxu0
      %v6071 = vadd.f32 %v5833, %v6070
      %v6072 = vpop.f32.mrb[0].mxu0
      %6073 = vmatprep.mubr.f32.mxu0 0.0
      %6074 = vmatmul.mubr.f32.gmra.mrb[0].mxu0 %v5881
      %v6075 = vpop.f32.mrb[0].mxu0
      %v6076 = vadd.f32 %v5833, %v6075
      %v6077 = vpop.f32.mrb[0].mxu0
      %6078 = vmatprep.mubr.f32.mxu0 0.0
      %6079 = vmatmul.mubr.f32.gmra.mrb[0].mxu0 %v5884
      %v6080 = vpop.f32.mrb[0].mxu0
      %v6081 = vadd.f32 %v5833, %v6080
      %v6082 = vpop.f32.mrb[0].mxu0
      %6083 = vmatprep.mubr.f32.mxu0 0.0
      %6084 = vmatmul.mubr.f32.gmra.mrb[0].mxu0 %v5887
      %v6085 = vpop.f32.mrb[0].mxu0
      %v6086 = vadd.f32 %v5833, %v6085
      %v6087 = vpop.f32.mrb[0].mxu0
      %6088 = vmatprep.mubr.f32.mxu0 0.0
      %6089 = vmatmul.mubr.f32.gmra.mrb[0].mxu0 %v5890
      %v6090 = vpop.f32.mrb[0].mxu0
      %v6091 = vadd.f32 %v5833, %v6090
      %v6092 = vpop.f32.mrb[0].mxu0
      %6093 = vmatprep.mubr.f32.mxu0 0.0
      %6094 = vmatmul.mubr.f32.gmra.mrb[0].mxu0 %v5893
      %v6095 = vpop.f32.mrb[0].mxu0
      %v6096 = vadd.f32 %v5833, %v6095
      %v6097 = vpop.f32.mrb[0].mxu0
      %6098 = vmatprep.mubr.f32.mxu0 0.0
      %6099 = vmatmul.mubr.f32.gmra.mrb[0].mxu0 %v5896
      %v6100 = vpop.f32.mrb[0].mxu0
      %v6101 = vadd.f32 %v5833, %v6100
      %v6102 = vpop.f32.mrb[0].mxu0
      %6103 = vmatprep.mubr.f32.mxu0 0.0
      %6104 = vmatmul.mubr.f32.gmra.mrb[0].mxu0 %v5899
      %v6105 = vpop.f32.mrb[0].mxu0
      %v6106 = vadd.f32 %v5833, %v6105
      %v6107 = vpop.f32.mrb[0].mxu0
      %6108 = vmatprep.mubr.f32.mxu0 0.0
      %6109 = vmatmul.mubr.f32.gmra.mrb[0].mxu0 %v5902
      %v6110 = vpop.f32.mrb[0].mxu0
      %v6111 = vadd.f32 %v5833, %v6110
      %v6112 = vpop.f32.mrb[0].mxu0
      %6113 = vmatprep.mubr.f32.mxu0 0.0
      %6114 = vmatmul.mubr.f32.gmra.mrb[0].mxu0 %v5905
      %v6115 = vpop.f32.mrb[0].mxu0
      %v6116 = vadd.f32 %v5833, %v6115
      %v6117 = vpop.f32.mrb[0].mxu0
      %6118 = vmatprep.mubr.f32.mxu0 0.0
      %6119 = vmatmul.mubr.f32.gmra.mrb[0].mxu0 %v5908
      %v6120 = vpop.f32.mrb[0].mxu0
      %v6121 = vadd.f32 %v5833, %v6120
      %v6122 = vpop.f32.mrb[0].mxu0
      %6123 = vmatprep.mubr.f32.mxu0 0.0
      %6124 = vmatmul.mubr.f32.gmra.mrb[0].mxu0 %v5911
      %v6125 = vpop.f32.mrb[0].mxu0
      %v6126 = vadd.f32 %v5833, %v6125
      %v6127 = vpop.f32.mrb[0].mxu0
      %6128 = vmatprep.mubr.f32.mxu0 0.0
      %6129 = vmatmul.mubr.f32.gmra.mrb[0].mxu0 %v5914
      %v6130 = vpop.f32.mrb[0].mxu0
      %v6131 = vadd.f32 %v5833, %v6130
      %v6132 = vpop.f32.mrb[0].mxu0
      %6133 = vmatprep.mubr.f32.mxu0 0.0
      %6134 = vmatmul.mubr.f32.gmra.mrb[0].mxu0 %v5917
      %v6135 = vpop.f32.mrb[0].mxu0
      %v6136 = vadd.f32 %v5833, %v6135
      %v6137 = vpop.f32.mrb[0].mxu0
      %6138 = vmatprep.mubr.f32.mxu0 0.0
      %6139 = vmatmul.mubr.f32.gmra.mrb[0].mxu0 %v5920
      %v6140 = vpop.f32.mrb[0].mxu0
      %v6141 = vadd.f32 %v5833, %v6140
      %v6142 = vpop.f32.mrb[0].mxu0
      %6143 = vmatprep.mubr.f32.mxu0 0.0
      %6144 = vmatmul.mubr.f32.gmra.mrb[0].mxu0 %v5923
      %v6145 = vpop.f32.mrb[0].mxu0
      %v6146 = vadd.f32 %v5833, %v6145
      %v6147 = vpop.f32.mrb[0].mxu0
      %6148 = vmatprep.mubr.f32.mxu0 0.0
      %6149 = vmatmul.mubr.f32.gmra.mrb[0].mxu0 %v5926
      %v6150 = vpop.f32.mrb[0].mxu0
      %v6151 = vadd.f32 %v5833, %v6150
      %v6152 = vpop.f32.mrb[0].mxu0
      %6153 = vmatprep.mubr.f32.mxu0 0.0
      %6154 = vmatmul.mubr.f32.gmra.mrb[0].mxu0 %v5929
      %v6155 = vpop.f32.mrb[0].mxu0
      %v6156 = vadd.f32 %v5833, %v6155
      %v6157 = vpop.f32.mrb[0].mxu0
      %6158 = vdwg.mxu0
      %v6159 = vmax.f32 %v6001, 0.0
      %v6160 = vmax.f32 %v6006, 0.0
      %v6161 = vmax.f32 %v6011, 0.0
      %v6162 = vmax.f32 %v6016, 0.0
      %v6163 = vmax.f32 %v6021, 0.0
      %v6164 = vmax.f32 %v6026, 0.0
      %v6165 = vmax.f32 %v6031, 0.0
      %v6166 = vmax.f32 %v6036, 0.0
      %v6167 = vmax.f32 %v6041, 0.0
      %v6168 = vmax.f32 %v6046, 0.0
      %v6169 = vmax.f32 %v6051, 0.0
      %v6170 = vmax.f32 %v6056, 0.0
      %v6171 = vmax.f32 %v6061, 0.0
      %v6172 = vmax.f32 %v6066, 0.0
      %v6173 = vmax.f32 %v6071, 0.0
      %v6174 = vmax.f32 %v6076, 0.0
      %v6175 = vmax.f32 %v6081, 0.0
      %v6176 = vmax.f32 %v6086, 0.0
      %v6177 = vmax.f32 %v6091, 0.0
      %v6178 = vmax.f32 %v6096, 0.0
      %v6179 = vmax.f32 %v6101, 0.0
      %v6180 = vmax.f32 %v6106, 0.0
      %v6181 = vmax.f32 %v6111, 0.0
      %v6182 = vmax.f32 %v6116, 0.0
      %v6183 = vmax.f32 %v6121, 0.0
      %v6184 = vmax.f32 %v6126, 0.0
      %v6185 = vmax.f32 %v6131, 0.0
      %v6186 = vmax.f32 %v6136, 0.0
      %v6187 = vmax.f32 %v6141, 0.0
      %v6188 = vmax.f32 %v6146, 0.0
      %v6189 = vmax.f32 %v6151, 0.0
      %v6190 = vmax.f32 %v6156, 0.0
      %v6191 = vld [vmem:[%s5] sm:$0xf]
      %v6192 = vld [vmem:[%s10] sm:$0x1]
      %v6194 = vlaneseq
      %v6195 = vshrl.u32 %v6194, 7
      %v6196 = vsub.s32 0, %v6195
      %v6197 = vrot.slane %v6192, %v6196
      %v6200 = vsel %vm419, %v387, 0
      %v6203 = vsel %vm419, %v388, 0
      %v6206 = vsel %vm419, %v389, 0
      %v6209 = vsel %vm419, %v390, 0
      %v6212 = vsel %vm419, %v391, 0
      %v6215 = vsel %vm419, %v392, 0
      %v6218 = vsel %vm419, %v393, 0
      %v6221 = vsel %vm419, %v394, 0
      %v6224 = vsel %vm419, %v395, 0
      %v6227 = vsel %vm419, %v396, 0
      %v6230 = vsel %vm419, %v397, 0
      %v6233 = vsel %vm419, %v398, 0
      %v6236 = vsel %vm419, %v399, 0
      %v6239 = vsel %vm419, %v400, 0
      %v6242 = vsel %vm419, %v401, 0
      %v6245 = vsel %vm419, %v402, 0
      %v6248 = vsel %vm419, %v403, 0
      %v6251 = vsel %vm419, %v404, 0
      %v6254 = vsel %vm419, %v405, 0
      %v6257 = vsel %vm419, %v406, 0
      %v6260 = vsel %vm419, %v407, 0
      %v6263 = vsel %vm419, %v408, 0
      %v6266 = vsel %vm419, %v409, 0
      %v6269 = vsel %vm419, %v410, 0
      %v6272 = vsel %vm419, %v411, 0
      %v6275 = vsel %vm419, %v412, 0
      %v6278 = vsel %vm419, %v413, 0
      %v6281 = vsel %vm419, %v414, 0
      %v6284 = vsel %vm419, %v415, 0
      %v6287 = vsel %vm419, %v416, 0
      %v6290 = vsel %vm419, %v417, 0
      %v6293 = vsel %vm419, %v418, 0
      %v6296 = vsel %vm2180, %v6191, 0
      %6298 = vmatprep.subr.mxu0 0.0
      %6299 = vmatpush1.msra.mxu0 %v6296
      %6300 = vmatprep.subr.mxu0 0.0
      %6301 = vmatpush1.msra.mxu0 0.0
      %6302 = vmatprep.subr.mxu0 0.0
      %6303 = vmatpush1.msra.mxu0 0.0
      %6304 = vmatprep.subr.mxu0 0.0
      %6305 = vmatpush1.msra.mxu0 0.0
      %6306 = vmatprep.subr.mxu0 0.0
      %6307 = vmatpush1.msra.mxu0 0.0
      %6308 = vmatprep.subr.mxu0 0.0
      %6309 = vmatpush1.msra.mxu0 0.0
      %6310 = vmatprep.subr.mxu0 0.0
      %6311 = vmatpush1.msra.mxu0 0.0
      %6312 = vmatprep.subr.mxu0 0.0
      %6313 = vmatpush1.msra.mxu0 0.0
      %6314 = vmatprep.subr.mxu0 0.0
      %6315 = vmatpush1.msra.mxu0 0.0
      %6316 = vmatprep.subr.mxu0 0.0
      %6317 = vmatpush1.msra.mxu0 0.0
      %6318 = vmatprep.subr.mxu0 0.0
      %6319 = vmatpush1.msra.mxu0 0.0
      %6320 = vmatprep.subr.mxu0 0.0
      %6321 = vmatpush1.msra.mxu0 0.0
      %6322 = vmatprep.subr.mxu0 0.0
      %6323 = vmatpush1.msra.mxu0 0.0
      %6324 = vmatprep.subr.mxu0 0.0
      %6325 = vmatpush1.msra.mxu0 0.0
      %6326 = vmatprep.subr.mxu0 0.0
      %6327 = vmatpush1.msra.mxu0 0.0
      %6328 = vmatprep.subr.mxu0 0.0
      %6329 = vmatpush1.msra.mxu0 0.0
      %6330 = vmatprep.subr.mxu0 0.0
      %6331 = vmatpush1.msra.mxu0 0.0
      %6332 = vmatprep.subr.mxu0 0.0
      %6333 = vmatpush1.msra.mxu0 0.0
      %6334 = vmatprep.subr.mxu0 0.0
      %6335 = vmatpush1.msra.mxu0 0.0
      %6336 = vmatprep.subr.mxu0 0.0
      %6337 = vmatpush1.msra.mxu0 0.0
      %6338 = vmatprep.subr.mxu0 0.0
      %6339 = vmatpush1.msra.mxu0 0.0
      %6340 = vmatprep.subr.mxu0 0.0
      %6341 = vmatpush1.msra.mxu0 0.0
      %6342 = vmatprep.subr.mxu0 0.0
      %6343 = vmatpush1.msra.mxu0 0.0
      %6344 = vmatprep.subr.mxu0 0.0
      %6345 = vmatpush1.msra.mxu0 0.0
      %6346 = vmatprep.subr.mxu0 0.0
      %6347 = vmatpush1.msra.mxu0 0.0
      %6348 = vmatprep.subr.mxu0 0.0
      %6349 = vmatpush1.msra.mxu0 0.0
      %6350 = vmatprep.subr.mxu0 0.0
      %6351 = vmatpush1.msra.mxu0 0.0
      %6352 = vmatprep.subr.mxu0 0.0
      %6353 = vmatpush1.msra.mxu0 0.0
      %6354 = vmatprep.subr.mxu0 0.0
      %6355 = vmatpush1.msra.mxu0 0.0
      %6356 = vmatprep.subr.mxu0 0.0
      %6357 = vmatpush1.msra.mxu0 0.0
      %6358 = vmatprep.subr.mxu0 0.0
      %6359 = vmatpush1.msra.mxu0 0.0
      %6360 = vmatprep.subr.mxu0 0.0
      %6361 = vmatpush1.msra.mxu0 0.0
      %6362 = vmatprep.mubr.f32.mxu0 0.0
      %6363 = vmatmul.mubr.f32.gmra.mrb[0].mxu0 %v6200
      %v6364 = vpop.f32.mrb[0].mxu0
      %v6365 = vadd.f32 %v6197, %v6364
      %v6366 = vpop.f32.mrb[0].mxu0
      %6367 = vmatprep.mubr.f32.mxu0 0.0
      %6368 = vmatmul.mubr.f32.gmra.mrb[0].mxu0 %v6203
      %v6369 = vpop.f32.mrb[0].mxu0
      %v6370 = vadd.f32 %v6197, %v6369
      %v6371 = vpop.f32.mrb[0].mxu0
      %6372 = vmatprep.mubr.f32.mxu0 0.0
      %6373 = vmatmul.mubr.f32.gmra.mrb[0].mxu0 %v6206
      %v6374 = vpop.f32.mrb[0].mxu0
      %v6375 = vadd.f32 %v6197, %v6374
      %v6376 = vpop.f32.mrb[0].mxu0
      %6377 = vmatprep.mubr.f32.mxu0 0.0
      %6378 = vmatmul.mubr.f32.gmra.mrb[0].mxu0 %v6209
      %v6379 = vpop.f32.mrb[0].mxu0
      %v6380 = vadd.f32 %v6197, %v6379
      %v6381 = vpop.f32.mrb[0].mxu0
      %6382 = vmatprep.mubr.f32.mxu0 0.0
      %6383 = vmatmul.mubr.f32.gmra.mrb[0].mxu0 %v6212
      %v6384 = vpop.f32.mrb[0].mxu0
      %v6385 = vadd.f32 %v6197, %v6384
      %v6386 = vpop.f32.mrb[0].mxu0
      %6387 = vmatprep.mubr.f32.mxu0 0.0
      %6388 = vmatmul.mubr.f32.gmra.mrb[0].mxu0 %v6215
      %v6389 = vpop.f32.mrb[0].mxu0
      %v6390 = vadd.f32 %v6197, %v6389
      %v6391 = vpop.f32.mrb[0].mxu0
      %6392 = vmatprep.mubr.f32.mxu0 0.0
      %6393 = vmatmul.mubr.f32.gmra.mrb[0].mxu0 %v6218
      %v6394 = vpop.f32.mrb[0].mxu0
      %v6395 = vadd.f32 %v6197, %v6394
      %v6396 = vpop.f32.mrb[0].mxu0
      %6397 = vmatprep.mubr.f32.mxu0 0.0
      %6398 = vmatmul.mubr.f32.gmra.mrb[0].mxu0 %v6221
      %v6399 = vpop.f32.mrb[0].mxu0
      %v6400 = vadd.f32 %v6197, %v6399
      %v6401 = vpop.f32.mrb[0].mxu0
      %6402 = vmatprep.mubr.f32.mxu0 0.0
      %6403 = vmatmul.mubr.f32.gmra.mrb[0].mxu0 %v6224
      %v6404 = vpop.f32.mrb[0].mxu0
      %v6405 = vadd.f32 %v6197, %v6404
      %v6406 = vpop.f32.mrb[0].mxu0
      %6407 = vmatprep.mubr.f32.mxu0 0.0
      %6408 = vmatmul.mubr.f32.gmra.mrb[0].mxu0 %v6227
      %v6409 = vpop.f32.mrb[0].mxu0
      %v6410 = vadd.f32 %v6197, %v6409
      %v6411 = vpop.f32.mrb[0].mxu0
      %6412 = vmatprep.mubr.f32.mxu0 0.0
      %6413 = vmatmul.mubr.f32.gmra.mrb[0].mxu0 %v6230
      %v6414 = vpop.f32.mrb[0].mxu0
      %v6415 = vadd.f32 %v6197, %v6414
      %v6416 = vpop.f32.mrb[0].mxu0
      %6417 = vmatprep.mubr.f32.mxu0 0.0
      %6418 = vmatmul.mubr.f32.gmra.mrb[0].mxu0 %v6233
      %v6419 = vpop.f32.mrb[0].mxu0
      %v6420 = vadd.f32 %v6197, %v6419
      %v6421 = vpop.f32.mrb[0].mxu0
      %6422 = vmatprep.mubr.f32.mxu0 0.0
      %6423 = vmatmul.mubr.f32.gmra.mrb[0].mxu0 %v6236
      %v6424 = vpop.f32.mrb[0].mxu0
      %v6425 = vadd.f32 %v6197, %v6424
      %v6426 = vpop.f32.mrb[0].mxu0
      %6427 = vmatprep.mubr.f32.mxu0 0.0
      %6428 = vmatmul.mubr.f32.gmra.mrb[0].mxu0 %v6239
      %v6429 = vpop.f32.mrb[0].mxu0
      %v6430 = vadd.f32 %v6197, %v6429
      %v6431 = vpop.f32.mrb[0].mxu0
      %6432 = vmatprep.mubr.f32.mxu0 0.0
      %6433 = vmatmul.mubr.f32.gmra.mrb[0].mxu0 %v6242
      %v6434 = vpop.f32.mrb[0].mxu0
      %v6435 = vadd.f32 %v6197, %v6434
      %v6436 = vpop.f32.mrb[0].mxu0
      %6437 = vmatprep.mubr.f32.mxu0 0.0
      %6438 = vmatmul.mubr.f32.gmra.mrb[0].mxu0 %v6245
      %v6439 = vpop.f32.mrb[0].mxu0
      %v6440 = vadd.f32 %v6197, %v6439
      %v6441 = vpop.f32.mrb[0].mxu0
      %6442 = vmatprep.mubr.f32.mxu0 0.0
      %6443 = vmatmul.mubr.f32.gmra.mrb[0].mxu0 %v6248
      %v6444 = vpop.f32.mrb[0].mxu0
      %v6445 = vadd.f32 %v6197, %v6444
      %v6446 = vpop.f32.mrb[0].mxu0
      %6447 = vmatprep.mubr.f32.mxu0 0.0
      %6448 = vmatmul.mubr.f32.gmra.mrb[0].mxu0 %v6251
      %v6449 = vpop.f32.mrb[0].mxu0
      %v6450 = vadd.f32 %v6197, %v6449
      %v6451 = vpop.f32.mrb[0].mxu0
      %6452 = vmatprep.mubr.f32.mxu0 0.0
      %6453 = vmatmul.mubr.f32.gmra.mrb[0].mxu0 %v6254
      %v6454 = vpop.f32.mrb[0].mxu0
      %v6455 = vadd.f32 %v6197, %v6454
      %v6456 = vpop.f32.mrb[0].mxu0
      %6457 = vmatprep.mubr.f32.mxu0 0.0
      %6458 = vmatmul.mubr.f32.gmra.mrb[0].mxu0 %v6257
      %v6459 = vpop.f32.mrb[0].mxu0
      %v6460 = vadd.f32 %v6197, %v6459
      %v6461 = vpop.f32.mrb[0].mxu0
      %6462 = vmatprep.mubr.f32.mxu0 0.0
      %6463 = vmatmul.mubr.f32.gmra.mrb[0].mxu0 %v6260
      %v6464 = vpop.f32.mrb[0].mxu0
      %v6465 = vadd.f32 %v6197, %v6464
      %v6466 = vpop.f32.mrb[0].mxu0
      %6467 = vmatprep.mubr.f32.mxu0 0.0
      %6468 = vmatmul.mubr.f32.gmra.mrb[0].mxu0 %v6263
      %v6469 = vpop.f32.mrb[0].mxu0
      %v6470 = vadd.f32 %v6197, %v6469
      %v6471 = vpop.f32.mrb[0].mxu0
      %6472 = vmatprep.mubr.f32.mxu0 0.0
      %6473 = vmatmul.mubr.f32.gmra.mrb[0].mxu0 %v6266
      %v6474 = vpop.f32.mrb[0].mxu0
      %v6475 = vadd.f32 %v6197, %v6474
      %v6476 = vpop.f32.mrb[0].mxu0
      %6477 = vmatprep.mubr.f32.mxu0 0.0
      %6478 = vmatmul.mubr.f32.gmra.mrb[0].mxu0 %v6269
      %v6479 = vpop.f32.mrb[0].mxu0
      %v6480 = vadd.f32 %v6197, %v6479
      %v6481 = vpop.f32.mrb[0].mxu0
      %6482 = vmatprep.mubr.f32.mxu0 0.0
      %6483 = vmatmul.mubr.f32.gmra.mrb[0].mxu0 %v6272
      %v6484 = vpop.f32.mrb[0].mxu0
      %v6485 = vadd.f32 %v6197, %v6484
      %v6486 = vpop.f32.mrb[0].mxu0
      %6487 = vmatprep.mubr.f32.mxu0 0.0
      %6488 = vmatmul.mubr.f32.gmra.mrb[0].mxu0 %v6275
      %v6489 = vpop.f32.mrb[0].mxu0
      %v6490 = vadd.f32 %v6197, %v6489
      %v6491 = vpop.f32.mrb[0].mxu0
      %6492 = vmatprep.mubr.f32.mxu0 0.0
      %6493 = vmatmul.mubr.f32.gmra.mrb[0].mxu0 %v6278
      %v6494 = vpop.f32.mrb[0].mxu0
      %v6495 = vadd.f32 %v6197, %v6494
      %v6496 = vpop.f32.mrb[0].mxu0
      %6497 = vmatprep.mubr.f32.mxu0 0.0
      %6498 = vmatmul.mubr.f32.gmra.mrb[0].mxu0 %v6281
      %v6499 = vpop.f32.mrb[0].mxu0
      %v6500 = vadd.f32 %v6197, %v6499
      %v6501 = vpop.f32.mrb[0].mxu0
      %6502 = vmatprep.mubr.f32.mxu0 0.0
      %6503 = vmatmul.mubr.f32.gmra.mrb[0].mxu0 %v6284
      %v6504 = vpop.f32.mrb[0].mxu0
      %v6505 = vadd.f32 %v6197, %v6504
      %v6506 = vpop.f32.mrb[0].mxu0
      %6507 = vmatprep.mubr.f32.mxu0 0.0
      %6508 = vmatmul.mubr.f32.gmra.mrb[0].mxu0 %v6287
      %v6509 = vpop.f32.mrb[0].mxu0
      %v6510 = vadd.f32 %v6197, %v6509
      %v6511 = vpop.f32.mrb[0].mxu0
      %6512 = vmatprep.mubr.f32.mxu0 0.0
      %6513 = vmatmul.mubr.f32.gmra.mrb[0].mxu0 %v6290
      %v6514 = vpop.f32.mrb[0].mxu0
      %v6515 = vadd.f32 %v6197, %v6514
      %v6516 = vpop.f32.mrb[0].mxu0
      %6517 = vmatprep.mubr.f32.mxu0 0.0
      %6518 = vmatmul.mubr.f32.gmra.mrb[0].mxu0 %v6293
      %v6519 = vpop.f32.mrb[0].mxu0
      %v6520 = vadd.f32 %v6197, %v6519
      %v6521 = vpop.f32.mrb[0].mxu0
      %6522 = vdwg.mxu0
      %v6523 = vmax.f32 %v6365, 0.0
      %v6524 = vmax.f32 %v6370, 0.0
      %v6525 = vmax.f32 %v6375, 0.0
      %v6526 = vmax.f32 %v6380, 0.0
      %v6527 = vmax.f32 %v6385, 0.0
      %v6528 = vmax.f32 %v6390, 0.0
      %v6529 = vmax.f32 %v6395, 0.0
      %v6530 = vmax.f32 %v6400, 0.0
      %v6531 = vmax.f32 %v6405, 0.0
      %v6532 = vmax.f32 %v6410, 0.0
      %v6533 = vmax.f32 %v6415, 0.0
      %v6534 = vmax.f32 %v6420, 0.0
      %v6535 = vmax.f32 %v6425, 0.0
      %v6536 = vmax.f32 %v6430, 0.0
      %v6537 = vmax.f32 %v6435, 0.0
      %v6538 = vmax.f32 %v6440, 0.0
      %v6539 = vmax.f32 %v6445, 0.0
      %v6540 = vmax.f32 %v6450, 0.0
      %v6541 = vmax.f32 %v6455, 0.0
      %v6542 = vmax.f32 %v6460, 0.0
      %v6543 = vmax.f32 %v6465, 0.0
      %v6544 = vmax.f32 %v6470, 0.0
      %v6545 = vmax.f32 %v6475, 0.0
      %v6546 = vmax.f32 %v6480, 0.0
      %v6547 = vmax.f32 %v6485, 0.0
      %v6548 = vmax.f32 %v6490, 0.0
      %v6549 = vmax.f32 %v6495, 0.0
      %v6550 = vmax.f32 %v6500, 0.0
      %v6551 = vmax.f32 %v6505, 0.0
      %v6552 = vmax.f32 %v6510, 0.0
      %v6553 = vmax.f32 %v6515, 0.0
      %v6554 = vmax.f32 %v6520, 0.0
      %v6555 = vadd.f32 %v6159, %v6523
      %v6556 = vadd.f32 %v6160, %v6524
      %v6557 = vadd.f32 %v6161, %v6525
      %v6558 = vadd.f32 %v6162, %v6526
      %v6559 = vadd.f32 %v6163, %v6527
      %v6560 = vadd.f32 %v6164, %v6528
      %v6561 = vadd.f32 %v6165, %v6529
      %v6562 = vadd.f32 %v6166, %v6530
      %v6563 = vadd.f32 %v6167, %v6531
      %v6564 = vadd.f32 %v6168, %v6532
      %v6565 = vadd.f32 %v6169, %v6533
      %v6566 = vadd.f32 %v6170, %v6534
      %v6567 = vadd.f32 %v6171, %v6535
      %v6568 = vadd.f32 %v6172, %v6536
      %v6569 = vadd.f32 %v6173, %v6537
      %v6570 = vadd.f32 %v6174, %v6538
      %v6571 = vadd.f32 %v6175, %v6539
      %v6572 = vadd.f32 %v6176, %v6540
      %v6573 = vadd.f32 %v6177, %v6541
      %v6574 = vadd.f32 %v6178, %v6542
      %v6575 = vadd.f32 %v6179, %v6543
      %v6576 = vadd.f32 %v6180, %v6544
      %v6577 = vadd.f32 %v6181, %v6545
      %v6578 = vadd.f32 %v6182, %v6546
      %v6579 = vadd.f32 %v6183, %v6547
      %v6580 = vadd.f32 %v6184, %v6548
      %v6581 = vadd.f32 %v6185, %v6549
      %v6582 = vadd.f32 %v6186, %v6550
      %v6583 = vadd.f32 %v6187, %v6551
      %v6584 = vadd.f32 %v6188, %v6552
      %v6585 = vadd.f32 %v6189, %v6553
      %v6586 = vadd.f32 %v6190, %v6554
      %v6587 = vadd.f32 %v6555, %v6557
      %v6588 = vadd.f32 %v6556, %v6558
      %v6589 = vadd.f32 %v6559, %v6561
      %v6590 = vadd.f32 %v6560, %v6562
      %v6591 = vadd.f32 %v6563, %v6565
      %v6592 = vadd.f32 %v6564, %v6566
      %v6593 = vadd.f32 %v6567, %v6569
      %v6594 = vadd.f32 %v6568, %v6570
      %v6595 = vadd.f32 %v6571, %v6573
      %v6596 = vadd.f32 %v6572, %v6574
      %v6597 = vadd.f32 %v6575, %v6577
      %v6598 = vadd.f32 %v6576, %v6578
      %v6599 = vadd.f32 %v6579, %v6581
      %v6600 = vadd.f32 %v6580, %v6582
      %v6601 = vadd.f32 %v6583, %v6585
      %v6602 = vadd.f32 %v6584, %v6586
      %6603 = vst.msk [vmem:[#allocation5] sm:$0xff] %vm1840, %v6587
      %6604 = vst.msk [vmem:[#allocation5 + $0x8] sm:$0xff] %vm1840, %v6588
      %6605 = vst.msk [vmem:[#allocation5 + $0x10] sm:$0xff] %vm1840, %v6589
      %6606 = vst.msk [vmem:[#allocation5 + $0x18] sm:$0xff] %vm1840, %v6590
      %6607 = vst.msk [vmem:[#allocation5 + $0x20] sm:$0xff] %vm1840, %v6591
      %6608 = vst.msk [vmem:[#allocation5 + $0x28] sm:$0xff] %vm1840, %v6592
      %6609 = vst.msk [vmem:[#allocation5 + $0x30] sm:$0xff] %vm1840, %v6593
      %6610 = vst.msk [vmem:[#allocation5 + $0x38] sm:$0xff] %vm1840, %v6594
      %6611 = vst.msk [vmem:[#allocation5 + $0x40] sm:$0xff] %vm1840, %v6595
      %6612 = vst.msk [vmem:[#allocation5 + $0x48] sm:$0xff] %vm1840, %v6596
      %6613 = vst.msk [vmem:[#allocation5 + $0x50] sm:$0xff] %vm1840, %v6597
      %6614 = vst.msk [vmem:[#allocation5 + $0x58] sm:$0xff] %vm1840, %v6598
      %6615 = vst.msk [vmem:[#allocation5 + $0x60] sm:$0xff] %vm1840, %v6599
      %6616 = vst.msk [vmem:[#allocation5 + $0x68] sm:$0xff] %vm1840, %v6600
      %6617 = vst.msk [vmem:[#allocation5 + $0x70] sm:$0xff] %vm1840, %v6601
      %6618 = vst.msk [vmem:[#allocation5 + $0x78] sm:$0xff] %vm1840, %v6602
      %v6619 = vld [vmem:[#allocation5] ss:$2 sm:$0xff]
      %s6620 = scalar_lea.vmem [#allocation5], 16
      %v6621 = vld [vmem:[%s6620] ss:$2 sm:$0xff]
      %s6622 = scalar_lea.vmem [#allocation5], 32
      %v6623 = vld [vmem:[%s6622] ss:$2 sm:$0xff]
      %s6624 = scalar_lea.vmem [#allocation5], 48
      %v6625 = vld [vmem:[%s6624] ss:$2 sm:$0xff]
      %s6626 = scalar_lea.vmem [#allocation5], 64
      %v6627 = vld [vmem:[%s6626] ss:$2 sm:$0xff]
      %s6628 = scalar_lea.vmem [#allocation5], 80
      %v6629 = vld [vmem:[%s6628] ss:$2 sm:$0xff]
      %s6630 = scalar_lea.vmem [#allocation5], 96
      %v6631 = vld [vmem:[%s6630] ss:$2 sm:$0xff]
      %s6632 = scalar_lea.vmem [#allocation5], 112
      %v6633 = vld [vmem:[%s6632] ss:$2 sm:$0xff]
      %s6634 = scalar_lea.vmem [#allocation5], 1
      %v6635 = vld [vmem:[%s6634] ss:$2 sm:$0xff]
      %s6636 = scalar_lea.vmem [#allocation5], 17
      %v6637 = vld [vmem:[%s6636] ss:$2 sm:$0xff]
      %s6638 = scalar_lea.vmem [#allocation5], 33
      %v6639 = vld [vmem:[%s6638] ss:$2 sm:$0xff]
      %s6640 = scalar_lea.vmem [#allocation5], 49
      %v6641 = vld [vmem:[%s6640] ss:$2 sm:$0xff]
      %s6642 = scalar_lea.vmem [#allocation5], 65
      %v6643 = vld [vmem:[%s6642] ss:$2 sm:$0xff]
      %s6644 = scalar_lea.vmem [#allocation5], 81
      %v6645 = vld [vmem:[%s6644] ss:$2 sm:$0xff]
      %s6646 = scalar_lea.vmem [#allocation5], 97
      %v6647 = vld [vmem:[%s6646] ss:$2 sm:$0xff]
      %s6648 = scalar_lea.vmem [#allocation5], 113
      %v6649 = vld [vmem:[%s6648] ss:$2 sm:$0xff]
      %v6650 = vadd.f32 %v6619, %v6635
      %v6651 = vadd.f32 %v6621, %v6637
      %v6652 = vadd.f32 %v6623, %v6639
      %v6653 = vadd.f32 %v6625, %v6641
      %v6654 = vadd.f32 %v6627, %v6643
      %v6655 = vadd.f32 %v6629, %v6645
      %v6656 = vadd.f32 %v6631, %v6647
      %v6657 = vadd.f32 %v6633, %v6649
      %6658 = vst.msk [vmem:[%s386] sm:$0xff] %vm1840, %v6650
      %6659 = vst.msk [vmem:[%s386 + $0x8] sm:$0xff] %vm1840, %v6651
      %6660 = vst.msk [vmem:[%s386 + $0x10] sm:$0xff] %vm1840, %v6652
      %6661 = vst.msk [vmem:[%s386 + $0x18] sm:$0xff] %vm1840, %v6653
      %6662 = vst.msk [vmem:[%s386 + $0x20] sm:$0xff] %vm1840, %v6654
      %6663 = vst.msk [vmem:[%s386 + $0x28] sm:$0xff] %vm1840, %v6655
      %6664 = vst.msk [vmem:[%s386 + $0x30] sm:$0xff] %vm1840, %v6656
      %6665 = vst.msk [vmem:[%s386 + $0x38] sm:$0xff] %vm1840, %v6657
      %p6666 = scmp.lt.s32.totalorder %s22, 1
      %s6667 = scalar_select %p6666, %s22, 1
      %s6668 = smul.addr %s6667, 8
      %s6669 = smul.addr %s6668, 8
      %s6670 = scalar_lea.vmem %s11, %s6669
      // Predicated region
      $region65: #{enc_block.1} parent=63 // pred_check
        %p6671 = pneg %p276
      $region66: #{enc_block.1} parent=63 // pred_check_branch
        %6673 = sbr.rel (%p6671) target = $region68
      $region67: #{enc_block.1} parent=63 // pred_region
        _
      $region68: #{enc_block.1} parent=63 // pred_fallthru
        _
    $region64: #{enc_block.1} parent=5 // pred_fallthru
      _
    %p6674 = scmp.le.s32.totalorder 2, %s17
    // Predicated region
    $region69: #{enc_block.1} parent=5 // pred_check
      %p6675 = pneg %p6674
    $region70: #{enc_block.1} parent=5 // pred_check_branch
      %6677 = sbr.rel (%p6675) target = $region72
    $region71: #{enc_block.1} parent=5 // pred_region
      %s6678 = ssub.s32 %s17, 2
      // Predicated region
      $region73: #{enc_block.1} parent=71 // pred_check
        %p6679 = pneg %p282
      $region74: #{enc_block.1} parent=71 // pred_check_branch
        %6681 = sbr.rel (%p6679) target = $region76
      $region75: #{enc_block.1} parent=71 // pred_region
        %p6682 = scmp.lt.s32.totalorder %s23, 1
        %s6683 = scalar_select %p6682, %s23, 1
        %s6684 = smul.addr %s6683, 8
        %s6685 = smul.addr %s6684, 8
        %s6686 = scalar_lea.vmem %s11, %s6685
      $region76: #{enc_block.1} parent=71 // pred_fallthru
        _
    $region72: #{enc_block.1} parent=5 // pred_fallthru
      _
  $region6: #{enc_block.1} parent=0 // loop_footer
    %s21 = sadd.s32 1, %s17
  $region7: #{enc_block.1} parent=0 // loop_footer_branch
    %16 = sbr.rel target = $region3
  $region8: #{enc_block.1} parent=0 // loop_exit
    _

</llo_original>
